<compile_context>
chip_gen: v5e
topology: v5e:2x2
jax: 0.10.0
libtpu: 0.0.40
codegen_flags: <defaults>
</compile_context>

<pallas_src>
import functools

import jax
import jax.numpy as jnp
from jax import lax
from jax.experimental import pallas as pl
from jax.experimental.pallas import tpu as pltpu

NEG_SLOPE = 0.01   # F.leaky_relu / nn.LeakyReLU default
BN_EPS = 1e-5      # nn.BatchNorm1d default, training-mode batch statistics
LR_COEFF = 1.0     # TODO(synk): `lr_coeff` is an undefined global in the PyTorch source; assumed 1.0


def _leaky(v):
  return jnp.where(v > 0, v, NEG_SLOPE * v)


def _batch_norm(v, gamma_b, beta_b):
  # training-mode batch statistics over the T rows (centered two-pass variance)
  mu = jnp.mean(v, axis=0, keepdims=True)
  vc = v - mu
  var = jnp.mean(vc * vc, axis=0, keepdims=True)
  return gamma_b * vc * lax.rsqrt(var + BN_EPS) + beta_b


def _mm_bf16(a, w_bf16):
  # MXU matmul: bf16 inputs, f32 accumulation.
  return jnp.dot(a.astype(jnp.bfloat16), w_bf16,
                 preferred_element_type=jnp.float32)


def _small_mm(v, m):
  """(T, K) @ (K, N) with tiny static K as an unrolled VPU FMA chain."""
  k_dim = m.shape[0]
  out = v[:, 0:1] * m[0:1, :]
  for k in range(1, k_dim):
    out = out + v[:, k:k + 1] * m[k:k + 1, :]
  return out


def _shift_down(v):
  # out[t] = v[t-1]; row 0 replicates v[0] (masked downstream).
  return jnp.concatenate([v[:1], v[:-1]], axis=0)


def _shift_up(v):
  # out[t] = v[t+1]; last row replicates v[-1] (masked downstream).
  return jnp.concatenate([v[1:], v[-1:]], axis=0)


def gnn_kalman_kernel(
    # initial state / iteration-invariant per-call tensors
    x0_ref, h0_ref, m2c_ref, hyt3_ref, mask3_ref,
    # Kalman message matrices (lr_coeff folded in)
    M1p_ref, M3p_ref, Mx_ref,
    # edge-attr weights, zero-padded into the EW slab (3, ds, EW)
    We_ref,
    # packed wide h-matmul (nf, 4*EW) and fused edge fc2 (EW, EW) + bias
    HW_ref, W2_ref, b2_ref,
    # node MLP: stacked [Wn;Wn;Wn;0] (EW, nf) + BN affine
    Wn3_ref, gamn_ref, betn_ref,
    # GRU input gates (r|z|n) padded to EW, + input/hidden biases
    Wi_ref, bi_ref, bh_ref,
    # decode: Conv1d(nf,nf,1) -> Graph_bn -> ReLU -> Conv1d(nf,ds,1)
    Wd1_ref, gamd_ref, betd_ref, Wd2_ref, bd2_ref,
    # output
    out_ref,
    *, gamma):
  n_iters, T, ds = out_ref.shape
  nf = h0_ref.shape[1]
  EW = mask3_ref.shape[1]          # 3*nf rounded up to a 128-lane slab

  x = x0_ref[...]                  # (T, ds)
  h = h0_ref[...]                  # (T, nf)
  m2c = m2c_ref[...]               # (T, ds)  lr * meas @ Rinv^T H

  # ---- hoisted once per call (NOT per unrolled iteration) ------------------
  row = lax.broadcasted_iota(jnp.int32, (T, 1), 0)
  not_first = jnp.broadcast_to((row > 0).astype(jnp.float32), (T, ds))
  not_last = jnp.broadcast_to((row < T - 1).astype(jnp.float32), (T, ds))
  hyt3 = hyt3_ref[...]             # (T, EW) = [0 | hy@Wt_u | 0] + edge fc1 biases
  mask3 = mask3_ref[...]           # (T, EW) = [not_first | 1 | not_last | 0]
  M1p = M1p_ref[...]
  M3p = M3p_ref[...]
  Mx = Mx_ref[...]
  b2b = jnp.broadcast_to(b2_ref[...], (T, EW))
  bib = jnp.broadcast_to(bi_ref[...], (T, EW))
  bhb = jnp.broadcast_to(bh_ref[...], (T, EW))
  gamn = jnp.broadcast_to(gamn_ref[...], (T, nf))
  betn = jnp.broadcast_to(betn_ref[...], (T, nf))
  gamd = jnp.broadcast_to(gamd_ref[...], (T, nf))
  betd = jnp.broadcast_to(betd_ref[...], (T, nf))
  bd2b = jnp.broadcast_to(bd2_ref[...], (T, ds))

  # ---- refinement loop: strict serial dependence, fully unrolled ----------
  # TODO(synk): for large n_iters switch to lax.fori_loop carrying (x, h).
  for it in range(n_iters):
    # prior messages m1/m2/m3 (ds=4 -> VPU FMA chains, no MXU).
    x_prev = _shift_down(x)
    x_next = _shift_up(x)
    xM = _small_mm(x, Mx)                                       # (T, 3*ds)
    m1 = (_small_mm(x_prev, M1p) - xM[:, 0:ds]) * not_first
    m2 = m2c - xM[:, ds:2 * ds]
    m3 = (_small_mm(x_next, M3p) - xM[:, 2 * ds:3 * ds]) * not_last

    # one wide MXU push on the OLD h:
    # [edge src | prev-target | next-target | GRU hidden gates], each EW wide.
    hb = _mm_bf16(h, HW_ref[...])                               # (T, 4*EW)
    src3 = hb[:, 0:EW]
    tgt_prev = _shift_down(hb[:, EW:2 * EW])                    # h_{t-1} @ Wt_r
    tgt_next = _shift_up(hb[:, 2 * EW:3 * EW])                  # h_{t+1} @ Wt_l
    ghs = hb[:, 3 * EW:4 * EW] + bhb                            # GRU hidden gates

    # edge attr contributions (zero-padded into their EW block)
    attr3 = (_small_mm(m1, We_ref[0]) + _small_mm(m2, We_ref[1])
             + _small_mm(m3, We_ref[2]))                        # (T, EW)

    # ---- G_E_GNN edge models (m_right | m_up | m_left) in one EW slab ------
    z1 = _leaky(src3 + tgt_prev + tgt_next + hyt3 + attr3)
    f = _leaky(_mm_bf16(z1, W2_ref[...]) + b2b)                 # fused fc2
    fm = f * mask3                                              # segment masking

    # ---- node model: segment-sum folded into node_mlp Linear (stacked Wn) --
    a = _leaky(_batch_norm(_mm_bf16(fm, Wn3_ref[...]), gamn, betn))

    # ---- GRUCell (gates r|z|n) ----------------------------------------------
    gi = _mm_bf16(a, Wi_ref[...]) + bib
    r = jax.nn.sigmoid(gi[:, 0:nf] + ghs[:, 0:nf])
    zg = jax.nn.sigmoid(gi[:, nf:2 * nf] + ghs[:, nf:2 * nf])
    ng = jnp.tanh(gi[:, 2 * nf:3 * nf] + r * ghs[:, 2 * nf:3 * nf])
    h = (1.0 - zg) * ng + zg * h

    # ---- decode: h2state_1 -> Graph_bn -> relu -> h2state_2 ----------------
    d = jnp.maximum(_batch_norm(_mm_bf16(h, Wd1_ref[...]), gamd, betd), 0.0)
    grad = _mm_bf16(d, Wd2_ref[...]) + bd2b

    # ---- Kalman-style state update (learned=True, prior=True branch) -------
    x = x + gamma * (grad + m1 + m2 + m3)
    out_ref[it] = x


def pack_params(params, A, H, Q_inv, R_inv, *, lr_coeff=LR_COEFF):
  """One-time weight packing (cache the result; do NOT call per forward)."""
  f32, bf16 = jnp.float32, jnp.bfloat16
  A = jnp.asarray(A, f32)
  H = jnp.asarray(H, f32)
  Q_inv = jnp.asarray(Q_inv, f32)
  R_inv = jnp.asarray(R_inv, f32)
  ds = A.shape[0]
  nf = params["Wn"].shape[0]
  EW = ((3 * nf + 127) // 128) * 128          # lane-dense edge slab width

  def padw(w, col_off):
    w = jnp.asarray(w, f32)
    out = jnp.zeros((w.shape[0], EW), f32)
    return out.at[:, col_off:col_off + w.shape[1]].set(w)

  # Kalman message constants (row form, lr_coeff folded)
  AT, QinvT = A.T, Q_inv.T
  RinvTH = R_inv.T @ H
  M1p = lr_coeff * (AT @ QinvT)
  M3p = lr_coeff * (QinvT @ A)
  Mx = lr_coeff * jnp.concatenate([QinvT, H.T @ RinvTH, AT @ QinvT @ A], axis=1)
  M2m = lr_coeff * RinvTH                                        # (dm, ds)

  eW1s = jnp.asarray(params["eW1s"], f32)
  eW1t = jnp.asarray(params["eW1t"], f32)
  eW1e = jnp.asarray(params["eW1e"], f32)
  eb1 = jnp.asarray(params["eb1"], f32)
  eW2 = jnp.asarray(params["eW2"], f32)
  eb2 = jnp.asarray(params["eb2"], f32)
  Wi = jnp.asarray(params["Wi"], f32)
  Wh = jnp.asarray(params["Wh"], f32)
  bi = jnp.asarray(params["bi"], f32)
  bh = jnp.asarray(params["bh"], f32)
  Wn = jnp.asarray(params["Wn"], f32)

  # wide h-matmul: [edge-src | prev-target(r) | next-target(l) | GRU hidden]
  grpA = padw(jnp.concatenate([eW1s[0], eW1s[1], eW1s[2]], axis=1), 0)
  grpB = padw(eW1t[0], 0)              # target h_{t-1}, lands in the r block
  grpC = padw(eW1t[2], 2 * nf)         # target h_{t+1}, lands in the l block
  grpD = padw(jnp.concatenate([Wh[0], Wh[1], Wh[2]], axis=1), 0)
  HW = jnp.concatenate([grpA, grpB, grpC, grpD], axis=1).astype(bf16)

  W2p = jnp.zeros((EW, EW), f32)
  for j in range(3):
    W2p = W2p.at[j * nf:(j + 1) * nf, j * nf:(j + 1) * nf].set(eW2[j])
  W2p = W2p.astype(bf16)

  We_p = jnp.zeros((3, ds, EW), f32)
  for j in range(3):
    We_p = We_p.at[j, :, j * nf:(j + 1) * nf].set(eW1e[j])

  Wn3p = (jnp.zeros((EW, nf), f32)
          .at[:3 * nf, :].set(jnp.concatenate([Wn, Wn, Wn], axis=0))
          .astype(bf16))

  Wi_p = padw(jnp.concatenate([Wi[0], Wi[1], Wi[2]], axis=1), 0).astype(bf16)
  bi_p = padw(jnp.concatenate([bi[0], bi[1], bi[2]], axis=1), 0)
  bh_p = padw(jnp.concatenate([bh[0], bh[1], bh[2]], axis=1), 0)
  b1_p = padw(jnp.concatenate([eb1[0], eb1[1], eb1[2]], axis=1), 0)
  b2_p = padw(jnp.concatenate([eb2[0], eb2[1], eb2[2]], axis=1), 0)
  Wt_u_p = padw(eW1t[1], nf)           # m_up target (hy) weight, u block

  return dict(
      H=H, Wy=jnp.asarray(params["Wy"], f32), by=jnp.asarray(params["by"], f32),
      M1p=M1p, M3p=M3p, Mx=Mx, M2m=M2m,
      Wt_u_p=Wt_u_p, b1_p=b1_p,
      We_p=We_p, HW=HW, W2p=W2p, b2_p=b2_p,
      Wn3p=Wn3p,
      gamn=jnp.asarray(params["gamn"], f32), betn=jnp.asarray(params["betn"], f32),
      Wi_p=Wi_p, bi_p=bi_p, bh_p=bh_p,
      Wd1=jnp.asarray(params["Wd1"], f32).astype(bf16),
      gamd=jnp.asarray(params["gamd"], f32), betd=jnp.asarray(params["betd"], f32),
      Wd2=jnp.asarray(params["Wd2"], f32).astype(bf16),
      bd2=jnp.asarray(params["bd2"], f32),
  )


@functools.partial(jax.jit, static_argnames=("n_iters", "gamma"))
def gnn_kalman_forward(packed, meas_rows, h0, n_iters, gamma=0.005):
  """meas_rows: (T, dim_meas) == torch forward's `meas.squeeze(0)` input."""
  f32 = jnp.float32
  meas_rows = jnp.asarray(meas_rows, f32)
  h0 = jnp.asarray(h0, f32)
  T = meas_rows.shape[0]
  ds = packed["H"].shape[1]
  nf = h0.shape[1]
  EW = packed["b2_p"].shape[1]

  # --- one-time glue: init_states + gnn.init_h (meas2inv + 1x1 conv) --------
  x0 = meas_rows @ packed["H"]                                  # bmm(H^T, meas)
  ml = meas_rows - jnp.concatenate([meas_rows[:1], meas_rows[:-1]], axis=0)
  mr = jnp.concatenate([meas_rows[1:], meas_rows[-1:]], axis=0) - meas_rows
  hy = jnp.concatenate([ml, mr], axis=1) @ packed["Wy"] + packed["by"]
  # iteration-invariant m_up target contribution + edge fc1 biases
  hyt3 = hy @ packed["Wt_u_p"] + packed["b1_p"]                 # (T, EW)
  # iteration-invariant measurement term of m2
  m2c = meas_rows @ packed["M2m"]                               # (T, ds)
  # per-node segment masks for the three edge families (padded to EW lanes)
  row = jnp.arange(T, dtype=f32)[:, None]
  nfm = (row > 0).astype(f32)
  nlm = (row < T - 1).astype(f32)
  mask3 = jnp.concatenate([jnp.broadcast_to(nfm, (T, nf)),
                           jnp.ones((T, nf), f32),
                           jnp.broadcast_to(nlm, (T, nf)),
                           jnp.zeros((T, EW - 3 * nf), f32)], axis=1)

  operands = (
      x0, h0, m2c, hyt3, mask3,
      packed["M1p"], packed["M3p"], packed["Mx"],
      packed["We_p"],
      packed["HW"], packed["W2p"], packed["b2_p"],
      packed["Wn3p"], packed["gamn"], packed["betn"],
      packed["Wi_p"], packed["bi_p"], packed["bh_p"],
      packed["Wd1"], packed["gamd"], packed["betd"],
      packed["Wd2"], packed["bd2"],
  )

  vmem = pl.BlockSpec(memory_space=pltpu.MemorySpace.VMEM)
  kernel = functools.partial(gnn_kalman_kernel, gamma=gamma)

  # Single invocation (no grid): the refinement loop is a strict serial
  # dependence and lives inside the kernel; all operands are whole-array
  # VMEM residents (total footprint << 1 MiB on every TPU generation).
  pos_track = pl.pallas_call(
      kernel,
      out_shape=jax.ShapeDtypeStruct((n_iters, T, ds), jnp.float32),
      in_specs=[vmem] * len(operands),
      out_specs=vmem,
  )(*operands)
  return pos_track


def init_params(key, nf, ds, dm):
  keys = jax.random.split(key, 16)

  def w(k, shape, scale=None):
    fan_in = shape[-2] if len(shape) >= 2 else shape[-1]
    s = scale if scale is not None else 1.0 / float(fan_in) ** 0.5
    return jax.random.normal(k, shape, jnp.float32) * s

  p = {}
  p["Wy"] = w(keys[0], (2 * dm, nf))                 # fc_init_y (1x1 conv)
  p["by"] = w(keys[1], (1, nf), 0.1)
  # edge MLPs stacked [m_right, m_up, m_left]; fc1 split into (src, tgt, attr)
  p["eW1s"] = w(keys[2], (3, nf, nf))
  p["eW1t"] = w(keys[3], (3, nf, nf))
  p["eW1e"] = w(keys[4], (3, ds, nf))
  p["eb1"] = w(keys[5], (3, 1, nf), 0.1)
  p["eW2"] = w(keys[6], (3, nf, nf))
  p["eb2"] = w(keys[7], (3, 1, nf), 0.1)
  # node_mlp (Linear bias omitted: cancelled by the following training-mode BN)
  p["Wn"] = w(keys[8], (nf, nf))
  p["gamn"] = jnp.ones((1, nf), jnp.float32)
  p["betn"] = jnp.zeros((1, nf), jnp.float32)
  # GRU cell, gates [r, z, n]
  p["Wi"] = w(keys[9], (3, nf, nf))
  p["Wh"] = w(keys[10], (3, nf, nf))
  p["bi"] = w(keys[11], (3, 1, nf), 0.1)
  p["bh"] = w(keys[12], (3, 1, nf), 0.1)
  # decode (h2state_1 bias omitted: cancelled by the following Graph_bn)
  p["Wd1"] = w(keys[13], (nf, nf))
  p["gamd"] = jnp.ones((1, nf), jnp.float32)
  p["betd"] = jnp.zeros((1, nf), jnp.float32)
  p["Wd2"] = w(keys[14], (nf, ds), 0.1 / float(nf) ** 0.5)  # xavier gain=0.1 spirit
  p["bd2"] = jax.random.uniform(keys[15], (1, ds), jnp.float32, -0.02, 0.02)
  return p


if __name__ == "__main__":
  T = 16        # sequence length (number of graph nodes per stream)
  nf = 32       # hidden features
  ds = 4        # dim_state
  dm = 2        # dim_meas
  n_iters = 4   # `T` argument of GNN_Kalman.forward (refinement steps)

  key = jax.random.PRNGKey(0)
  k_meas, k_h, k_par = jax.random.split(key, 3)

  # Kalman system matrices (constant-velocity model, deterministic)
  A = jnp.array([[1., 0., 1., 0.],
                 [0., 1., 0., 1.],
                 [0., 0., 1., 0.],
                 [0., 0., 0., 1.]], jnp.float32)
  H = jnp.array([[1., 0., 0., 0.],
                 [0., 1., 0., 0.]], jnp.float32)
  Q = 0.1 * jnp.eye(ds, dtype=jnp.float32)
  R = 0.5 * jnp.eye(dm, dtype=jnp.float32)
  Q_inv = jnp.linalg.inv(Q)
  R_inv = jnp.linalg.inv(R)

  meas = jax.random.normal(k_meas, (T, dm), jnp.float32)   # torch input meas.squeeze(0)
  # TODO(synk): torch's gnn.init_h draws h with torch.randn; supplied externally here.
  h0 = jax.random.normal(k_h, (T, nf), jnp.float32)
  params = init_params(k_par, nf, ds, dm)

  packed = pack_params(params, A, H, Q_inv, R_inv, lr_coeff=LR_COEFF)  # cache once
  pos_track = gnn_kalman_forward(packed, meas, h0, n_iters=n_iters)
  pos_track = jax.block_until_ready(pos_track)

  assert pos_track.shape == (n_iters, T, ds), pos_track.shape
  assert bool(jnp.all(jnp.isfinite(pos_track)))
  print("KERNEL_OK")
</pallas_src>

<mosaic_0001>
module attributes {stable_mosaic.version = 11 : i64} {
  func.func @gnn_kalman_kernel(%arg0: memref<16x4xf32, #tpu.memory_space<vmem>>, %arg1: memref<16x32xf32, #tpu.memory_space<vmem>>, %arg2: memref<16x4xf32, #tpu.memory_space<vmem>>, %arg3: memref<16x128xf32, #tpu.memory_space<vmem>>, %arg4: memref<16x128xf32, #tpu.memory_space<vmem>>, %arg5: memref<4x4xf32, #tpu.memory_space<vmem>>, %arg6: memref<4x4xf32, #tpu.memory_space<vmem>>, %arg7: memref<4x12xf32, #tpu.memory_space<vmem>>, %arg8: memref<3x4x128xf32, #tpu.memory_space<vmem>>, %arg9: memref<32x512xbf16, #tpu.memory_space<vmem>>, %arg10: memref<128x128xbf16, #tpu.memory_space<vmem>>, %arg11: memref<1x128xf32, #tpu.memory_space<vmem>>, %arg12: memref<128x32xbf16, #tpu.memory_space<vmem>>, %arg13: memref<1x32xf32, #tpu.memory_space<vmem>>, %arg14: memref<1x32xf32, #tpu.memory_space<vmem>>, %arg15: memref<32x128xbf16, #tpu.memory_space<vmem>>, %arg16: memref<1x128xf32, #tpu.memory_space<vmem>>, %arg17: memref<1x128xf32, #tpu.memory_space<vmem>>, %arg18: memref<32x32xbf16, #tpu.memory_space<vmem>>, %arg19: memref<1x32xf32, #tpu.memory_space<vmem>>, %arg20: memref<1x32xf32, #tpu.memory_space<vmem>>, %arg21: memref<32x4xbf16, #tpu.memory_space<vmem>>, %arg22: memref<1x4xf32, #tpu.memory_space<vmem>>, %arg23: memref<4x16x4xf32, #tpu.memory_space<vmem>>) attributes {dimension_semantics = [], scalar_prefetch = 0 : i64, scratch_operands = 0 : i64, tpu.core_type = #tpu.core_type<tc>} {
    %c0 = arith.constant 0 : index
    %c0_0 = arith.constant 0 : index
    %0 = vector.load %arg0[%c0, %c0_0] : memref<16x4xf32, #tpu.memory_space<vmem>>, vector<16x4xf32>
    %c0_1 = arith.constant 0 : index
    %c0_2 = arith.constant 0 : index
    %1 = vector.load %arg1[%c0_1, %c0_2] : memref<16x32xf32, #tpu.memory_space<vmem>>, vector<16x32xf32>
    %c0_3 = arith.constant 0 : index
    %c0_4 = arith.constant 0 : index
    %2 = vector.load %arg2[%c0_3, %c0_4] : memref<16x4xf32, #tpu.memory_space<vmem>>, vector<16x4xf32>
    %3 = tpu.iota {dimensions = array<i32: 0>} : vector<16x1xi32>
    %c0_i32 = arith.constant 0 : i32
    %4 = vector.broadcast %c0_i32 : i32 to vector<16x1xi32>
    %5 = arith.cmpi sgt, %3, %4 : vector<16x1xi32>
    %6 = arith.extui %5 : vector<16x1xi1> to vector<16x1xi32>
    %7 = arith.sitofp %6 : vector<16x1xi32> to vector<16x1xf32>
    %8 = vector.shape_cast %7 : vector<16x1xf32> to vector<16x1xf32>
    %9 = vector.broadcast %8 : vector<16x1xf32> to vector<16x4xf32>
    %c15_i32 = arith.constant 15 : i32
    %10 = vector.broadcast %c15_i32 : i32 to vector<16x1xi32>
    %11 = arith.cmpi slt, %3, %10 : vector<16x1xi32>
    %12 = arith.extui %11 : vector<16x1xi1> to vector<16x1xi32>
    %13 = arith.sitofp %12 : vector<16x1xi32> to vector<16x1xf32>
    %14 = vector.shape_cast %13 : vector<16x1xf32> to vector<16x1xf32>
    %15 = vector.broadcast %14 : vector<16x1xf32> to vector<16x4xf32>
    %c0_5 = arith.constant 0 : index
    %c0_6 = arith.constant 0 : index
    %16 = vector.load %arg3[%c0_5, %c0_6] : memref<16x128xf32, #tpu.memory_space<vmem>>, vector<16x128xf32>
    %c0_7 = arith.constant 0 : index
    %c0_8 = arith.constant 0 : index
    %17 = vector.load %arg4[%c0_7, %c0_8] : memref<16x128xf32, #tpu.memory_space<vmem>>, vector<16x128xf32>
    %c0_9 = arith.constant 0 : index
    %c0_10 = arith.constant 0 : index
    %18 = vector.load %arg5[%c0_9, %c0_10] : memref<4x4xf32, #tpu.memory_space<vmem>>, vector<4x4xf32>
    %c0_11 = arith.constant 0 : index
    %c0_12 = arith.constant 0 : index
    %19 = vector.load %arg6[%c0_11, %c0_12] : memref<4x4xf32, #tpu.memory_space<vmem>>, vector<4x4xf32>
    %c0_13 = arith.constant 0 : index
    %c0_14 = arith.constant 0 : index
    %20 = vector.load %arg7[%c0_13, %c0_14] : memref<4x12xf32, #tpu.memory_space<vmem>>, vector<4x12xf32>
    %c0_15 = arith.constant 0 : index
    %c0_16 = arith.constant 0 : index
    %21 = vector.load %arg11[%c0_15, %c0_16] : memref<1x128xf32, #tpu.memory_space<vmem>>, vector<1x128xf32>
    %22 = vector.shape_cast %21 : vector<1x128xf32> to vector<1x128xf32>
    %23 = vector.broadcast %22 : vector<1x128xf32> to vector<16x128xf32>
    %c0_17 = arith.constant 0 : index
    %c0_18 = arith.constant 0 : index
    %24 = vector.load %arg16[%c0_17, %c0_18] : memref<1x128xf32, #tpu.memory_space<vmem>>, vector<1x128xf32>
    %25 = vector.shape_cast %24 : vector<1x128xf32> to vector<1x128xf32>
    %26 = vector.broadcast %25 : vector<1x128xf32> to vector<16x128xf32>
    %c0_19 = arith.constant 0 : index
    %c0_20 = arith.constant 0 : index
    %27 = vector.load %arg17[%c0_19, %c0_20] : memref<1x128xf32, #tpu.memory_space<vmem>>, vector<1x128xf32>
    %28 = vector.shape_cast %27 : vector<1x128xf32> to vector<1x128xf32>
    %29 = vector.broadcast %28 : vector<1x128xf32> to vector<16x128xf32>
    %c0_21 = arith.constant 0 : index
    %c0_22 = arith.constant 0 : index
    %30 = vector.load %arg13[%c0_21, %c0_22] : memref<1x32xf32, #tpu.memory_space<vmem>>, vector<1x32xf32>
    %31 = vector.shape_cast %30 : vector<1x32xf32> to vector<1x32xf32>
    %32 = vector.broadcast %31 : vector<1x32xf32> to vector<16x32xf32>
    %c0_23 = arith.constant 0 : index
    %c0_24 = arith.constant 0 : index
    %33 = vector.load %arg14[%c0_23, %c0_24] : memref<1x32xf32, #tpu.memory_space<vmem>>, vector<1x32xf32>
    %34 = vector.shape_cast %33 : vector<1x32xf32> to vector<1x32xf32>
    %35 = vector.broadcast %34 : vector<1x32xf32> to vector<16x32xf32>
    %c0_25 = arith.constant 0 : index
    %c0_26 = arith.constant 0 : index
    %36 = vector.load %arg19[%c0_25, %c0_26] : memref<1x32xf32, #tpu.memory_space<vmem>>, vector<1x32xf32>
    %37 = vector.shape_cast %36 : vector<1x32xf32> to vector<1x32xf32>
    %38 = vector.broadcast %37 : vector<1x32xf32> to vector<16x32xf32>
    %c0_27 = arith.constant 0 : index
    %c0_28 = arith.constant 0 : index
    %39 = vector.load %arg20[%c0_27, %c0_28] : memref<1x32xf32, #tpu.memory_space<vmem>>, vector<1x32xf32>
    %40 = vector.shape_cast %39 : vector<1x32xf32> to vector<1x32xf32>
    %41 = vector.broadcast %40 : vector<1x32xf32> to vector<16x32xf32>
    %c0_29 = arith.constant 0 : index
    %c0_30 = arith.constant 0 : index
    %42 = vector.load %arg22[%c0_29, %c0_30] : memref<1x4xf32, #tpu.memory_space<vmem>>, vector<1x4xf32>
    %43 = vector.shape_cast %42 : vector<1x4xf32> to vector<1x4xf32>
    %44 = vector.broadcast %43 : vector<1x4xf32> to vector<16x4xf32>
    %45 = vector.extract_strided_slice %0 {offsets = [0, 0], sizes = [1, 4], strides = [1, 1]} : vector<16x4xf32> to vector<1x4xf32>
    %46 = vector.extract_strided_slice %0 {offsets = [0, 0], sizes = [15, 4], strides = [1, 1]} : vector<16x4xf32> to vector<15x4xf32>
    %47 = tpu.concatenate %45, %46 in 0 : vector<1x4xf32>, vector<15x4xf32> -> vector<16x4xf32>
    %48 = vector.extract_strided_slice %0 {offsets = [1, 0], sizes = [15, 4], strides = [1, 1]} : vector<16x4xf32> to vector<15x4xf32>
    %49 = vector.extract_strided_slice %0 {offsets = [15, 0], sizes = [1, 4], strides = [1, 1]} : vector<16x4xf32> to vector<1x4xf32>
    %50 = tpu.concatenate %48, %49 in 0 : vector<15x4xf32>, vector<1x4xf32> -> vector<16x4xf32>
    %51 = vector.extract_strided_slice %0 {offsets = [0, 0], sizes = [16, 1], strides = [1, 1]} : vector<16x4xf32> to vector<16x1xf32>
    %52 = vector.extract_strided_slice %20 {offsets = [0, 0], sizes = [1, 12], strides = [1, 1]} : vector<4x12xf32> to vector<1x12xf32>
    %53 = vector.broadcast %51 : vector<16x1xf32> to vector<16x12xf32>
    %54 = vector.broadcast %52 : vector<1x12xf32> to vector<16x12xf32>
    %55 = arith.mulf %53, %54 : vector<16x12xf32>
    %56 = vector.extract_strided_slice %0 {offsets = [0, 1], sizes = [16, 1], strides = [1, 1]} : vector<16x4xf32> to vector<16x1xf32>
    %57 = vector.extract_strided_slice %20 {offsets = [1, 0], sizes = [1, 12], strides = [1, 1]} : vector<4x12xf32> to vector<1x12xf32>
    %58 = vector.broadcast %56 : vector<16x1xf32> to vector<16x12xf32>
    %59 = vector.broadcast %57 : vector<1x12xf32> to vector<16x12xf32>
    %60 = arith.mulf %58, %59 : vector<16x12xf32>
    %61 = arith.addf %55, %60 : vector<16x12xf32>
    %62 = vector.extract_strided_slice %0 {offsets = [0, 2], sizes = [16, 1], strides = [1, 1]} : vector<16x4xf32> to vector<16x1xf32>
    %63 = vector.extract_strided_slice %20 {offsets = [2, 0], sizes = [1, 12], strides = [1, 1]} : vector<4x12xf32> to vector<1x12xf32>
    %64 = vector.broadcast %62 : vector<16x1xf32> to vector<16x12xf32>
    %65 = vector.broadcast %63 : vector<1x12xf32> to vector<16x12xf32>
    %66 = arith.mulf %64, %65 : vector<16x12xf32>
    %67 = arith.addf %61, %66 : vector<16x12xf32>
    %68 = vector.extract_strided_slice %0 {offsets = [0, 3], sizes = [16, 1], strides = [1, 1]} : vector<16x4xf32> to vector<16x1xf32>
    %69 = vector.extract_strided_slice %20 {offsets = [3, 0], sizes = [1, 12], strides = [1, 1]} : vector<4x12xf32> to vector<1x12xf32>
    %70 = vector.broadcast %68 : vector<16x1xf32> to vector<16x12xf32>
    %71 = vector.broadcast %69 : vector<1x12xf32> to vector<16x12xf32>
    %72 = arith.mulf %70, %71 : vector<16x12xf32>
    %73 = arith.addf %67, %72 : vector<16x12xf32>
    %74 = vector.extract_strided_slice %47 {offsets = [0, 0], sizes = [16, 1], strides = [1, 1]} : vector<16x4xf32> to vector<16x1xf32>
    %75 = vector.extract_strided_slice %18 {offsets = [0, 0], sizes = [1, 4], strides = [1, 1]} : vector<4x4xf32> to vector<1x4xf32>
    %76 = vector.broadcast %74 : vector<16x1xf32> to vector<16x4xf32>
    %77 = vector.broadcast %75 : vector<1x4xf32> to vector<16x4xf32>
    %78 = arith.mulf %76, %77 : vector<16x4xf32>
    %79 = vector.extract_strided_slice %47 {offsets = [0, 1], sizes = [16, 1], strides = [1, 1]} : vector<16x4xf32> to vector<16x1xf32>
    %80 = vector.extract_strided_slice %18 {offsets = [1, 0], sizes = [1, 4], strides = [1, 1]} : vector<4x4xf32> to vector<1x4xf32>
    %81 = vector.broadcast %79 : vector<16x1xf32> to vector<16x4xf32>
    %82 = vector.broadcast %80 : vector<1x4xf32> to vector<16x4xf32>
    %83 = arith.mulf %81, %82 : vector<16x4xf32>
    %84 = arith.addf %78, %83 : vector<16x4xf32>
    %85 = vector.extract_strided_slice %47 {offsets = [0, 2], sizes = [16, 1], strides = [1, 1]} : vector<16x4xf32> to vector<16x1xf32>
    %86 = vector.extract_strided_slice %18 {offsets = [2, 0], sizes = [1, 4], strides = [1, 1]} : vector<4x4xf32> to vector<1x4xf32>
    %87 = vector.broadcast %85 : vector<16x1xf32> to vector<16x4xf32>
    %88 = vector.broadcast %86 : vector<1x4xf32> to vector<16x4xf32>
    %89 = arith.mulf %87, %88 : vector<16x4xf32>
    %90 = arith.addf %84, %89 : vector<16x4xf32>
    %91 = vector.extract_strided_slice %47 {offsets = [0, 3], sizes = [16, 1], strides = [1, 1]} : vector<16x4xf32> to vector<16x1xf32>
    %92 = vector.extract_strided_slice %18 {offsets = [3, 0], sizes = [1, 4], strides = [1, 1]} : vector<4x4xf32> to vector<1x4xf32>
    %93 = vector.broadcast %91 : vector<16x1xf32> to vector<16x4xf32>
    %94 = vector.broadcast %92 : vector<1x4xf32> to vector<16x4xf32>
    %95 = arith.mulf %93, %94 : vector<16x4xf32>
    %96 = arith.addf %90, %95 : vector<16x4xf32>
    %97 = vector.extract_strided_slice %73 {offsets = [0, 0], sizes = [16, 4], strides = [1, 1]} : vector<16x12xf32> to vector<16x4xf32>
    %98 = arith.subf %96, %97 : vector<16x4xf32>
    %99 = arith.mulf %98, %9 : vector<16x4xf32>
    %100 = vector.extract_strided_slice %73 {offsets = [0, 4], sizes = [16, 4], strides = [1, 1]} : vector<16x12xf32> to vector<16x4xf32>
    %101 = arith.subf %2, %100 : vector<16x4xf32>
    %102 = vector.extract_strided_slice %50 {offsets = [0, 0], sizes = [16, 1], strides = [1, 1]} : vector<16x4xf32> to vector<16x1xf32>
    %103 = vector.extract_strided_slice %19 {offsets = [0, 0], sizes = [1, 4], strides = [1, 1]} : vector<4x4xf32> to vector<1x4xf32>
    %104 = vector.broadcast %102 : vector<16x1xf32> to vector<16x4xf32>
    %105 = vector.broadcast %103 : vector<1x4xf32> to vector<16x4xf32>
    %106 = arith.mulf %104, %105 : vector<16x4xf32>
    %107 = vector.extract_strided_slice %50 {offsets = [0, 1], sizes = [16, 1], strides = [1, 1]} : vector<16x4xf32> to vector<16x1xf32>
    %108 = vector.extract_strided_slice %19 {offsets = [1, 0], sizes = [1, 4], strides = [1, 1]} : vector<4x4xf32> to vector<1x4xf32>
    %109 = vector.broadcast %107 : vector<16x1xf32> to vector<16x4xf32>
    %110 = vector.broadcast %108 : vector<1x4xf32> to vector<16x4xf32>
    %111 = arith.mulf %109, %110 : vector<16x4xf32>
    %112 = arith.addf %106, %111 : vector<16x4xf32>
    %113 = vector.extract_strided_slice %50 {offsets = [0, 2], sizes = [16, 1], strides = [1, 1]} : vector<16x4xf32> to vector<16x1xf32>
    %114 = vector.extract_strided_slice %19 {offsets = [2, 0], sizes = [1, 4], strides = [1, 1]} : vector<4x4xf32> to vector<1x4xf32>
    %115 = vector.broadcast %113 : vector<16x1xf32> to vector<16x4xf32>
    %116 = vector.broadcast %114 : vector<1x4xf32> to vector<16x4xf32>
    %117 = arith.mulf %115, %116 : vector<16x4xf32>
    %118 = arith.addf %112, %117 : vector<16x4xf32>
    %119 = vector.extract_strided_slice %50 {offsets = [0, 3], sizes = [16, 1], strides = [1, 1]} : vector<16x4xf32> to vector<16x1xf32>
    %120 = vector.extract_strided_slice %19 {offsets = [3, 0], sizes = [1, 4], strides = [1, 1]} : vector<4x4xf32> to vector<1x4xf32>
    %121 = vector.broadcast %119 : vector<16x1xf32> to vector<16x4xf32>
    %122 = vector.broadcast %120 : vector<1x4xf32> to vector<16x4xf32>
    %123 = arith.mulf %121, %122 : vector<16x4xf32>
    %124 = arith.addf %118, %123 : vector<16x4xf32>
    %125 = vector.extract_strided_slice %73 {offsets = [0, 8], sizes = [16, 4], strides = [1, 1]} : vector<16x12xf32> to vector<16x4xf32>
    %126 = arith.subf %124, %125 : vector<16x4xf32>
    %127 = arith.mulf %126, %15 : vector<16x4xf32>
    %c0_31 = arith.constant 0 : index
    %c0_32 = arith.constant 0 : index
    %128 = vector.load %arg9[%c0_31, %c0_32] : memref<32x512xbf16, #tpu.memory_space<vmem>>, vector<32x512xbf16>
    %129 = arith.truncf %1 : vector<16x32xf32> to vector<16x32xbf16>
    %cst = arith.constant dense<0.000000e+00> : vector<16x512xf32>
    %130 = tpu.matmul %129, %128, %cst {dimension_numbers = #tpu.dot_dimension_numbers<[1], [0], [0], [1], [0, 0, 1, 1], [], []>} : vector<16x32xbf16>, vector<32x512xbf16>, vector<16x512xf32> -> vector<16x512xf32>
    %131 = vector.extract_strided_slice %130 {offsets = [0, 0], sizes = [16, 128], strides = [1, 1]} : vector<16x512xf32> to vector<16x128xf32>
    %132 = vector.extract_strided_slice %130 {offsets = [0, 128], sizes = [16, 128], strides = [1, 1]} : vector<16x512xf32> to vector<16x128xf32>
    %133 = vector.extract_strided_slice %132 {offsets = [0, 0], sizes = [1, 128], strides = [1, 1]} : vector<16x128xf32> to vector<1x128xf32>
    %134 = vector.extract_strided_slice %132 {offsets = [0, 0], sizes = [15, 128], strides = [1, 1]} : vector<16x128xf32> to vector<15x128xf32>
    %135 = tpu.concatenate %133, %134 in 0 : vector<1x128xf32>, vector<15x128xf32> -> vector<16x128xf32>
    %136 = vector.extract_strided_slice %130 {offsets = [0, 256], sizes = [16, 128], strides = [1, 1]} : vector<16x512xf32> to vector<16x128xf32>
    %137 = vector.extract_strided_slice %136 {offsets = [1, 0], sizes = [15, 128], strides = [1, 1]} : vector<16x128xf32> to vector<15x128xf32>
    %138 = vector.extract_strided_slice %136 {offsets = [15, 0], sizes = [1, 128], strides = [1, 1]} : vector<16x128xf32> to vector<1x128xf32>
    %139 = tpu.concatenate %137, %138 in 0 : vector<15x128xf32>, vector<1x128xf32> -> vector<16x128xf32>
    %140 = vector.extract_strided_slice %130 {offsets = [0, 384], sizes = [16, 128], strides = [1, 1]} : vector<16x512xf32> to vector<16x128xf32>
    %141 = arith.addf %140, %29 : vector<16x128xf32>
    %c0_33 = arith.constant 0 : index
    %c0_34 = arith.constant 0 : index
    %c0_35 = arith.constant 0 : index
    %142 = vector.load %arg8[%c0_33, %c0_34, %c0_35] : memref<3x4x128xf32, #tpu.memory_space<vmem>>, vector<1x4x128xf32>
    %143 = vector.shape_cast %142 : vector<1x4x128xf32> to vector<4x128xf32>
    %144 = vector.extract_strided_slice %99 {offsets = [0, 0], sizes = [16, 1], strides = [1, 1]} : vector<16x4xf32> to vector<16x1xf32>
    %145 = vector.extract_strided_slice %143 {offsets = [0, 0], sizes = [1, 128], strides = [1, 1]} : vector<4x128xf32> to vector<1x128xf32>
    %146 = vector.broadcast %144 : vector<16x1xf32> to vector<16x128xf32>
    %147 = vector.broadcast %145 : vector<1x128xf32> to vector<16x128xf32>
    %148 = arith.mulf %146, %147 : vector<16x128xf32>
    %149 = vector.extract_strided_slice %99 {offsets = [0, 1], sizes = [16, 1], strides = [1, 1]} : vector<16x4xf32> to vector<16x1xf32>
    %150 = vector.extract_strided_slice %143 {offsets = [1, 0], sizes = [1, 128], strides = [1, 1]} : vector<4x128xf32> to vector<1x128xf32>
    %151 = vector.broadcast %149 : vector<16x1xf32> to vector<16x128xf32>
    %152 = vector.broadcast %150 : vector<1x128xf32> to vector<16x128xf32>
    %153 = arith.mulf %151, %152 : vector<16x128xf32>
    %154 = arith.addf %148, %153 : vector<16x128xf32>
    %155 = vector.extract_strided_slice %99 {offsets = [0, 2], sizes = [16, 1], strides = [1, 1]} : vector<16x4xf32> to vector<16x1xf32>
    %156 = vector.extract_strided_slice %143 {offsets = [2, 0], sizes = [1, 128], strides = [1, 1]} : vector<4x128xf32> to vector<1x128xf32>
    %157 = vector.broadcast %155 : vector<16x1xf32> to vector<16x128xf32>
    %158 = vector.broadcast %156 : vector<1x128xf32> to vector<16x128xf32>
    %159 = arith.mulf %157, %158 : vector<16x128xf32>
    %160 = arith.addf %154, %159 : vector<16x128xf32>
    %161 = vector.extract_strided_slice %99 {offsets = [0, 3], sizes = [16, 1], strides = [1, 1]} : vector<16x4xf32> to vector<16x1xf32>
    %162 = vector.extract_strided_slice %143 {offsets = [3, 0], sizes = [1, 128], strides = [1, 1]} : vector<4x128xf32> to vector<1x128xf32>
    %163 = vector.broadcast %161 : vector<16x1xf32> to vector<16x128xf32>
    %164 = vector.broadcast %162 : vector<1x128xf32> to vector<16x128xf32>
    %165 = arith.mulf %163, %164 : vector<16x128xf32>
    %166 = arith.addf %160, %165 : vector<16x128xf32>
    %c1 = arith.constant 1 : index
    %c0_36 = arith.constant 0 : index
    %c0_37 = arith.constant 0 : index
    %167 = vector.load %arg8[%c1, %c0_36, %c0_37] : memref<3x4x128xf32, #tpu.memory_space<vmem>>, vector<1x4x128xf32>
    %168 = vector.shape_cast %167 : vector<1x4x128xf32> to vector<4x128xf32>
    %169 = vector.extract_strided_slice %101 {offsets = [0, 0], sizes = [16, 1], strides = [1, 1]} : vector<16x4xf32> to vector<16x1xf32>
    %170 = vector.extract_strided_slice %168 {offsets = [0, 0], sizes = [1, 128], strides = [1, 1]} : vector<4x128xf32> to vector<1x128xf32>
    %171 = vector.broadcast %169 : vector<16x1xf32> to vector<16x128xf32>
    %172 = vector.broadcast %170 : vector<1x128xf32> to vector<16x128xf32>
    %173 = arith.mulf %171, %172 : vector<16x128xf32>
    %174 = vector.extract_strided_slice %101 {offsets = [0, 1], sizes = [16, 1], strides = [1, 1]} : vector<16x4xf32> to vector<16x1xf32>
    %175 = vector.extract_strided_slice %168 {offsets = [1, 0], sizes = [1, 128], strides = [1, 1]} : vector<4x128xf32> to vector<1x128xf32>
    %176 = vector.broadcast %174 : vector<16x1xf32> to vector<16x128xf32>
    %177 = vector.broadcast %175 : vector<1x128xf32> to vector<16x128xf32>
    %178 = arith.mulf %176, %177 : vector<16x128xf32>
    %179 = arith.addf %173, %178 : vector<16x128xf32>
    %180 = vector.extract_strided_slice %101 {offsets = [0, 2], sizes = [16, 1], strides = [1, 1]} : vector<16x4xf32> to vector<16x1xf32>
    %181 = vector.extract_strided_slice %168 {offsets = [2, 0], sizes = [1, 128], strides = [1, 1]} : vector<4x128xf32> to vector<1x128xf32>
    %182 = vector.broadcast %180 : vector<16x1xf32> to vector<16x128xf32>
    %183 = vector.broadcast %181 : vector<1x128xf32> to vector<16x128xf32>
    %184 = arith.mulf %182, %183 : vector<16x128xf32>
    %185 = arith.addf %179, %184 : vector<16x128xf32>
    %186 = vector.extract_strided_slice %101 {offsets = [0, 3], sizes = [16, 1], strides = [1, 1]} : vector<16x4xf32> to vector<16x1xf32>
    %187 = vector.extract_strided_slice %168 {offsets = [3, 0], sizes = [1, 128], strides = [1, 1]} : vector<4x128xf32> to vector<1x128xf32>
    %188 = vector.broadcast %186 : vector<16x1xf32> to vector<16x128xf32>
    %189 = vector.broadcast %187 : vector<1x128xf32> to vector<16x128xf32>
    %190 = arith.mulf %188, %189 : vector<16x128xf32>
    %191 = arith.addf %185, %190 : vector<16x128xf32>
    %192 = arith.addf %166, %191 : vector<16x128xf32>
    %c2 = arith.constant 2 : index
    %c0_38 = arith.constant 0 : index
    %c0_39 = arith.constant 0 : index
    %193 = vector.load %arg8[%c2, %c0_38, %c0_39] : memref<3x4x128xf32, #tpu.memory_space<vmem>>, vector<1x4x128xf32>
    %194 = vector.shape_cast %193 : vector<1x4x128xf32> to vector<4x128xf32>
    %195 = vector.extract_strided_slice %127 {offsets = [0, 0], sizes = [16, 1], strides = [1, 1]} : vector<16x4xf32> to vector<16x1xf32>
    %196 = vector.extract_strided_slice %194 {offsets = [0, 0], sizes = [1, 128], strides = [1, 1]} : vector<4x128xf32> to vector<1x128xf32>
    %197 = vector.broadcast %195 : vector<16x1xf32> to vector<16x128xf32>
    %198 = vector.broadcast %196 : vector<1x128xf32> to vector<16x128xf32>
    %199 = arith.mulf %197, %198 : vector<16x128xf32>
    %200 = vector.extract_strided_slice %127 {offsets = [0, 1], sizes = [16, 1], strides = [1, 1]} : vector<16x4xf32> to vector<16x1xf32>
    %201 = vector.extract_strided_slice %194 {offsets = [1, 0], sizes = [1, 128], strides = [1, 1]} : vector<4x128xf32> to vector<1x128xf32>
    %202 = vector.broadcast %200 : vector<16x1xf32> to vector<16x128xf32>
    %203 = vector.broadcast %201 : vector<1x128xf32> to vector<16x128xf32>
    %204 = arith.mulf %202, %203 : vector<16x128xf32>
    %205 = arith.addf %199, %204 : vector<16x128xf32>
    %206 = vector.extract_strided_slice %127 {offsets = [0, 2], sizes = [16, 1], strides = [1, 1]} : vector<16x4xf32> to vector<16x1xf32>
    %207 = vector.extract_strided_slice %194 {offsets = [2, 0], sizes = [1, 128], strides = [1, 1]} : vector<4x128xf32> to vector<1x128xf32>
    %208 = vector.broadcast %206 : vector<16x1xf32> to vector<16x128xf32>
    %209 = vector.broadcast %207 : vector<1x128xf32> to vector<16x128xf32>
    %210 = arith.mulf %208, %209 : vector<16x128xf32>
    %211 = arith.addf %205, %210 : vector<16x128xf32>
    %212 = vector.extract_strided_slice %127 {offsets = [0, 3], sizes = [16, 1], strides = [1, 1]} : vector<16x4xf32> to vector<16x1xf32>
    %213 = vector.extract_strided_slice %194 {offsets = [3, 0], sizes = [1, 128], strides = [1, 1]} : vector<4x128xf32> to vector<1x128xf32>
    %214 = vector.broadcast %212 : vector<16x1xf32> to vector<16x128xf32>
    %215 = vector.broadcast %213 : vector<1x128xf32> to vector<16x128xf32>
    %216 = arith.mulf %214, %215 : vector<16x128xf32>
    %217 = arith.addf %211, %216 : vector<16x128xf32>
    %218 = arith.addf %192, %217 : vector<16x128xf32>
    %219 = arith.addf %131, %135 : vector<16x128xf32>
    %220 = arith.addf %219, %139 : vector<16x128xf32>
    %221 = arith.addf %220, %16 : vector<16x128xf32>
    %222 = arith.addf %221, %218 : vector<16x128xf32>
    %cst_40 = arith.constant 0.000000e+00 : f32
    %223 = vector.broadcast %cst_40 : f32 to vector<16x128xf32>
    %224 = arith.cmpf ogt, %222, %223 : vector<16x128xf32>
    %cst_41 = arith.constant 0.00999999977 : f32
    %225 = vector.broadcast %cst_41 : f32 to vector<16x128xf32>
    %226 = arith.mulf %225, %222 : vector<16x128xf32>
    %227 = arith.select %224, %222, %226 : vector<16x128xi1>, vector<16x128xf32>
    %c0_42 = arith.constant 0 : index
    %c0_43 = arith.constant 0 : index
    %228 = vector.load %arg10[%c0_42, %c0_43] : memref<128x128xbf16, #tpu.memory_space<vmem>>, vector<128x128xbf16>
    %229 = arith.truncf %227 : vector<16x128xf32> to vector<16x128xbf16>
    %cst_44 = arith.constant dense<0.000000e+00> : vector<16x128xf32>
    %230 = tpu.matmul %229, %228, %cst_44 {dimension_numbers = #tpu.dot_dimension_numbers<[1], [0], [0], [1], [0, 0, 1, 1], [], []>} : vector<16x128xbf16>, vector<128x128xbf16>, vector<16x128xf32> -> vector<16x128xf32>
    %231 = arith.addf %230, %23 : vector<16x128xf32>
    %cst_45 = arith.constant 0.000000e+00 : f32
    %232 = vector.broadcast %cst_45 : f32 to vector<16x128xf32>
    %233 = arith.cmpf ogt, %231, %232 : vector<16x128xf32>
    %cst_46 = arith.constant 0.00999999977 : f32
    %234 = vector.broadcast %cst_46 : f32 to vector<16x128xf32>
    %235 = arith.mulf %234, %231 : vector<16x128xf32>
    %236 = arith.select %233, %231, %235 : vector<16x128xi1>, vector<16x128xf32>
    %237 = arith.mulf %236, %17 : vector<16x128xf32>
    %c0_47 = arith.constant 0 : index
    %c0_48 = arith.constant 0 : index
    %238 = vector.load %arg12[%c0_47, %c0_48] : memref<128x32xbf16, #tpu.memory_space<vmem>>, vector<128x32xbf16>
    %239 = arith.truncf %237 : vector<16x128xf32> to vector<16x128xbf16>
    %cst_49 = arith.constant dense<0.000000e+00> : vector<16x32xf32>
    %240 = tpu.matmul %239, %238, %cst_49 {dimension_numbers = #tpu.dot_dimension_numbers<[1], [0], [0], [1], [0, 0, 1, 1], [], []>} : vector<16x128xbf16>, vector<128x32xbf16>, vector<16x32xf32> -> vector<16x32xf32>
    %cst_50 = arith.constant dense<0.000000e+00> : vector<32xf32>
    %241 = vector.multi_reduction <add>, %240, %cst_50 [0] : vector<16x32xf32> to vector<32xf32>
    %242 = vector.shape_cast %241 : vector<32xf32> to vector<1x32xf32>
    %cst_51 = arith.constant 1.600000e+01 : f32
    %243 = vector.broadcast %cst_51 : f32 to vector<1x32xf32>
    %244 = arith.divf %242, %243 : vector<1x32xf32>
    %245 = vector.broadcast %244 : vector<1x32xf32> to vector<16x32xf32>
    %246 = arith.subf %240, %245 : vector<16x32xf32>
    %247 = arith.mulf %246, %246 : vector<16x32xf32>
    %cst_52 = arith.constant dense<0.000000e+00> : vector<32xf32>
    %248 = vector.multi_reduction <add>, %247, %cst_52 [0] : vector<16x32xf32> to vector<32xf32>
    %249 = vector.shape_cast %248 : vector<32xf32> to vector<1x32xf32>
    %cst_53 = arith.constant 1.600000e+01 : f32
    %250 = vector.broadcast %cst_53 : f32 to vector<1x32xf32>
    %251 = arith.divf %249, %250 : vector<1x32xf32>
    %252 = arith.mulf %32, %246 : vector<16x32xf32>
    %cst_54 = arith.constant 9.99999974E-6 : f32
    %253 = vector.broadcast %cst_54 : f32 to vector<1x32xf32>
    %254 = arith.addf %251, %253 : vector<1x32xf32>
    %255 = math.rsqrt %254 : vector<1x32xf32>
    %256 = vector.broadcast %255 : vector<1x32xf32> to vector<16x32xf32>
    %257 = arith.mulf %252, %256 : vector<16x32xf32>
    %258 = arith.addf %257, %35 : vector<16x32xf32>
    %cst_55 = arith.constant 0.000000e+00 : f32
    %259 = vector.broadcast %cst_55 : f32 to vector<16x32xf32>
    %260 = arith.cmpf ogt, %258, %259 : vector<16x32xf32>
    %cst_56 = arith.constant 0.00999999977 : f32
    %261 = vector.broadcast %cst_56 : f32 to vector<16x32xf32>
    %262 = arith.mulf %261, %258 : vector<16x32xf32>
    %263 = arith.select %260, %258, %262 : vector<16x32xi1>, vector<16x32xf32>
    %c0_57 = arith.constant 0 : index
    %c0_58 = arith.constant 0 : index
    %264 = vector.load %arg15[%c0_57, %c0_58] : memref<32x128xbf16, #tpu.memory_space<vmem>>, vector<32x128xbf16>
    %265 = arith.truncf %263 : vector<16x32xf32> to vector<16x32xbf16>
    %cst_59 = arith.constant dense<0.000000e+00> : vector<16x128xf32>
    %266 = tpu.matmul %265, %264, %cst_59 {dimension_numbers = #tpu.dot_dimension_numbers<[1], [0], [0], [1], [0, 0, 1, 1], [], []>} : vector<16x32xbf16>, vector<32x128xbf16>, vector<16x128xf32> -> vector<16x128xf32>
    %267 = arith.addf %266, %26 : vector<16x128xf32>
    %268 = vector.extract_strided_slice %267 {offsets = [0, 0], sizes = [16, 32], strides = [1, 1]} : vector<16x128xf32> to vector<16x32xf32>
    %269 = vector.extract_strided_slice %141 {offsets = [0, 0], sizes = [16, 32], strides = [1, 1]} : vector<16x128xf32> to vector<16x32xf32>
    %270 = arith.addf %268, %269 : vector<16x32xf32>
    %271 = arith.negf %270 : vector<16x32xf32>
    %272 = math.exp %271 : vector<16x32xf32>
    %cst_60 = arith.constant 1.000000e+00 : f32
    %273 = vector.broadcast %cst_60 : f32 to vector<16x32xf32>
    %274 = arith.addf %273, %272 : vector<16x32xf32>
    %275 = arith.divf %273, %274 : vector<16x32xf32>
    %276 = vector.extract_strided_slice %267 {offsets = [0, 32], sizes = [16, 32], strides = [1, 1]} : vector<16x128xf32> to vector<16x32xf32>
    %277 = vector.extract_strided_slice %141 {offsets = [0, 32], sizes = [16, 32], strides = [1, 1]} : vector<16x128xf32> to vector<16x32xf32>
    %278 = arith.addf %276, %277 : vector<16x32xf32>
    %279 = arith.negf %278 : vector<16x32xf32>
    %280 = math.exp %279 : vector<16x32xf32>
    %cst_61 = arith.constant 1.000000e+00 : f32
    %281 = vector.broadcast %cst_61 : f32 to vector<16x32xf32>
    %282 = arith.addf %281, %280 : vector<16x32xf32>
    %283 = arith.divf %281, %282 : vector<16x32xf32>
    %284 = vector.extract_strided_slice %267 {offsets = [0, 64], sizes = [16, 32], strides = [1, 1]} : vector<16x128xf32> to vector<16x32xf32>
    %285 = vector.extract_strided_slice %141 {offsets = [0, 64], sizes = [16, 32], strides = [1, 1]} : vector<16x128xf32> to vector<16x32xf32>
    %286 = arith.mulf %275, %285 : vector<16x32xf32>
    %287 = arith.addf %284, %286 : vector<16x32xf32>
    %288 = math.tanh %287 : vector<16x32xf32>
    %cst_62 = arith.constant 1.000000e+00 : f32
    %289 = vector.broadcast %cst_62 : f32 to vector<16x32xf32>
    %290 = arith.subf %289, %283 : vector<16x32xf32>
    %291 = arith.mulf %290, %288 : vector<16x32xf32>
    %292 = arith.mulf %283, %1 : vector<16x32xf32>
    %293 = arith.addf %291, %292 : vector<16x32xf32>
    %c0_63 = arith.constant 0 : index
    %c0_64 = arith.constant 0 : index
    %294 = vector.load %arg18[%c0_63, %c0_64] : memref<32x32xbf16, #tpu.memory_space<vmem>>, vector<32x32xbf16>
    %295 = arith.truncf %293 : vector<16x32xf32> to vector<16x32xbf16>
    %cst_65 = arith.constant dense<0.000000e+00> : vector<16x32xf32>
    %296 = tpu.matmul %295, %294, %cst_65 {dimension_numbers = #tpu.dot_dimension_numbers<[1], [0], [0], [1], [0, 0, 1, 1], [], []>} : vector<16x32xbf16>, vector<32x32xbf16>, vector<16x32xf32> -> vector<16x32xf32>
    %cst_66 = arith.constant dense<0.000000e+00> : vector<32xf32>
    %297 = vector.multi_reduction <add>, %296, %cst_66 [0] : vector<16x32xf32> to vector<32xf32>
    %298 = vector.shape_cast %297 : vector<32xf32> to vector<1x32xf32>
    %cst_67 = arith.constant 1.600000e+01 : f32
    %299 = vector.broadcast %cst_67 : f32 to vector<1x32xf32>
    %300 = arith.divf %298, %299 : vector<1x32xf32>
    %301 = vector.broadcast %300 : vector<1x32xf32> to vector<16x32xf32>
    %302 = arith.subf %296, %301 : vector<16x32xf32>
    %303 = arith.mulf %302, %302 : vector<16x32xf32>
    %cst_68 = arith.constant dense<0.000000e+00> : vector<32xf32>
    %304 = vector.multi_reduction <add>, %303, %cst_68 [0] : vector<16x32xf32> to vector<32xf32>
    %305 = vector.shape_cast %304 : vector<32xf32> to vector<1x32xf32>
    %cst_69 = arith.constant 1.600000e+01 : f32
    %306 = vector.broadcast %cst_69 : f32 to vector<1x32xf32>
    %307 = arith.divf %305, %306 : vector<1x32xf32>
    %308 = arith.mulf %38, %302 : vector<16x32xf32>
    %cst_70 = arith.constant 9.99999974E-6 : f32
    %309 = vector.broadcast %cst_70 : f32 to vector<1x32xf32>
    %310 = arith.addf %307, %309 : vector<1x32xf32>
    %311 = math.rsqrt %310 : vector<1x32xf32>
    %312 = vector.broadcast %311 : vector<1x32xf32> to vector<16x32xf32>
    %313 = arith.mulf %308, %312 : vector<16x32xf32>
    %314 = arith.addf %313, %41 : vector<16x32xf32>
    %cst_71 = arith.constant 0.000000e+00 : f32
    %315 = vector.broadcast %cst_71 : f32 to vector<16x32xf32>
    %316 = arith.maximumf %314, %315 : vector<16x32xf32>
    %c0_72 = arith.constant 0 : index
    %c0_73 = arith.constant 0 : index
    %317 = vector.load %arg21[%c0_72, %c0_73] : memref<32x4xbf16, #tpu.memory_space<vmem>>, vector<32x4xbf16>
    %318 = arith.truncf %316 : vector<16x32xf32> to vector<16x32xbf16>
    %cst_74 = arith.constant dense<0.000000e+00> : vector<16x4xf32>
    %319 = tpu.matmul %318, %317, %cst_74 {dimension_numbers = #tpu.dot_dimension_numbers<[1], [0], [0], [1], [0, 0, 1, 1], [], []>} : vector<16x32xbf16>, vector<32x4xbf16>, vector<16x4xf32> -> vector<16x4xf32>
    %320 = arith.addf %319, %44 : vector<16x4xf32>
    %321 = arith.addf %320, %99 : vector<16x4xf32>
    %322 = arith.addf %321, %101 : vector<16x4xf32>
    %323 = arith.addf %322, %127 : vector<16x4xf32>
    %cst_75 = arith.constant 5.000000e-03 : f32
    %324 = vector.broadcast %cst_75 : f32 to vector<16x4xf32>
    %325 = arith.mulf %324, %323 : vector<16x4xf32>
    %326 = arith.addf %0, %325 : vector<16x4xf32>
    %c0_76 = arith.constant 0 : index
    %c0_77 = arith.constant 0 : index
    %c0_78 = arith.constant 0 : index
    %327 = vector.load %arg23[%c0_76, %c0_77, %c0_78] : memref<4x16x4xf32, #tpu.memory_space<vmem>>, vector<1x16x4xf32>
    %328 = vector.shape_cast %327 : vector<1x16x4xf32> to vector<16x4xf32>
    %329 = vector.shape_cast %326 : vector<16x4xf32> to vector<1x16x4xf32>
    tpu.vector_store %arg23[%c0_76, %c0_77, %c0_78], %329 {strides = array<i32>} : memref<4x16x4xf32, #tpu.memory_space<vmem>>, vector<1x16x4xf32>,
    %330 = vector.extract_strided_slice %326 {offsets = [0, 0], sizes = [1, 4], strides = [1, 1]} : vector<16x4xf32> to vector<1x4xf32>
    %331 = vector.extract_strided_slice %326 {offsets = [0, 0], sizes = [15, 4], strides = [1, 1]} : vector<16x4xf32> to vector<15x4xf32>
    %332 = tpu.concatenate %330, %331 in 0 : vector<1x4xf32>, vector<15x4xf32> -> vector<16x4xf32>
    %333 = vector.extract_strided_slice %326 {offsets = [1, 0], sizes = [15, 4], strides = [1, 1]} : vector<16x4xf32> to vector<15x4xf32>
    %334 = vector.extract_strided_slice %326 {offsets = [15, 0], sizes = [1, 4], strides = [1, 1]} : vector<16x4xf32> to vector<1x4xf32>
    %335 = tpu.concatenate %333, %334 in 0 : vector<15x4xf32>, vector<1x4xf32> -> vector<16x4xf32>
    %336 = vector.extract_strided_slice %326 {offsets = [0, 0], sizes = [16, 1], strides = [1, 1]} : vector<16x4xf32> to vector<16x1xf32>
    %337 = vector.extract_strided_slice %20 {offsets = [0, 0], sizes = [1, 12], strides = [1, 1]} : vector<4x12xf32> to vector<1x12xf32>
    %338 = vector.broadcast %336 : vector<16x1xf32> to vector<16x12xf32>
    %339 = vector.broadcast %337 : vector<1x12xf32> to vector<16x12xf32>
    %340 = arith.mulf %338, %339 : vector<16x12xf32>
    %341 = vector.extract_strided_slice %326 {offsets = [0, 1], sizes = [16, 1], strides = [1, 1]} : vector<16x4xf32> to vector<16x1xf32>
    %342 = vector.extract_strided_slice %20 {offsets = [1, 0], sizes = [1, 12], strides = [1, 1]} : vector<4x12xf32> to vector<1x12xf32>
    %343 = vector.broadcast %341 : vector<16x1xf32> to vector<16x12xf32>
    %344 = vector.broadcast %342 : vector<1x12xf32> to vector<16x12xf32>
    %345 = arith.mulf %343, %344 : vector<16x12xf32>
    %346 = arith.addf %340, %345 : vector<16x12xf32>
    %347 = vector.extract_strided_slice %326 {offsets = [0, 2], sizes = [16, 1], strides = [1, 1]} : vector<16x4xf32> to vector<16x1xf32>
    %348 = vector.extract_strided_slice %20 {offsets = [2, 0], sizes = [1, 12], strides = [1, 1]} : vector<4x12xf32> to vector<1x12xf32>
    %349 = vector.broadcast %347 : vector<16x1xf32> to vector<16x12xf32>
    %350 = vector.broadcast %348 : vector<1x12xf32> to vector<16x12xf32>
    %351 = arith.mulf %349, %350 : vector<16x12xf32>
    %352 = arith.addf %346, %351 : vector<16x12xf32>
    %353 = vector.extract_strided_slice %326 {offsets = [0, 3], sizes = [16, 1], strides = [1, 1]} : vector<16x4xf32> to vector<16x1xf32>
    %354 = vector.extract_strided_slice %20 {offsets = [3, 0], sizes = [1, 12], strides = [1, 1]} : vector<4x12xf32> to vector<1x12xf32>
    %355 = vector.broadcast %353 : vector<16x1xf32> to vector<16x12xf32>
    %356 = vector.broadcast %354 : vector<1x12xf32> to vector<16x12xf32>
    %357 = arith.mulf %355, %356 : vector<16x12xf32>
    %358 = arith.addf %352, %357 : vector<16x12xf32>
    %359 = vector.extract_strided_slice %332 {offsets = [0, 0], sizes = [16, 1], strides = [1, 1]} : vector<16x4xf32> to vector<16x1xf32>
    %360 = vector.extract_strided_slice %18 {offsets = [0, 0], sizes = [1, 4], strides = [1, 1]} : vector<4x4xf32> to vector<1x4xf32>
    %361 = vector.broadcast %359 : vector<16x1xf32> to vector<16x4xf32>
    %362 = vector.broadcast %360 : vector<1x4xf32> to vector<16x4xf32>
    %363 = arith.mulf %361, %362 : vector<16x4xf32>
    %364 = vector.extract_strided_slice %332 {offsets = [0, 1], sizes = [16, 1], strides = [1, 1]} : vector<16x4xf32> to vector<16x1xf32>
    %365 = vector.extract_strided_slice %18 {offsets = [1, 0], sizes = [1, 4], strides = [1, 1]} : vector<4x4xf32> to vector<1x4xf32>
    %366 = vector.broadcast %364 : vector<16x1xf32> to vector<16x4xf32>
    %367 = vector.broadcast %365 : vector<1x4xf32> to vector<16x4xf32>
    %368 = arith.mulf %366, %367 : vector<16x4xf32>
    %369 = arith.addf %363, %368 : vector<16x4xf32>
    %370 = vector.extract_strided_slice %332 {offsets = [0, 2], sizes = [16, 1], strides = [1, 1]} : vector<16x4xf32> to vector<16x1xf32>
    %371 = vector.extract_strided_slice %18 {offsets = [2, 0], sizes = [1, 4], strides = [1, 1]} : vector<4x4xf32> to vector<1x4xf32>
    %372 = vector.broadcast %370 : vector<16x1xf32> to vector<16x4xf32>
    %373 = vector.broadcast %371 : vector<1x4xf32> to vector<16x4xf32>
    %374 = arith.mulf %372, %373 : vector<16x4xf32>
    %375 = arith.addf %369, %374 : vector<16x4xf32>
    %376 = vector.extract_strided_slice %332 {offsets = [0, 3], sizes = [16, 1], strides = [1, 1]} : vector<16x4xf32> to vector<16x1xf32>
    %377 = vector.extract_strided_slice %18 {offsets = [3, 0], sizes = [1, 4], strides = [1, 1]} : vector<4x4xf32> to vector<1x4xf32>
    %378 = vector.broadcast %376 : vector<16x1xf32> to vector<16x4xf32>
    %379 = vector.broadcast %377 : vector<1x4xf32> to vector<16x4xf32>
    %380 = arith.mulf %378, %379 : vector<16x4xf32>
    %381 = arith.addf %375, %380 : vector<16x4xf32>
    %382 = vector.extract_strided_slice %358 {offsets = [0, 0], sizes = [16, 4], strides = [1, 1]} : vector<16x12xf32> to vector<16x4xf32>
    %383 = arith.subf %381, %382 : vector<16x4xf32>
    %384 = arith.mulf %383, %9 : vector<16x4xf32>
    %385 = vector.extract_strided_slice %358 {offsets = [0, 4], sizes = [16, 4], strides = [1, 1]} : vector<16x12xf32> to vector<16x4xf32>
    %386 = arith.subf %2, %385 : vector<16x4xf32>
    %387 = vector.extract_strided_slice %335 {offsets = [0, 0], sizes = [16, 1], strides = [1, 1]} : vector<16x4xf32> to vector<16x1xf32>
    %388 = vector.extract_strided_slice %19 {offsets = [0, 0], sizes = [1, 4], strides = [1, 1]} : vector<4x4xf32> to vector<1x4xf32>
    %389 = vector.broadcast %387 : vector<16x1xf32> to vector<16x4xf32>
    %390 = vector.broadcast %388 : vector<1x4xf32> to vector<16x4xf32>
    %391 = arith.mulf %389, %390 : vector<16x4xf32>
    %392 = vector.extract_strided_slice %335 {offsets = [0, 1], sizes = [16, 1], strides = [1, 1]} : vector<16x4xf32> to vector<16x1xf32>
    %393 = vector.extract_strided_slice %19 {offsets = [1, 0], sizes = [1, 4], strides = [1, 1]} : vector<4x4xf32> to vector<1x4xf32>
    %394 = vector.broadcast %392 : vector<16x1xf32> to vector<16x4xf32>
    %395 = vector.broadcast %393 : vector<1x4xf32> to vector<16x4xf32>
    %396 = arith.mulf %394, %395 : vector<16x4xf32>
    %397 = arith.addf %391, %396 : vector<16x4xf32>
    %398 = vector.extract_strided_slice %335 {offsets = [0, 2], sizes = [16, 1], strides = [1, 1]} : vector<16x4xf32> to vector<16x1xf32>
    %399 = vector.extract_strided_slice %19 {offsets = [2, 0], sizes = [1, 4], strides = [1, 1]} : vector<4x4xf32> to vector<1x4xf32>
    %400 = vector.broadcast %398 : vector<16x1xf32> to vector<16x4xf32>
    %401 = vector.broadcast %399 : vector<1x4xf32> to vector<16x4xf32>
    %402 = arith.mulf %400, %401 : vector<16x4xf32>
    %403 = arith.addf %397, %402 : vector<16x4xf32>
    %404 = vector.extract_strided_slice %335 {offsets = [0, 3], sizes = [16, 1], strides = [1, 1]} : vector<16x4xf32> to vector<16x1xf32>
    %405 = vector.extract_strided_slice %19 {offsets = [3, 0], sizes = [1, 4], strides = [1, 1]} : vector<4x4xf32> to vector<1x4xf32>
    %406 = vector.broadcast %404 : vector<16x1xf32> to vector<16x4xf32>
    %407 = vector.broadcast %405 : vector<1x4xf32> to vector<16x4xf32>
    %408 = arith.mulf %406, %407 : vector<16x4xf32>
    %409 = arith.addf %403, %408 : vector<16x4xf32>
    %410 = vector.extract_strided_slice %358 {offsets = [0, 8], sizes = [16, 4], strides = [1, 1]} : vector<16x12xf32> to vector<16x4xf32>
    %411 = arith.subf %409, %410 : vector<16x4xf32>
    %412 = arith.mulf %411, %15 : vector<16x4xf32>
    %c0_79 = arith.constant 0 : index
    %c0_80 = arith.constant 0 : index
    %413 = vector.load %arg9[%c0_79, %c0_80] : memref<32x512xbf16, #tpu.memory_space<vmem>>, vector<32x512xbf16>
    %414 = arith.truncf %293 : vector<16x32xf32> to vector<16x32xbf16>
    %cst_81 = arith.constant dense<0.000000e+00> : vector<16x512xf32>
    %415 = tpu.matmul %414, %413, %cst_81 {dimension_numbers = #tpu.dot_dimension_numbers<[1], [0], [0], [1], [0, 0, 1, 1], [], []>} : vector<16x32xbf16>, vector<32x512xbf16>, vector<16x512xf32> -> vector<16x512xf32>
    %416 = vector.extract_strided_slice %415 {offsets = [0, 0], sizes = [16, 128], strides = [1, 1]} : vector<16x512xf32> to vector<16x128xf32>
    %417 = vector.extract_strided_slice %415 {offsets = [0, 128], sizes = [16, 128], strides = [1, 1]} : vector<16x512xf32> to vector<16x128xf32>
    %418 = vector.extract_strided_slice %417 {offsets = [0, 0], sizes = [1, 128], strides = [1, 1]} : vector<16x128xf32> to vector<1x128xf32>
    %419 = vector.extract_strided_slice %417 {offsets = [0, 0], sizes = [15, 128], strides = [1, 1]} : vector<16x128xf32> to vector<15x128xf32>
    %420 = tpu.concatenate %418, %419 in 0 : vector<1x128xf32>, vector<15x128xf32> -> vector<16x128xf32>
    %421 = vector.extract_strided_slice %415 {offsets = [0, 256], sizes = [16, 128], strides = [1, 1]} : vector<16x512xf32> to vector<16x128xf32>
    %422 = vector.extract_strided_slice %421 {offsets = [1, 0], sizes = [15, 128], strides = [1, 1]} : vector<16x128xf32> to vector<15x128xf32>
    %423 = vector.extract_strided_slice %421 {offsets = [15, 0], sizes = [1, 128], strides = [1, 1]} : vector<16x128xf32> to vector<1x128xf32>
    %424 = tpu.concatenate %422, %423 in 0 : vector<15x128xf32>, vector<1x128xf32> -> vector<16x128xf32>
    %425 = vector.extract_strided_slice %415 {offsets = [0, 384], sizes = [16, 128], strides = [1, 1]} : vector<16x512xf32> to vector<16x128xf32>
    %426 = arith.addf %425, %29 : vector<16x128xf32>
    %c0_82 = arith.constant 0 : index
    %c0_83 = arith.constant 0 : index
    %c0_84 = arith.constant 0 : index
    %427 = vector.load %arg8[%c0_82, %c0_83, %c0_84] : memref<3x4x128xf32, #tpu.memory_space<vmem>>, vector<1x4x128xf32>
    %428 = vector.shape_cast %427 : vector<1x4x128xf32> to vector<4x128xf32>
    %429 = vector.extract_strided_slice %384 {offsets = [0, 0], sizes = [16, 1], strides = [1, 1]} : vector<16x4xf32> to vector<16x1xf32>
    %430 = vector.extract_strided_slice %428 {offsets = [0, 0], sizes = [1, 128], strides = [1, 1]} : vector<4x128xf32> to vector<1x128xf32>
    %431 = vector.broadcast %429 : vector<16x1xf32> to vector<16x128xf32>
    %432 = vector.broadcast %430 : vector<1x128xf32> to vector<16x128xf32>
    %433 = arith.mulf %431, %432 : vector<16x128xf32>
    %434 = vector.extract_strided_slice %384 {offsets = [0, 1], sizes = [16, 1], strides = [1, 1]} : vector<16x4xf32> to vector<16x1xf32>
    %435 = vector.extract_strided_slice %428 {offsets = [1, 0], sizes = [1, 128], strides = [1, 1]} : vector<4x128xf32> to vector<1x128xf32>
    %436 = vector.broadcast %434 : vector<16x1xf32> to vector<16x128xf32>
    %437 = vector.broadcast %435 : vector<1x128xf32> to vector<16x128xf32>
    %438 = arith.mulf %436, %437 : vector<16x128xf32>
    %439 = arith.addf %433, %438 : vector<16x128xf32>
    %440 = vector.extract_strided_slice %384 {offsets = [0, 2], sizes = [16, 1], strides = [1, 1]} : vector<16x4xf32> to vector<16x1xf32>
    %441 = vector.extract_strided_slice %428 {offsets = [2, 0], sizes = [1, 128], strides = [1, 1]} : vector<4x128xf32> to vector<1x128xf32>
    %442 = vector.broadcast %440 : vector<16x1xf32> to vector<16x128xf32>
    %443 = vector.broadcast %441 : vector<1x128xf32> to vector<16x128xf32>
    %444 = arith.mulf %442, %443 : vector<16x128xf32>
    %445 = arith.addf %439, %444 : vector<16x128xf32>
    %446 = vector.extract_strided_slice %384 {offsets = [0, 3], sizes = [16, 1], strides = [1, 1]} : vector<16x4xf32> to vector<16x1xf32>
    %447 = vector.extract_strided_slice %428 {offsets = [3, 0], sizes = [1, 128], strides = [1, 1]} : vector<4x128xf32> to vector<1x128xf32>
    %448 = vector.broadcast %446 : vector<16x1xf32> to vector<16x128xf32>
    %449 = vector.broadcast %447 : vector<1x128xf32> to vector<16x128xf32>
    %450 = arith.mulf %448, %449 : vector<16x128xf32>
    %451 = arith.addf %445, %450 : vector<16x128xf32>
    %c1_85 = arith.constant 1 : index
    %c0_86 = arith.constant 0 : index
    %c0_87 = arith.constant 0 : index
    %452 = vector.load %arg8[%c1_85, %c0_86, %c0_87] : memref<3x4x128xf32, #tpu.memory_space<vmem>>, vector<1x4x128xf32>
    %453 = vector.shape_cast %452 : vector<1x4x128xf32> to vector<4x128xf32>
    %454 = vector.extract_strided_slice %386 {offsets = [0, 0], sizes = [16, 1], strides = [1, 1]} : vector<16x4xf32> to vector<16x1xf32>
    %455 = vector.extract_strided_slice %453 {offsets = [0, 0], sizes = [1, 128], strides = [1, 1]} : vector<4x128xf32> to vector<1x128xf32>
    %456 = vector.broadcast %454 : vector<16x1xf32> to vector<16x128xf32>
    %457 = vector.broadcast %455 : vector<1x128xf32> to vector<16x128xf32>
    %458 = arith.mulf %456, %457 : vector<16x128xf32>
    %459 = vector.extract_strided_slice %386 {offsets = [0, 1], sizes = [16, 1], strides = [1, 1]} : vector<16x4xf32> to vector<16x1xf32>
    %460 = vector.extract_strided_slice %453 {offsets = [1, 0], sizes = [1, 128], strides = [1, 1]} : vector<4x128xf32> to vector<1x128xf32>
    %461 = vector.broadcast %459 : vector<16x1xf32> to vector<16x128xf32>
    %462 = vector.broadcast %460 : vector<1x128xf32> to vector<16x128xf32>
    %463 = arith.mulf %461, %462 : vector<16x128xf32>
    %464 = arith.addf %458, %463 : vector<16x128xf32>
    %465 = vector.extract_strided_slice %386 {offsets = [0, 2], sizes = [16, 1], strides = [1, 1]} : vector<16x4xf32> to vector<16x1xf32>
    %466 = vector.extract_strided_slice %453 {offsets = [2, 0], sizes = [1, 128], strides = [1, 1]} : vector<4x128xf32> to vector<1x128xf32>
    %467 = vector.broadcast %465 : vector<16x1xf32> to vector<16x128xf32>
    %468 = vector.broadcast %466 : vector<1x128xf32> to vector<16x128xf32>
    %469 = arith.mulf %467, %468 : vector<16x128xf32>
    %470 = arith.addf %464, %469 : vector<16x128xf32>
    %471 = vector.extract_strided_slice %386 {offsets = [0, 3], sizes = [16, 1], strides = [1, 1]} : vector<16x4xf32> to vector<16x1xf32>
    %472 = vector.extract_strided_slice %453 {offsets = [3, 0], sizes = [1, 128], strides = [1, 1]} : vector<4x128xf32> to vector<1x128xf32>
    %473 = vector.broadcast %471 : vector<16x1xf32> to vector<16x128xf32>
    %474 = vector.broadcast %472 : vector<1x128xf32> to vector<16x128xf32>
    %475 = arith.mulf %473, %474 : vector<16x128xf32>
    %476 = arith.addf %470, %475 : vector<16x128xf32>
    %477 = arith.addf %451, %476 : vector<16x128xf32>
    %c2_88 = arith.constant 2 : index
    %c0_89 = arith.constant 0 : index
    %c0_90 = arith.constant 0 : index
    %478 = vector.load %arg8[%c2_88, %c0_89, %c0_90] : memref<3x4x128xf32, #tpu.memory_space<vmem>>, vector<1x4x128xf32>
    %479 = vector.shape_cast %478 : vector<1x4x128xf32> to vector<4x128xf32>
    %480 = vector.extract_strided_slice %412 {offsets = [0, 0], sizes = [16, 1], strides = [1, 1]} : vector<16x4xf32> to vector<16x1xf32>
    %481 = vector.extract_strided_slice %479 {offsets = [0, 0], sizes = [1, 128], strides = [1, 1]} : vector<4x128xf32> to vector<1x128xf32>
    %482 = vector.broadcast %480 : vector<16x1xf32> to vector<16x128xf32>
    %483 = vector.broadcast %481 : vector<1x128xf32> to vector<16x128xf32>
    %484 = arith.mulf %482, %483 : vector<16x128xf32>
    %485 = vector.extract_strided_slice %412 {offsets = [0, 1], sizes = [16, 1], strides = [1, 1]} : vector<16x4xf32> to vector<16x1xf32>
    %486 = vector.extract_strided_slice %479 {offsets = [1, 0], sizes = [1, 128], strides = [1, 1]} : vector<4x128xf32> to vector<1x128xf32>
    %487 = vector.broadcast %485 : vector<16x1xf32> to vector<16x128xf32>
    %488 = vector.broadcast %486 : vector<1x128xf32> to vector<16x128xf32>
    %489 = arith.mulf %487, %488 : vector<16x128xf32>
    %490 = arith.addf %484, %489 : vector<16x128xf32>
    %491 = vector.extract_strided_slice %412 {offsets = [0, 2], sizes = [16, 1], strides = [1, 1]} : vector<16x4xf32> to vector<16x1xf32>
    %492 = vector.extract_strided_slice %479 {offsets = [2, 0], sizes = [1, 128], strides = [1, 1]} : vector<4x128xf32> to vector<1x128xf32>
    %493 = vector.broadcast %491 : vector<16x1xf32> to vector<16x128xf32>
    %494 = vector.broadcast %492 : vector<1x128xf32> to vector<16x128xf32>
    %495 = arith.mulf %493, %494 : vector<16x128xf32>
    %496 = arith.addf %490, %495 : vector<16x128xf32>
    %497 = vector.extract_strided_slice %412 {offsets = [0, 3], sizes = [16, 1], strides = [1, 1]} : vector<16x4xf32> to vector<16x1xf32>
    %498 = vector.extract_strided_slice %479 {offsets = [3, 0], sizes = [1, 128], strides = [1, 1]} : vector<4x128xf32> to vector<1x128xf32>
    %499 = vector.broadcast %497 : vector<16x1xf32> to vector<16x128xf32>
    %500 = vector.broadcast %498 : vector<1x128xf32> to vector<16x128xf32>
    %501 = arith.mulf %499, %500 : vector<16x128xf32>
    %502 = arith.addf %496, %501 : vector<16x128xf32>
    %503 = arith.addf %477, %502 : vector<16x128xf32>
    %504 = arith.addf %416, %420 : vector<16x128xf32>
    %505 = arith.addf %504, %424 : vector<16x128xf32>
    %506 = arith.addf %505, %16 : vector<16x128xf32>
    %507 = arith.addf %506, %503 : vector<16x128xf32>
    %cst_91 = arith.constant 0.000000e+00 : f32
    %508 = vector.broadcast %cst_91 : f32 to vector<16x128xf32>
    %509 = arith.cmpf ogt, %507, %508 : vector<16x128xf32>
    %cst_92 = arith.constant 0.00999999977 : f32
    %510 = vector.broadcast %cst_92 : f32 to vector<16x128xf32>
    %511 = arith.mulf %510, %507 : vector<16x128xf32>
    %512 = arith.select %509, %507, %511 : vector<16x128xi1>, vector<16x128xf32>
    %c0_93 = arith.constant 0 : index
    %c0_94 = arith.constant 0 : index
    %513 = vector.load %arg10[%c0_93, %c0_94] : memref<128x128xbf16, #tpu.memory_space<vmem>>, vector<128x128xbf16>
    %514 = arith.truncf %512 : vector<16x128xf32> to vector<16x128xbf16>
    %cst_95 = arith.constant dense<0.000000e+00> : vector<16x128xf32>
    %515 = tpu.matmul %514, %513, %cst_95 {dimension_numbers = #tpu.dot_dimension_numbers<[1], [0], [0], [1], [0, 0, 1, 1], [], []>} : vector<16x128xbf16>, vector<128x128xbf16>, vector<16x128xf32> -> vector<16x128xf32>
    %516 = arith.addf %515, %23 : vector<16x128xf32>
    %cst_96 = arith.constant 0.000000e+00 : f32
    %517 = vector.broadcast %cst_96 : f32 to vector<16x128xf32>
    %518 = arith.cmpf ogt, %516, %517 : vector<16x128xf32>
    %cst_97 = arith.constant 0.00999999977 : f32
    %519 = vector.broadcast %cst_97 : f32 to vector<16x128xf32>
    %520 = arith.mulf %519, %516 : vector<16x128xf32>
    %521 = arith.select %518, %516, %520 : vector<16x128xi1>, vector<16x128xf32>
    %522 = arith.mulf %521, %17 : vector<16x128xf32>
    %c0_98 = arith.constant 0 : index
    %c0_99 = arith.constant 0 : index
    %523 = vector.load %arg12[%c0_98, %c0_99] : memref<128x32xbf16, #tpu.memory_space<vmem>>, vector<128x32xbf16>
    %524 = arith.truncf %522 : vector<16x128xf32> to vector<16x128xbf16>
    %cst_100 = arith.constant dense<0.000000e+00> : vector<16x32xf32>
    %525 = tpu.matmul %524, %523, %cst_100 {dimension_numbers = #tpu.dot_dimension_numbers<[1], [0], [0], [1], [0, 0, 1, 1], [], []>} : vector<16x128xbf16>, vector<128x32xbf16>, vector<16x32xf32> -> vector<16x32xf32>
    %cst_101 = arith.constant dense<0.000000e+00> : vector<32xf32>
    %526 = vector.multi_reduction <add>, %525, %cst_101 [0] : vector<16x32xf32> to vector<32xf32>
    %527 = vector.shape_cast %526 : vector<32xf32> to vector<1x32xf32>
    %cst_102 = arith.constant 1.600000e+01 : f32
    %528 = vector.broadcast %cst_102 : f32 to vector<1x32xf32>
    %529 = arith.divf %527, %528 : vector<1x32xf32>
    %530 = vector.broadcast %529 : vector<1x32xf32> to vector<16x32xf32>
    %531 = arith.subf %525, %530 : vector<16x32xf32>
    %532 = arith.mulf %531, %531 : vector<16x32xf32>
    %cst_103 = arith.constant dense<0.000000e+00> : vector<32xf32>
    %533 = vector.multi_reduction <add>, %532, %cst_103 [0] : vector<16x32xf32> to vector<32xf32>
    %534 = vector.shape_cast %533 : vector<32xf32> to vector<1x32xf32>
    %cst_104 = arith.constant 1.600000e+01 : f32
    %535 = vector.broadcast %cst_104 : f32 to vector<1x32xf32>
    %536 = arith.divf %534, %535 : vector<1x32xf32>
    %537 = arith.mulf %32, %531 : vector<16x32xf32>
    %cst_105 = arith.constant 9.99999974E-6 : f32
    %538 = vector.broadcast %cst_105 : f32 to vector<1x32xf32>
    %539 = arith.addf %536, %538 : vector<1x32xf32>
    %540 = math.rsqrt %539 : vector<1x32xf32>
    %541 = vector.broadcast %540 : vector<1x32xf32> to vector<16x32xf32>
    %542 = arith.mulf %537, %541 : vector<16x32xf32>
    %543 = arith.addf %542, %35 : vector<16x32xf32>
    %cst_106 = arith.constant 0.000000e+00 : f32
    %544 = vector.broadcast %cst_106 : f32 to vector<16x32xf32>
    %545 = arith.cmpf ogt, %543, %544 : vector<16x32xf32>
    %cst_107 = arith.constant 0.00999999977 : f32
    %546 = vector.broadcast %cst_107 : f32 to vector<16x32xf32>
    %547 = arith.mulf %546, %543 : vector<16x32xf32>
    %548 = arith.select %545, %543, %547 : vector<16x32xi1>, vector<16x32xf32>
    %c0_108 = arith.constant 0 : index
    %c0_109 = arith.constant 0 : index
    %549 = vector.load %arg15[%c0_108, %c0_109] : memref<32x128xbf16, #tpu.memory_space<vmem>>, vector<32x128xbf16>
    %550 = arith.truncf %548 : vector<16x32xf32> to vector<16x32xbf16>
    %cst_110 = arith.constant dense<0.000000e+00> : vector<16x128xf32>
    %551 = tpu.matmul %550, %549, %cst_110 {dimension_numbers = #tpu.dot_dimension_numbers<[1], [0], [0], [1], [0, 0, 1, 1], [], []>} : vector<16x32xbf16>, vector<32x128xbf16>, vector<16x128xf32> -> vector<16x128xf32>
    %552 = arith.addf %551, %26 : vector<16x128xf32>
    %553 = vector.extract_strided_slice %552 {offsets = [0, 0], sizes = [16, 32], strides = [1, 1]} : vector<16x128xf32> to vector<16x32xf32>
    %554 = vector.extract_strided_slice %426 {offsets = [0, 0], sizes = [16, 32], strides = [1, 1]} : vector<16x128xf32> to vector<16x32xf32>
    %555 = arith.addf %553, %554 : vector<16x32xf32>
    %556 = arith.negf %555 : vector<16x32xf32>
    %557 = math.exp %556 : vector<16x32xf32>
    %cst_111 = arith.constant 1.000000e+00 : f32
    %558 = vector.broadcast %cst_111 : f32 to vector<16x32xf32>
    %559 = arith.addf %558, %557 : vector<16x32xf32>
    %560 = arith.divf %558, %559 : vector<16x32xf32>
    %561 = vector.extract_strided_slice %552 {offsets = [0, 32], sizes = [16, 32], strides = [1, 1]} : vector<16x128xf32> to vector<16x32xf32>
    %562 = vector.extract_strided_slice %426 {offsets = [0, 32], sizes = [16, 32], strides = [1, 1]} : vector<16x128xf32> to vector<16x32xf32>
    %563 = arith.addf %561, %562 : vector<16x32xf32>
    %564 = arith.negf %563 : vector<16x32xf32>
    %565 = math.exp %564 : vector<16x32xf32>
    %cst_112 = arith.constant 1.000000e+00 : f32
    %566 = vector.broadcast %cst_112 : f32 to vector<16x32xf32>
    %567 = arith.addf %566, %565 : vector<16x32xf32>
    %568 = arith.divf %566, %567 : vector<16x32xf32>
    %569 = vector.extract_strided_slice %552 {offsets = [0, 64], sizes = [16, 32], strides = [1, 1]} : vector<16x128xf32> to vector<16x32xf32>
    %570 = vector.extract_strided_slice %426 {offsets = [0, 64], sizes = [16, 32], strides = [1, 1]} : vector<16x128xf32> to vector<16x32xf32>
    %571 = arith.mulf %560, %570 : vector<16x32xf32>
    %572 = arith.addf %569, %571 : vector<16x32xf32>
    %573 = math.tanh %572 : vector<16x32xf32>
    %cst_113 = arith.constant 1.000000e+00 : f32
    %574 = vector.broadcast %cst_113 : f32 to vector<16x32xf32>
    %575 = arith.subf %574, %568 : vector<16x32xf32>
    %576 = arith.mulf %575, %573 : vector<16x32xf32>
    %577 = arith.mulf %568, %293 : vector<16x32xf32>
    %578 = arith.addf %576, %577 : vector<16x32xf32>
    %c0_114 = arith.constant 0 : index
    %c0_115 = arith.constant 0 : index
    %579 = vector.load %arg18[%c0_114, %c0_115] : memref<32x32xbf16, #tpu.memory_space<vmem>>, vector<32x32xbf16>
    %580 = arith.truncf %578 : vector<16x32xf32> to vector<16x32xbf16>
    %cst_116 = arith.constant dense<0.000000e+00> : vector<16x32xf32>
    %581 = tpu.matmul %580, %579, %cst_116 {dimension_numbers = #tpu.dot_dimension_numbers<[1], [0], [0], [1], [0, 0, 1, 1], [], []>} : vector<16x32xbf16>, vector<32x32xbf16>, vector<16x32xf32> -> vector<16x32xf32>
    %cst_117 = arith.constant dense<0.000000e+00> : vector<32xf32>
    %582 = vector.multi_reduction <add>, %581, %cst_117 [0] : vector<16x32xf32> to vector<32xf32>
    %583 = vector.shape_cast %582 : vector<32xf32> to vector<1x32xf32>
    %cst_118 = arith.constant 1.600000e+01 : f32
    %584 = vector.broadcast %cst_118 : f32 to vector<1x32xf32>
    %585 = arith.divf %583, %584 : vector<1x32xf32>
    %586 = vector.broadcast %585 : vector<1x32xf32> to vector<16x32xf32>
    %587 = arith.subf %581, %586 : vector<16x32xf32>
    %588 = arith.mulf %587, %587 : vector<16x32xf32>
    %cst_119 = arith.constant dense<0.000000e+00> : vector<32xf32>
    %589 = vector.multi_reduction <add>, %588, %cst_119 [0] : vector<16x32xf32> to vector<32xf32>
    %590 = vector.shape_cast %589 : vector<32xf32> to vector<1x32xf32>
    %cst_120 = arith.constant 1.600000e+01 : f32
    %591 = vector.broadcast %cst_120 : f32 to vector<1x32xf32>
    %592 = arith.divf %590, %591 : vector<1x32xf32>
    %593 = arith.mulf %38, %587 : vector<16x32xf32>
    %cst_121 = arith.constant 9.99999974E-6 : f32
    %594 = vector.broadcast %cst_121 : f32 to vector<1x32xf32>
    %595 = arith.addf %592, %594 : vector<1x32xf32>
    %596 = math.rsqrt %595 : vector<1x32xf32>
    %597 = vector.broadcast %596 : vector<1x32xf32> to vector<16x32xf32>
    %598 = arith.mulf %593, %597 : vector<16x32xf32>
    %599 = arith.addf %598, %41 : vector<16x32xf32>
    %cst_122 = arith.constant 0.000000e+00 : f32
    %600 = vector.broadcast %cst_122 : f32 to vector<16x32xf32>
    %601 = arith.maximumf %599, %600 : vector<16x32xf32>
    %c0_123 = arith.constant 0 : index
    %c0_124 = arith.constant 0 : index
    %602 = vector.load %arg21[%c0_123, %c0_124] : memref<32x4xbf16, #tpu.memory_space<vmem>>, vector<32x4xbf16>
    %603 = arith.truncf %601 : vector<16x32xf32> to vector<16x32xbf16>
    %cst_125 = arith.constant dense<0.000000e+00> : vector<16x4xf32>
    %604 = tpu.matmul %603, %602, %cst_125 {dimension_numbers = #tpu.dot_dimension_numbers<[1], [0], [0], [1], [0, 0, 1, 1], [], []>} : vector<16x32xbf16>, vector<32x4xbf16>, vector<16x4xf32> -> vector<16x4xf32>
    %605 = arith.addf %604, %44 : vector<16x4xf32>
    %606 = arith.addf %605, %384 : vector<16x4xf32>
    %607 = arith.addf %606, %386 : vector<16x4xf32>
    %608 = arith.addf %607, %412 : vector<16x4xf32>
    %cst_126 = arith.constant 5.000000e-03 : f32
    %609 = vector.broadcast %cst_126 : f32 to vector<16x4xf32>
    %610 = arith.mulf %609, %608 : vector<16x4xf32>
    %611 = arith.addf %326, %610 : vector<16x4xf32>
    %c1_127 = arith.constant 1 : index
    %c0_128 = arith.constant 0 : index
    %c0_129 = arith.constant 0 : index
    %612 = vector.load %arg23[%c1_127, %c0_128, %c0_129] : memref<4x16x4xf32, #tpu.memory_space<vmem>>, vector<1x16x4xf32>
    %613 = vector.shape_cast %612 : vector<1x16x4xf32> to vector<16x4xf32>
    %614 = vector.shape_cast %611 : vector<16x4xf32> to vector<1x16x4xf32>
    tpu.vector_store %arg23[%c1_127, %c0_128, %c0_129], %614 {strides = array<i32>} : memref<4x16x4xf32, #tpu.memory_space<vmem>>, vector<1x16x4xf32>,
    %615 = vector.extract_strided_slice %611 {offsets = [0, 0], sizes = [1, 4], strides = [1, 1]} : vector<16x4xf32> to vector<1x4xf32>
    %616 = vector.extract_strided_slice %611 {offsets = [0, 0], sizes = [15, 4], strides = [1, 1]} : vector<16x4xf32> to vector<15x4xf32>
    %617 = tpu.concatenate %615, %616 in 0 : vector<1x4xf32>, vector<15x4xf32> -> vector<16x4xf32>
    %618 = vector.extract_strided_slice %611 {offsets = [1, 0], sizes = [15, 4], strides = [1, 1]} : vector<16x4xf32> to vector<15x4xf32>
    %619 = vector.extract_strided_slice %611 {offsets = [15, 0], sizes = [1, 4], strides = [1, 1]} : vector<16x4xf32> to vector<1x4xf32>
    %620 = tpu.concatenate %618, %619 in 0 : vector<15x4xf32>, vector<1x4xf32> -> vector<16x4xf32>
    %621 = vector.extract_strided_slice %611 {offsets = [0, 0], sizes = [16, 1], strides = [1, 1]} : vector<16x4xf32> to vector<16x1xf32>
    %622 = vector.extract_strided_slice %20 {offsets = [0, 0], sizes = [1, 12], strides = [1, 1]} : vector<4x12xf32> to vector<1x12xf32>
    %623 = vector.broadcast %621 : vector<16x1xf32> to vector<16x12xf32>
    %624 = vector.broadcast %622 : vector<1x12xf32> to vector<16x12xf32>
    %625 = arith.mulf %623, %624 : vector<16x12xf32>
    %626 = vector.extract_strided_slice %611 {offsets = [0, 1], sizes = [16, 1], strides = [1, 1]} : vector<16x4xf32> to vector<16x1xf32>
    %627 = vector.extract_strided_slice %20 {offsets = [1, 0], sizes = [1, 12], strides = [1, 1]} : vector<4x12xf32> to vector<1x12xf32>
    %628 = vector.broadcast %626 : vector<16x1xf32> to vector<16x12xf32>
    %629 = vector.broadcast %627 : vector<1x12xf32> to vector<16x12xf32>
    %630 = arith.mulf %628, %629 : vector<16x12xf32>
    %631 = arith.addf %625, %630 : vector<16x12xf32>
    %632 = vector.extract_strided_slice %611 {offsets = [0, 2], sizes = [16, 1], strides = [1, 1]} : vector<16x4xf32> to vector<16x1xf32>
    %633 = vector.extract_strided_slice %20 {offsets = [2, 0], sizes = [1, 12], strides = [1, 1]} : vector<4x12xf32> to vector<1x12xf32>
    %634 = vector.broadcast %632 : vector<16x1xf32> to vector<16x12xf32>
    %635 = vector.broadcast %633 : vector<1x12xf32> to vector<16x12xf32>
    %636 = arith.mulf %634, %635 : vector<16x12xf32>
    %637 = arith.addf %631, %636 : vector<16x12xf32>
    %638 = vector.extract_strided_slice %611 {offsets = [0, 3], sizes = [16, 1], strides = [1, 1]} : vector<16x4xf32> to vector<16x1xf32>
    %639 = vector.extract_strided_slice %20 {offsets = [3, 0], sizes = [1, 12], strides = [1, 1]} : vector<4x12xf32> to vector<1x12xf32>
    %640 = vector.broadcast %638 : vector<16x1xf32> to vector<16x12xf32>
    %641 = vector.broadcast %639 : vector<1x12xf32> to vector<16x12xf32>
    %642 = arith.mulf %640, %641 : vector<16x12xf32>
    %643 = arith.addf %637, %642 : vector<16x12xf32>
    %644 = vector.extract_strided_slice %617 {offsets = [0, 0], sizes = [16, 1], strides = [1, 1]} : vector<16x4xf32> to vector<16x1xf32>
    %645 = vector.extract_strided_slice %18 {offsets = [0, 0], sizes = [1, 4], strides = [1, 1]} : vector<4x4xf32> to vector<1x4xf32>
    %646 = vector.broadcast %644 : vector<16x1xf32> to vector<16x4xf32>
    %647 = vector.broadcast %645 : vector<1x4xf32> to vector<16x4xf32>
    %648 = arith.mulf %646, %647 : vector<16x4xf32>
    %649 = vector.extract_strided_slice %617 {offsets = [0, 1], sizes = [16, 1], strides = [1, 1]} : vector<16x4xf32> to vector<16x1xf32>
    %650 = vector.extract_strided_slice %18 {offsets = [1, 0], sizes = [1, 4], strides = [1, 1]} : vector<4x4xf32> to vector<1x4xf32>
    %651 = vector.broadcast %649 : vector<16x1xf32> to vector<16x4xf32>
    %652 = vector.broadcast %650 : vector<1x4xf32> to vector<16x4xf32>
    %653 = arith.mulf %651, %652 : vector<16x4xf32>
    %654 = arith.addf %648, %653 : vector<16x4xf32>
    %655 = vector.extract_strided_slice %617 {offsets = [0, 2], sizes = [16, 1], strides = [1, 1]} : vector<16x4xf32> to vector<16x1xf32>
    %656 = vector.extract_strided_slice %18 {offsets = [2, 0], sizes = [1, 4], strides = [1, 1]} : vector<4x4xf32> to vector<1x4xf32>
    %657 = vector.broadcast %655 : vector<16x1xf32> to vector<16x4xf32>
    %658 = vector.broadcast %656 : vector<1x4xf32> to vector<16x4xf32>
    %659 = arith.mulf %657, %658 : vector<16x4xf32>
    %660 = arith.addf %654, %659 : vector<16x4xf32>
    %661 = vector.extract_strided_slice %617 {offsets = [0, 3], sizes = [16, 1], strides = [1, 1]} : vector<16x4xf32> to vector<16x1xf32>
    %662 = vector.extract_strided_slice %18 {offsets = [3, 0], sizes = [1, 4], strides = [1, 1]} : vector<4x4xf32> to vector<1x4xf32>
    %663 = vector.broadcast %661 : vector<16x1xf32> to vector<16x4xf32>
    %664 = vector.broadcast %662 : vector<1x4xf32> to vector<16x4xf32>
    %665 = arith.mulf %663, %664 : vector<16x4xf32>
    %666 = arith.addf %660, %665 : vector<16x4xf32>
    %667 = vector.extract_strided_slice %643 {offsets = [0, 0], sizes = [16, 4], strides = [1, 1]} : vector<16x12xf32> to vector<16x4xf32>
    %668 = arith.subf %666, %667 : vector<16x4xf32>
    %669 = arith.mulf %668, %9 : vector<16x4xf32>
    %670 = vector.extract_strided_slice %643 {offsets = [0, 4], sizes = [16, 4], strides = [1, 1]} : vector<16x12xf32> to vector<16x4xf32>
    %671 = arith.subf %2, %670 : vector<16x4xf32>
    %672 = vector.extract_strided_slice %620 {offsets = [0, 0], sizes = [16, 1], strides = [1, 1]} : vector<16x4xf32> to vector<16x1xf32>
    %673 = vector.extract_strided_slice %19 {offsets = [0, 0], sizes = [1, 4], strides = [1, 1]} : vector<4x4xf32> to vector<1x4xf32>
    %674 = vector.broadcast %672 : vector<16x1xf32> to vector<16x4xf32>
    %675 = vector.broadcast %673 : vector<1x4xf32> to vector<16x4xf32>
    %676 = arith.mulf %674, %675 : vector<16x4xf32>
    %677 = vector.extract_strided_slice %620 {offsets = [0, 1], sizes = [16, 1], strides = [1, 1]} : vector<16x4xf32> to vector<16x1xf32>
    %678 = vector.extract_strided_slice %19 {offsets = [1, 0], sizes = [1, 4], strides = [1, 1]} : vector<4x4xf32> to vector<1x4xf32>
    %679 = vector.broadcast %677 : vector<16x1xf32> to vector<16x4xf32>
    %680 = vector.broadcast %678 : vector<1x4xf32> to vector<16x4xf32>
    %681 = arith.mulf %679, %680 : vector<16x4xf32>
    %682 = arith.addf %676, %681 : vector<16x4xf32>
    %683 = vector.extract_strided_slice %620 {offsets = [0, 2], sizes = [16, 1], strides = [1, 1]} : vector<16x4xf32> to vector<16x1xf32>
    %684 = vector.extract_strided_slice %19 {offsets = [2, 0], sizes = [1, 4], strides = [1, 1]} : vector<4x4xf32> to vector<1x4xf32>
    %685 = vector.broadcast %683 : vector<16x1xf32> to vector<16x4xf32>
    %686 = vector.broadcast %684 : vector<1x4xf32> to vector<16x4xf32>
    %687 = arith.mulf %685, %686 : vector<16x4xf32>
    %688 = arith.addf %682, %687 : vector<16x4xf32>
    %689 = vector.extract_strided_slice %620 {offsets = [0, 3], sizes = [16, 1], strides = [1, 1]} : vector<16x4xf32> to vector<16x1xf32>
    %690 = vector.extract_strided_slice %19 {offsets = [3, 0], sizes = [1, 4], strides = [1, 1]} : vector<4x4xf32> to vector<1x4xf32>
    %691 = vector.broadcast %689 : vector<16x1xf32> to vector<16x4xf32>
    %692 = vector.broadcast %690 : vector<1x4xf32> to vector<16x4xf32>
    %693 = arith.mulf %691, %692 : vector<16x4xf32>
    %694 = arith.addf %688, %693 : vector<16x4xf32>
    %695 = vector.extract_strided_slice %643 {offsets = [0, 8], sizes = [16, 4], strides = [1, 1]} : vector<16x12xf32> to vector<16x4xf32>
    %696 = arith.subf %694, %695 : vector<16x4xf32>
    %697 = arith.mulf %696, %15 : vector<16x4xf32>
    %c0_130 = arith.constant 0 : index
    %c0_131 = arith.constant 0 : index
    %698 = vector.load %arg9[%c0_130, %c0_131] : memref<32x512xbf16, #tpu.memory_space<vmem>>, vector<32x512xbf16>
    %699 = arith.truncf %578 : vector<16x32xf32> to vector<16x32xbf16>
    %cst_132 = arith.constant dense<0.000000e+00> : vector<16x512xf32>
    %700 = tpu.matmul %699, %698, %cst_132 {dimension_numbers = #tpu.dot_dimension_numbers<[1], [0], [0], [1], [0, 0, 1, 1], [], []>} : vector<16x32xbf16>, vector<32x512xbf16>, vector<16x512xf32> -> vector<16x512xf32>
    %701 = vector.extract_strided_slice %700 {offsets = [0, 0], sizes = [16, 128], strides = [1, 1]} : vector<16x512xf32> to vector<16x128xf32>
    %702 = vector.extract_strided_slice %700 {offsets = [0, 128], sizes = [16, 128], strides = [1, 1]} : vector<16x512xf32> to vector<16x128xf32>
    %703 = vector.extract_strided_slice %702 {offsets = [0, 0], sizes = [1, 128], strides = [1, 1]} : vector<16x128xf32> to vector<1x128xf32>
    %704 = vector.extract_strided_slice %702 {offsets = [0, 0], sizes = [15, 128], strides = [1, 1]} : vector<16x128xf32> to vector<15x128xf32>
    %705 = tpu.concatenate %703, %704 in 0 : vector<1x128xf32>, vector<15x128xf32> -> vector<16x128xf32>
    %706 = vector.extract_strided_slice %700 {offsets = [0, 256], sizes = [16, 128], strides = [1, 1]} : vector<16x512xf32> to vector<16x128xf32>
    %707 = vector.extract_strided_slice %706 {offsets = [1, 0], sizes = [15, 128], strides = [1, 1]} : vector<16x128xf32> to vector<15x128xf32>
    %708 = vector.extract_strided_slice %706 {offsets = [15, 0], sizes = [1, 128], strides = [1, 1]} : vector<16x128xf32> to vector<1x128xf32>
    %709 = tpu.concatenate %707, %708 in 0 : vector<15x128xf32>, vector<1x128xf32> -> vector<16x128xf32>
    %710 = vector.extract_strided_slice %700 {offsets = [0, 384], sizes = [16, 128], strides = [1, 1]} : vector<16x512xf32> to vector<16x128xf32>
    %711 = arith.addf %710, %29 : vector<16x128xf32>
    %c0_133 = arith.constant 0 : index
    %c0_134 = arith.constant 0 : index
    %c0_135 = arith.constant 0 : index
    %712 = vector.load %arg8[%c0_133, %c0_134, %c0_135] : memref<3x4x128xf32, #tpu.memory_space<vmem>>, vector<1x4x128xf32>
    %713 = vector.shape_cast %712 : vector<1x4x128xf32> to vector<4x128xf32>
    %714 = vector.extract_strided_slice %669 {offsets = [0, 0], sizes = [16, 1], strides = [1, 1]} : vector<16x4xf32> to vector<16x1xf32>
    %715 = vector.extract_strided_slice %713 {offsets = [0, 0], sizes = [1, 128], strides = [1, 1]} : vector<4x128xf32> to vector<1x128xf32>
    %716 = vector.broadcast %714 : vector<16x1xf32> to vector<16x128xf32>
    %717 = vector.broadcast %715 : vector<1x128xf32> to vector<16x128xf32>
    %718 = arith.mulf %716, %717 : vector<16x128xf32>
    %719 = vector.extract_strided_slice %669 {offsets = [0, 1], sizes = [16, 1], strides = [1, 1]} : vector<16x4xf32> to vector<16x1xf32>
    %720 = vector.extract_strided_slice %713 {offsets = [1, 0], sizes = [1, 128], strides = [1, 1]} : vector<4x128xf32> to vector<1x128xf32>
    %721 = vector.broadcast %719 : vector<16x1xf32> to vector<16x128xf32>
    %722 = vector.broadcast %720 : vector<1x128xf32> to vector<16x128xf32>
    %723 = arith.mulf %721, %722 : vector<16x128xf32>
    %724 = arith.addf %718, %723 : vector<16x128xf32>
    %725 = vector.extract_strided_slice %669 {offsets = [0, 2], sizes = [16, 1], strides = [1, 1]} : vector<16x4xf32> to vector<16x1xf32>
    %726 = vector.extract_strided_slice %713 {offsets = [2, 0], sizes = [1, 128], strides = [1, 1]} : vector<4x128xf32> to vector<1x128xf32>
    %727 = vector.broadcast %725 : vector<16x1xf32> to vector<16x128xf32>
    %728 = vector.broadcast %726 : vector<1x128xf32> to vector<16x128xf32>
    %729 = arith.mulf %727, %728 : vector<16x128xf32>
    %730 = arith.addf %724, %729 : vector<16x128xf32>
    %731 = vector.extract_strided_slice %669 {offsets = [0, 3], sizes = [16, 1], strides = [1, 1]} : vector<16x4xf32> to vector<16x1xf32>
    %732 = vector.extract_strided_slice %713 {offsets = [3, 0], sizes = [1, 128], strides = [1, 1]} : vector<4x128xf32> to vector<1x128xf32>
    %733 = vector.broadcast %731 : vector<16x1xf32> to vector<16x128xf32>
    %734 = vector.broadcast %732 : vector<1x128xf32> to vector<16x128xf32>
    %735 = arith.mulf %733, %734 : vector<16x128xf32>
    %736 = arith.addf %730, %735 : vector<16x128xf32>
    %c1_136 = arith.constant 1 : index
    %c0_137 = arith.constant 0 : index
    %c0_138 = arith.constant 0 : index
    %737 = vector.load %arg8[%c1_136, %c0_137, %c0_138] : memref<3x4x128xf32, #tpu.memory_space<vmem>>, vector<1x4x128xf32>
    %738 = vector.shape_cast %737 : vector<1x4x128xf32> to vector<4x128xf32>
    %739 = vector.extract_strided_slice %671 {offsets = [0, 0], sizes = [16, 1], strides = [1, 1]} : vector<16x4xf32> to vector<16x1xf32>
    %740 = vector.extract_strided_slice %738 {offsets = [0, 0], sizes = [1, 128], strides = [1, 1]} : vector<4x128xf32> to vector<1x128xf32>
    %741 = vector.broadcast %739 : vector<16x1xf32> to vector<16x128xf32>
    %742 = vector.broadcast %740 : vector<1x128xf32> to vector<16x128xf32>
    %743 = arith.mulf %741, %742 : vector<16x128xf32>
    %744 = vector.extract_strided_slice %671 {offsets = [0, 1], sizes = [16, 1], strides = [1, 1]} : vector<16x4xf32> to vector<16x1xf32>
    %745 = vector.extract_strided_slice %738 {offsets = [1, 0], sizes = [1, 128], strides = [1, 1]} : vector<4x128xf32> to vector<1x128xf32>
    %746 = vector.broadcast %744 : vector<16x1xf32> to vector<16x128xf32>
    %747 = vector.broadcast %745 : vector<1x128xf32> to vector<16x128xf32>
    %748 = arith.mulf %746, %747 : vector<16x128xf32>
    %749 = arith.addf %743, %748 : vector<16x128xf32>
    %750 = vector.extract_strided_slice %671 {offsets = [0, 2], sizes = [16, 1], strides = [1, 1]} : vector<16x4xf32> to vector<16x1xf32>
    %751 = vector.extract_strided_slice %738 {offsets = [2, 0], sizes = [1, 128], strides = [1, 1]} : vector<4x128xf32> to vector<1x128xf32>
    %752 = vector.broadcast %750 : vector<16x1xf32> to vector<16x128xf32>
    %753 = vector.broadcast %751 : vector<1x128xf32> to vector<16x128xf32>
    %754 = arith.mulf %752, %753 : vector<16x128xf32>
    %755 = arith.addf %749, %754 : vector<16x128xf32>
    %756 = vector.extract_strided_slice %671 {offsets = [0, 3], sizes = [16, 1], strides = [1, 1]} : vector<16x4xf32> to vector<16x1xf32>
    %757 = vector.extract_strided_slice %738 {offsets = [3, 0], sizes = [1, 128], strides = [1, 1]} : vector<4x128xf32> to vector<1x128xf32>
    %758 = vector.broadcast %756 : vector<16x1xf32> to vector<16x128xf32>
    %759 = vector.broadcast %757 : vector<1x128xf32> to vector<16x128xf32>
    %760 = arith.mulf %758, %759 : vector<16x128xf32>
    %761 = arith.addf %755, %760 : vector<16x128xf32>
    %762 = arith.addf %736, %761 : vector<16x128xf32>
    %c2_139 = arith.constant 2 : index
    %c0_140 = arith.constant 0 : index
    %c0_141 = arith.constant 0 : index
    %763 = vector.load %arg8[%c2_139, %c0_140, %c0_141] : memref<3x4x128xf32, #tpu.memory_space<vmem>>, vector<1x4x128xf32>
    %764 = vector.shape_cast %763 : vector<1x4x128xf32> to vector<4x128xf32>
    %765 = vector.extract_strided_slice %697 {offsets = [0, 0], sizes = [16, 1], strides = [1, 1]} : vector<16x4xf32> to vector<16x1xf32>
    %766 = vector.extract_strided_slice %764 {offsets = [0, 0], sizes = [1, 128], strides = [1, 1]} : vector<4x128xf32> to vector<1x128xf32>
    %767 = vector.broadcast %765 : vector<16x1xf32> to vector<16x128xf32>
    %768 = vector.broadcast %766 : vector<1x128xf32> to vector<16x128xf32>
    %769 = arith.mulf %767, %768 : vector<16x128xf32>
    %770 = vector.extract_strided_slice %697 {offsets = [0, 1], sizes = [16, 1], strides = [1, 1]} : vector<16x4xf32> to vector<16x1xf32>
    %771 = vector.extract_strided_slice %764 {offsets = [1, 0], sizes = [1, 128], strides = [1, 1]} : vector<4x128xf32> to vector<1x128xf32>
    %772 = vector.broadcast %770 : vector<16x1xf32> to vector<16x128xf32>
    %773 = vector.broadcast %771 : vector<1x128xf32> to vector<16x128xf32>
    %774 = arith.mulf %772, %773 : vector<16x128xf32>
    %775 = arith.addf %769, %774 : vector<16x128xf32>
    %776 = vector.extract_strided_slice %697 {offsets = [0, 2], sizes = [16, 1], strides = [1, 1]} : vector<16x4xf32> to vector<16x1xf32>
    %777 = vector.extract_strided_slice %764 {offsets = [2, 0], sizes = [1, 128], strides = [1, 1]} : vector<4x128xf32> to vector<1x128xf32>
    %778 = vector.broadcast %776 : vector<16x1xf32> to vector<16x128xf32>
    %779 = vector.broadcast %777 : vector<1x128xf32> to vector<16x128xf32>
    %780 = arith.mulf %778, %779 : vector<16x128xf32>
    %781 = arith.addf %775, %780 : vector<16x128xf32>
    %782 = vector.extract_strided_slice %697 {offsets = [0, 3], sizes = [16, 1], strides = [1, 1]} : vector<16x4xf32> to vector<16x1xf32>
    %783 = vector.extract_strided_slice %764 {offsets = [3, 0], sizes = [1, 128], strides = [1, 1]} : vector<4x128xf32> to vector<1x128xf32>
    %784 = vector.broadcast %782 : vector<16x1xf32> to vector<16x128xf32>
    %785 = vector.broadcast %783 : vector<1x128xf32> to vector<16x128xf32>
    %786 = arith.mulf %784, %785 : vector<16x128xf32>
    %787 = arith.addf %781, %786 : vector<16x128xf32>
    %788 = arith.addf %762, %787 : vector<16x128xf32>
    %789 = arith.addf %701, %705 : vector<16x128xf32>
    %790 = arith.addf %789, %709 : vector<16x128xf32>
    %791 = arith.addf %790, %16 : vector<16x128xf32>
    %792 = arith.addf %791, %788 : vector<16x128xf32>
    %cst_142 = arith.constant 0.000000e+00 : f32
    %793 = vector.broadcast %cst_142 : f32 to vector<16x128xf32>
    %794 = arith.cmpf ogt, %792, %793 : vector<16x128xf32>
    %cst_143 = arith.constant 0.00999999977 : f32
    %795 = vector.broadcast %cst_143 : f32 to vector<16x128xf32>
    %796 = arith.mulf %795, %792 : vector<16x128xf32>
    %797 = arith.select %794, %792, %796 : vector<16x128xi1>, vector<16x128xf32>
    %c0_144 = arith.constant 0 : index
    %c0_145 = arith.constant 0 : index
    %798 = vector.load %arg10[%c0_144, %c0_145] : memref<128x128xbf16, #tpu.memory_space<vmem>>, vector<128x128xbf16>
    %799 = arith.truncf %797 : vector<16x128xf32> to vector<16x128xbf16>
    %cst_146 = arith.constant dense<0.000000e+00> : vector<16x128xf32>
    %800 = tpu.matmul %799, %798, %cst_146 {dimension_numbers = #tpu.dot_dimension_numbers<[1], [0], [0], [1], [0, 0, 1, 1], [], []>} : vector<16x128xbf16>, vector<128x128xbf16>, vector<16x128xf32> -> vector<16x128xf32>
    %801 = arith.addf %800, %23 : vector<16x128xf32>
    %cst_147 = arith.constant 0.000000e+00 : f32
    %802 = vector.broadcast %cst_147 : f32 to vector<16x128xf32>
    %803 = arith.cmpf ogt, %801, %802 : vector<16x128xf32>
    %cst_148 = arith.constant 0.00999999977 : f32
    %804 = vector.broadcast %cst_148 : f32 to vector<16x128xf32>
    %805 = arith.mulf %804, %801 : vector<16x128xf32>
    %806 = arith.select %803, %801, %805 : vector<16x128xi1>, vector<16x128xf32>
    %807 = arith.mulf %806, %17 : vector<16x128xf32>
    %c0_149 = arith.constant 0 : index
    %c0_150 = arith.constant 0 : index
    %808 = vector.load %arg12[%c0_149, %c0_150] : memref<128x32xbf16, #tpu.memory_space<vmem>>, vector<128x32xbf16>
    %809 = arith.truncf %807 : vector<16x128xf32> to vector<16x128xbf16>
    %cst_151 = arith.constant dense<0.000000e+00> : vector<16x32xf32>
    %810 = tpu.matmul %809, %808, %cst_151 {dimension_numbers = #tpu.dot_dimension_numbers<[1], [0], [0], [1], [0, 0, 1, 1], [], []>} : vector<16x128xbf16>, vector<128x32xbf16>, vector<16x32xf32> -> vector<16x32xf32>
    %cst_152 = arith.constant dense<0.000000e+00> : vector<32xf32>
    %811 = vector.multi_reduction <add>, %810, %cst_152 [0] : vector<16x32xf32> to vector<32xf32>
    %812 = vector.shape_cast %811 : vector<32xf32> to vector<1x32xf32>
    %cst_153 = arith.constant 1.600000e+01 : f32
    %813 = vector.broadcast %cst_153 : f32 to vector<1x32xf32>
    %814 = arith.divf %812, %813 : vector<1x32xf32>
    %815 = vector.broadcast %814 : vector<1x32xf32> to vector<16x32xf32>
    %816 = arith.subf %810, %815 : vector<16x32xf32>
    %817 = arith.mulf %816, %816 : vector<16x32xf32>
    %cst_154 = arith.constant dense<0.000000e+00> : vector<32xf32>
    %818 = vector.multi_reduction <add>, %817, %cst_154 [0] : vector<16x32xf32> to vector<32xf32>
    %819 = vector.shape_cast %818 : vector<32xf32> to vector<1x32xf32>
    %cst_155 = arith.constant 1.600000e+01 : f32
    %820 = vector.broadcast %cst_155 : f32 to vector<1x32xf32>
    %821 = arith.divf %819, %820 : vector<1x32xf32>
    %822 = arith.mulf %32, %816 : vector<16x32xf32>
    %cst_156 = arith.constant 9.99999974E-6 : f32
    %823 = vector.broadcast %cst_156 : f32 to vector<1x32xf32>
    %824 = arith.addf %821, %823 : vector<1x32xf32>
    %825 = math.rsqrt %824 : vector<1x32xf32>
    %826 = vector.broadcast %825 : vector<1x32xf32> to vector<16x32xf32>
    %827 = arith.mulf %822, %826 : vector<16x32xf32>
    %828 = arith.addf %827, %35 : vector<16x32xf32>
    %cst_157 = arith.constant 0.000000e+00 : f32
    %829 = vector.broadcast %cst_157 : f32 to vector<16x32xf32>
    %830 = arith.cmpf ogt, %828, %829 : vector<16x32xf32>
    %cst_158 = arith.constant 0.00999999977 : f32
    %831 = vector.broadcast %cst_158 : f32 to vector<16x32xf32>
    %832 = arith.mulf %831, %828 : vector<16x32xf32>
    %833 = arith.select %830, %828, %832 : vector<16x32xi1>, vector<16x32xf32>
    %c0_159 = arith.constant 0 : index
    %c0_160 = arith.constant 0 : index
    %834 = vector.load %arg15[%c0_159, %c0_160] : memref<32x128xbf16, #tpu.memory_space<vmem>>, vector<32x128xbf16>
    %835 = arith.truncf %833 : vector<16x32xf32> to vector<16x32xbf16>
    %cst_161 = arith.constant dense<0.000000e+00> : vector<16x128xf32>
    %836 = tpu.matmul %835, %834, %cst_161 {dimension_numbers = #tpu.dot_dimension_numbers<[1], [0], [0], [1], [0, 0, 1, 1], [], []>} : vector<16x32xbf16>, vector<32x128xbf16>, vector<16x128xf32> -> vector<16x128xf32>
    %837 = arith.addf %836, %26 : vector<16x128xf32>
    %838 = vector.extract_strided_slice %837 {offsets = [0, 0], sizes = [16, 32], strides = [1, 1]} : vector<16x128xf32> to vector<16x32xf32>
    %839 = vector.extract_strided_slice %711 {offsets = [0, 0], sizes = [16, 32], strides = [1, 1]} : vector<16x128xf32> to vector<16x32xf32>
    %840 = arith.addf %838, %839 : vector<16x32xf32>
    %841 = arith.negf %840 : vector<16x32xf32>
    %842 = math.exp %841 : vector<16x32xf32>
    %cst_162 = arith.constant 1.000000e+00 : f32
    %843 = vector.broadcast %cst_162 : f32 to vector<16x32xf32>
    %844 = arith.addf %843, %842 : vector<16x32xf32>
    %845 = arith.divf %843, %844 : vector<16x32xf32>
    %846 = vector.extract_strided_slice %837 {offsets = [0, 32], sizes = [16, 32], strides = [1, 1]} : vector<16x128xf32> to vector<16x32xf32>
    %847 = vector.extract_strided_slice %711 {offsets = [0, 32], sizes = [16, 32], strides = [1, 1]} : vector<16x128xf32> to vector<16x32xf32>
    %848 = arith.addf %846, %847 : vector<16x32xf32>
    %849 = arith.negf %848 : vector<16x32xf32>
    %850 = math.exp %849 : vector<16x32xf32>
    %cst_163 = arith.constant 1.000000e+00 : f32
    %851 = vector.broadcast %cst_163 : f32 to vector<16x32xf32>
    %852 = arith.addf %851, %850 : vector<16x32xf32>
    %853 = arith.divf %851, %852 : vector<16x32xf32>
    %854 = vector.extract_strided_slice %837 {offsets = [0, 64], sizes = [16, 32], strides = [1, 1]} : vector<16x128xf32> to vector<16x32xf32>
    %855 = vector.extract_strided_slice %711 {offsets = [0, 64], sizes = [16, 32], strides = [1, 1]} : vector<16x128xf32> to vector<16x32xf32>
    %856 = arith.mulf %845, %855 : vector<16x32xf32>
    %857 = arith.addf %854, %856 : vector<16x32xf32>
    %858 = math.tanh %857 : vector<16x32xf32>
    %cst_164 = arith.constant 1.000000e+00 : f32
    %859 = vector.broadcast %cst_164 : f32 to vector<16x32xf32>
    %860 = arith.subf %859, %853 : vector<16x32xf32>
    %861 = arith.mulf %860, %858 : vector<16x32xf32>
    %862 = arith.mulf %853, %578 : vector<16x32xf32>
    %863 = arith.addf %861, %862 : vector<16x32xf32>
    %c0_165 = arith.constant 0 : index
    %c0_166 = arith.constant 0 : index
    %864 = vector.load %arg18[%c0_165, %c0_166] : memref<32x32xbf16, #tpu.memory_space<vmem>>, vector<32x32xbf16>
    %865 = arith.truncf %863 : vector<16x32xf32> to vector<16x32xbf16>
    %cst_167 = arith.constant dense<0.000000e+00> : vector<16x32xf32>
    %866 = tpu.matmul %865, %864, %cst_167 {dimension_numbers = #tpu.dot_dimension_numbers<[1], [0], [0], [1], [0, 0, 1, 1], [], []>} : vector<16x32xbf16>, vector<32x32xbf16>, vector<16x32xf32> -> vector<16x32xf32>
    %cst_168 = arith.constant dense<0.000000e+00> : vector<32xf32>
    %867 = vector.multi_reduction <add>, %866, %cst_168 [0] : vector<16x32xf32> to vector<32xf32>
    %868 = vector.shape_cast %867 : vector<32xf32> to vector<1x32xf32>
    %cst_169 = arith.constant 1.600000e+01 : f32
    %869 = vector.broadcast %cst_169 : f32 to vector<1x32xf32>
    %870 = arith.divf %868, %869 : vector<1x32xf32>
    %871 = vector.broadcast %870 : vector<1x32xf32> to vector<16x32xf32>
    %872 = arith.subf %866, %871 : vector<16x32xf32>
    %873 = arith.mulf %872, %872 : vector<16x32xf32>
    %cst_170 = arith.constant dense<0.000000e+00> : vector<32xf32>
    %874 = vector.multi_reduction <add>, %873, %cst_170 [0] : vector<16x32xf32> to vector<32xf32>
    %875 = vector.shape_cast %874 : vector<32xf32> to vector<1x32xf32>
    %cst_171 = arith.constant 1.600000e+01 : f32
    %876 = vector.broadcast %cst_171 : f32 to vector<1x32xf32>
    %877 = arith.divf %875, %876 : vector<1x32xf32>
    %878 = arith.mulf %38, %872 : vector<16x32xf32>
    %cst_172 = arith.constant 9.99999974E-6 : f32
    %879 = vector.broadcast %cst_172 : f32 to vector<1x32xf32>
    %880 = arith.addf %877, %879 : vector<1x32xf32>
    %881 = math.rsqrt %880 : vector<1x32xf32>
    %882 = vector.broadcast %881 : vector<1x32xf32> to vector<16x32xf32>
    %883 = arith.mulf %878, %882 : vector<16x32xf32>
    %884 = arith.addf %883, %41 : vector<16x32xf32>
    %cst_173 = arith.constant 0.000000e+00 : f32
    %885 = vector.broadcast %cst_173 : f32 to vector<16x32xf32>
    %886 = arith.maximumf %884, %885 : vector<16x32xf32>
    %c0_174 = arith.constant 0 : index
    %c0_175 = arith.constant 0 : index
    %887 = vector.load %arg21[%c0_174, %c0_175] : memref<32x4xbf16, #tpu.memory_space<vmem>>, vector<32x4xbf16>
    %888 = arith.truncf %886 : vector<16x32xf32> to vector<16x32xbf16>
    %cst_176 = arith.constant dense<0.000000e+00> : vector<16x4xf32>
    %889 = tpu.matmul %888, %887, %cst_176 {dimension_numbers = #tpu.dot_dimension_numbers<[1], [0], [0], [1], [0, 0, 1, 1], [], []>} : vector<16x32xbf16>, vector<32x4xbf16>, vector<16x4xf32> -> vector<16x4xf32>
    %890 = arith.addf %889, %44 : vector<16x4xf32>
    %891 = arith.addf %890, %669 : vector<16x4xf32>
    %892 = arith.addf %891, %671 : vector<16x4xf32>
    %893 = arith.addf %892, %697 : vector<16x4xf32>
    %cst_177 = arith.constant 5.000000e-03 : f32
    %894 = vector.broadcast %cst_177 : f32 to vector<16x4xf32>
    %895 = arith.mulf %894, %893 : vector<16x4xf32>
    %896 = arith.addf %611, %895 : vector<16x4xf32>
    %c2_178 = arith.constant 2 : index
    %c0_179 = arith.constant 0 : index
    %c0_180 = arith.constant 0 : index
    %897 = vector.load %arg23[%c2_178, %c0_179, %c0_180] : memref<4x16x4xf32, #tpu.memory_space<vmem>>, vector<1x16x4xf32>
    %898 = vector.shape_cast %897 : vector<1x16x4xf32> to vector<16x4xf32>
    %899 = vector.shape_cast %896 : vector<16x4xf32> to vector<1x16x4xf32>
    tpu.vector_store %arg23[%c2_178, %c0_179, %c0_180], %899 {strides = array<i32>} : memref<4x16x4xf32, #tpu.memory_space<vmem>>, vector<1x16x4xf32>,
    %900 = vector.extract_strided_slice %896 {offsets = [0, 0], sizes = [1, 4], strides = [1, 1]} : vector<16x4xf32> to vector<1x4xf32>
    %901 = vector.extract_strided_slice %896 {offsets = [0, 0], sizes = [15, 4], strides = [1, 1]} : vector<16x4xf32> to vector<15x4xf32>
    %902 = tpu.concatenate %900, %901 in 0 : vector<1x4xf32>, vector<15x4xf32> -> vector<16x4xf32>
    %903 = vector.extract_strided_slice %896 {offsets = [1, 0], sizes = [15, 4], strides = [1, 1]} : vector<16x4xf32> to vector<15x4xf32>
    %904 = vector.extract_strided_slice %896 {offsets = [15, 0], sizes = [1, 4], strides = [1, 1]} : vector<16x4xf32> to vector<1x4xf32>
    %905 = tpu.concatenate %903, %904 in 0 : vector<15x4xf32>, vector<1x4xf32> -> vector<16x4xf32>
    %906 = vector.extract_strided_slice %896 {offsets = [0, 0], sizes = [16, 1], strides = [1, 1]} : vector<16x4xf32> to vector<16x1xf32>
    %907 = vector.extract_strided_slice %20 {offsets = [0, 0], sizes = [1, 12], strides = [1, 1]} : vector<4x12xf32> to vector<1x12xf32>
    %908 = vector.broadcast %906 : vector<16x1xf32> to vector<16x12xf32>
    %909 = vector.broadcast %907 : vector<1x12xf32> to vector<16x12xf32>
    %910 = arith.mulf %908, %909 : vector<16x12xf32>
    %911 = vector.extract_strided_slice %896 {offsets = [0, 1], sizes = [16, 1], strides = [1, 1]} : vector<16x4xf32> to vector<16x1xf32>
    %912 = vector.extract_strided_slice %20 {offsets = [1, 0], sizes = [1, 12], strides = [1, 1]} : vector<4x12xf32> to vector<1x12xf32>
    %913 = vector.broadcast %911 : vector<16x1xf32> to vector<16x12xf32>
    %914 = vector.broadcast %912 : vector<1x12xf32> to vector<16x12xf32>
    %915 = arith.mulf %913, %914 : vector<16x12xf32>
    %916 = arith.addf %910, %915 : vector<16x12xf32>
    %917 = vector.extract_strided_slice %896 {offsets = [0, 2], sizes = [16, 1], strides = [1, 1]} : vector<16x4xf32> to vector<16x1xf32>
    %918 = vector.extract_strided_slice %20 {offsets = [2, 0], sizes = [1, 12], strides = [1, 1]} : vector<4x12xf32> to vector<1x12xf32>
    %919 = vector.broadcast %917 : vector<16x1xf32> to vector<16x12xf32>
    %920 = vector.broadcast %918 : vector<1x12xf32> to vector<16x12xf32>
    %921 = arith.mulf %919, %920 : vector<16x12xf32>
    %922 = arith.addf %916, %921 : vector<16x12xf32>
    %923 = vector.extract_strided_slice %896 {offsets = [0, 3], sizes = [16, 1], strides = [1, 1]} : vector<16x4xf32> to vector<16x1xf32>
    %924 = vector.extract_strided_slice %20 {offsets = [3, 0], sizes = [1, 12], strides = [1, 1]} : vector<4x12xf32> to vector<1x12xf32>
    %925 = vector.broadcast %923 : vector<16x1xf32> to vector<16x12xf32>
    %926 = vector.broadcast %924 : vector<1x12xf32> to vector<16x12xf32>
    %927 = arith.mulf %925, %926 : vector<16x12xf32>
    %928 = arith.addf %922, %927 : vector<16x12xf32>
    %929 = vector.extract_strided_slice %902 {offsets = [0, 0], sizes = [16, 1], strides = [1, 1]} : vector<16x4xf32> to vector<16x1xf32>
    %930 = vector.extract_strided_slice %18 {offsets = [0, 0], sizes = [1, 4], strides = [1, 1]} : vector<4x4xf32> to vector<1x4xf32>
    %931 = vector.broadcast %929 : vector<16x1xf32> to vector<16x4xf32>
    %932 = vector.broadcast %930 : vector<1x4xf32> to vector<16x4xf32>
    %933 = arith.mulf %931, %932 : vector<16x4xf32>
    %934 = vector.extract_strided_slice %902 {offsets = [0, 1], sizes = [16, 1], strides = [1, 1]} : vector<16x4xf32> to vector<16x1xf32>
    %935 = vector.extract_strided_slice %18 {offsets = [1, 0], sizes = [1, 4], strides = [1, 1]} : vector<4x4xf32> to vector<1x4xf32>
    %936 = vector.broadcast %934 : vector<16x1xf32> to vector<16x4xf32>
    %937 = vector.broadcast %935 : vector<1x4xf32> to vector<16x4xf32>
    %938 = arith.mulf %936, %937 : vector<16x4xf32>
    %939 = arith.addf %933, %938 : vector<16x4xf32>
    %940 = vector.extract_strided_slice %902 {offsets = [0, 2], sizes = [16, 1], strides = [1, 1]} : vector<16x4xf32> to vector<16x1xf32>
    %941 = vector.extract_strided_slice %18 {offsets = [2, 0], sizes = [1, 4], strides = [1, 1]} : vector<4x4xf32> to vector<1x4xf32>
    %942 = vector.broadcast %940 : vector<16x1xf32> to vector<16x4xf32>
    %943 = vector.broadcast %941 : vector<1x4xf32> to vector<16x4xf32>
    %944 = arith.mulf %942, %943 : vector<16x4xf32>
    %945 = arith.addf %939, %944 : vector<16x4xf32>
    %946 = vector.extract_strided_slice %902 {offsets = [0, 3], sizes = [16, 1], strides = [1, 1]} : vector<16x4xf32> to vector<16x1xf32>
    %947 = vector.extract_strided_slice %18 {offsets = [3, 0], sizes = [1, 4], strides = [1, 1]} : vector<4x4xf32> to vector<1x4xf32>
    %948 = vector.broadcast %946 : vector<16x1xf32> to vector<16x4xf32>
    %949 = vector.broadcast %947 : vector<1x4xf32> to vector<16x4xf32>
    %950 = arith.mulf %948, %949 : vector<16x4xf32>
    %951 = arith.addf %945, %950 : vector<16x4xf32>
    %952 = vector.extract_strided_slice %928 {offsets = [0, 0], sizes = [16, 4], strides = [1, 1]} : vector<16x12xf32> to vector<16x4xf32>
    %953 = arith.subf %951, %952 : vector<16x4xf32>
    %954 = arith.mulf %953, %9 : vector<16x4xf32>
    %955 = vector.extract_strided_slice %928 {offsets = [0, 4], sizes = [16, 4], strides = [1, 1]} : vector<16x12xf32> to vector<16x4xf32>
    %956 = arith.subf %2, %955 : vector<16x4xf32>
    %957 = vector.extract_strided_slice %905 {offsets = [0, 0], sizes = [16, 1], strides = [1, 1]} : vector<16x4xf32> to vector<16x1xf32>
    %958 = vector.extract_strided_slice %19 {offsets = [0, 0], sizes = [1, 4], strides = [1, 1]} : vector<4x4xf32> to vector<1x4xf32>
    %959 = vector.broadcast %957 : vector<16x1xf32> to vector<16x4xf32>
    %960 = vector.broadcast %958 : vector<1x4xf32> to vector<16x4xf32>
    %961 = arith.mulf %959, %960 : vector<16x4xf32>
    %962 = vector.extract_strided_slice %905 {offsets = [0, 1], sizes = [16, 1], strides = [1, 1]} : vector<16x4xf32> to vector<16x1xf32>
    %963 = vector.extract_strided_slice %19 {offsets = [1, 0], sizes = [1, 4], strides = [1, 1]} : vector<4x4xf32> to vector<1x4xf32>
    %964 = vector.broadcast %962 : vector<16x1xf32> to vector<16x4xf32>
    %965 = vector.broadcast %963 : vector<1x4xf32> to vector<16x4xf32>
    %966 = arith.mulf %964, %965 : vector<16x4xf32>
    %967 = arith.addf %961, %966 : vector<16x4xf32>
    %968 = vector.extract_strided_slice %905 {offsets = [0, 2], sizes = [16, 1], strides = [1, 1]} : vector<16x4xf32> to vector<16x1xf32>
    %969 = vector.extract_strided_slice %19 {offsets = [2, 0], sizes = [1, 4], strides = [1, 1]} : vector<4x4xf32> to vector<1x4xf32>
    %970 = vector.broadcast %968 : vector<16x1xf32> to vector<16x4xf32>
    %971 = vector.broadcast %969 : vector<1x4xf32> to vector<16x4xf32>
    %972 = arith.mulf %970, %971 : vector<16x4xf32>
    %973 = arith.addf %967, %972 : vector<16x4xf32>
    %974 = vector.extract_strided_slice %905 {offsets = [0, 3], sizes = [16, 1], strides = [1, 1]} : vector<16x4xf32> to vector<16x1xf32>
    %975 = vector.extract_strided_slice %19 {offsets = [3, 0], sizes = [1, 4], strides = [1, 1]} : vector<4x4xf32> to vector<1x4xf32>
    %976 = vector.broadcast %974 : vector<16x1xf32> to vector<16x4xf32>
    %977 = vector.broadcast %975 : vector<1x4xf32> to vector<16x4xf32>
    %978 = arith.mulf %976, %977 : vector<16x4xf32>
    %979 = arith.addf %973, %978 : vector<16x4xf32>
    %980 = vector.extract_strided_slice %928 {offsets = [0, 8], sizes = [16, 4], strides = [1, 1]} : vector<16x12xf32> to vector<16x4xf32>
    %981 = arith.subf %979, %980 : vector<16x4xf32>
    %982 = arith.mulf %981, %15 : vector<16x4xf32>
    %c0_181 = arith.constant 0 : index
    %c0_182 = arith.constant 0 : index
    %983 = vector.load %arg9[%c0_181, %c0_182] : memref<32x512xbf16, #tpu.memory_space<vmem>>, vector<32x512xbf16>
    %984 = arith.truncf %863 : vector<16x32xf32> to vector<16x32xbf16>
    %cst_183 = arith.constant dense<0.000000e+00> : vector<16x512xf32>
    %985 = tpu.matmul %984, %983, %cst_183 {dimension_numbers = #tpu.dot_dimension_numbers<[1], [0], [0], [1], [0, 0, 1, 1], [], []>} : vector<16x32xbf16>, vector<32x512xbf16>, vector<16x512xf32> -> vector<16x512xf32>
    %986 = vector.extract_strided_slice %985 {offsets = [0, 0], sizes = [16, 128], strides = [1, 1]} : vector<16x512xf32> to vector<16x128xf32>
    %987 = vector.extract_strided_slice %985 {offsets = [0, 128], sizes = [16, 128], strides = [1, 1]} : vector<16x512xf32> to vector<16x128xf32>
    %988 = vector.extract_strided_slice %987 {offsets = [0, 0], sizes = [1, 128], strides = [1, 1]} : vector<16x128xf32> to vector<1x128xf32>
    %989 = vector.extract_strided_slice %987 {offsets = [0, 0], sizes = [15, 128], strides = [1, 1]} : vector<16x128xf32> to vector<15x128xf32>
    %990 = tpu.concatenate %988, %989 in 0 : vector<1x128xf32>, vector<15x128xf32> -> vector<16x128xf32>
    %991 = vector.extract_strided_slice %985 {offsets = [0, 256], sizes = [16, 128], strides = [1, 1]} : vector<16x512xf32> to vector<16x128xf32>
    %992 = vector.extract_strided_slice %991 {offsets = [1, 0], sizes = [15, 128], strides = [1, 1]} : vector<16x128xf32> to vector<15x128xf32>
    %993 = vector.extract_strided_slice %991 {offsets = [15, 0], sizes = [1, 128], strides = [1, 1]} : vector<16x128xf32> to vector<1x128xf32>
    %994 = tpu.concatenate %992, %993 in 0 : vector<15x128xf32>, vector<1x128xf32> -> vector<16x128xf32>
    %995 = vector.extract_strided_slice %985 {offsets = [0, 384], sizes = [16, 128], strides = [1, 1]} : vector<16x512xf32> to vector<16x128xf32>
    %996 = arith.addf %995, %29 : vector<16x128xf32>
    %c0_184 = arith.constant 0 : index
    %c0_185 = arith.constant 0 : index
    %c0_186 = arith.constant 0 : index
    %997 = vector.load %arg8[%c0_184, %c0_185, %c0_186] : memref<3x4x128xf32, #tpu.memory_space<vmem>>, vector<1x4x128xf32>
    %998 = vector.shape_cast %997 : vector<1x4x128xf32> to vector<4x128xf32>
    %999 = vector.extract_strided_slice %954 {offsets = [0, 0], sizes = [16, 1], strides = [1, 1]} : vector<16x4xf32> to vector<16x1xf32>
    %1000 = vector.extract_strided_slice %998 {offsets = [0, 0], sizes = [1, 128], strides = [1, 1]} : vector<4x128xf32> to vector<1x128xf32>
    %1001 = vector.broadcast %999 : vector<16x1xf32> to vector<16x128xf32>
    %1002 = vector.broadcast %1000 : vector<1x128xf32> to vector<16x128xf32>
    %1003 = arith.mulf %1001, %1002 : vector<16x128xf32>
    %1004 = vector.extract_strided_slice %954 {offsets = [0, 1], sizes = [16, 1], strides = [1, 1]} : vector<16x4xf32> to vector<16x1xf32>
    %1005 = vector.extract_strided_slice %998 {offsets = [1, 0], sizes = [1, 128], strides = [1, 1]} : vector<4x128xf32> to vector<1x128xf32>
    %1006 = vector.broadcast %1004 : vector<16x1xf32> to vector<16x128xf32>
    %1007 = vector.broadcast %1005 : vector<1x128xf32> to vector<16x128xf32>
    %1008 = arith.mulf %1006, %1007 : vector<16x128xf32>
    %1009 = arith.addf %1003, %1008 : vector<16x128xf32>
    %1010 = vector.extract_strided_slice %954 {offsets = [0, 2], sizes = [16, 1], strides = [1, 1]} : vector<16x4xf32> to vector<16x1xf32>
    %1011 = vector.extract_strided_slice %998 {offsets = [2, 0], sizes = [1, 128], strides = [1, 1]} : vector<4x128xf32> to vector<1x128xf32>
    %1012 = vector.broadcast %1010 : vector<16x1xf32> to vector<16x128xf32>
    %1013 = vector.broadcast %1011 : vector<1x128xf32> to vector<16x128xf32>
    %1014 = arith.mulf %1012, %1013 : vector<16x128xf32>
    %1015 = arith.addf %1009, %1014 : vector<16x128xf32>
    %1016 = vector.extract_strided_slice %954 {offsets = [0, 3], sizes = [16, 1], strides = [1, 1]} : vector<16x4xf32> to vector<16x1xf32>
    %1017 = vector.extract_strided_slice %998 {offsets = [3, 0], sizes = [1, 128], strides = [1, 1]} : vector<4x128xf32> to vector<1x128xf32>
    %1018 = vector.broadcast %1016 : vector<16x1xf32> to vector<16x128xf32>
    %1019 = vector.broadcast %1017 : vector<1x128xf32> to vector<16x128xf32>
    %1020 = arith.mulf %1018, %1019 : vector<16x128xf32>
    %1021 = arith.addf %1015, %1020 : vector<16x128xf32>
    %c1_187 = arith.constant 1 : index
    %c0_188 = arith.constant 0 : index
    %c0_189 = arith.constant 0 : index
    %1022 = vector.load %arg8[%c1_187, %c0_188, %c0_189] : memref<3x4x128xf32, #tpu.memory_space<vmem>>, vector<1x4x128xf32>
    %1023 = vector.shape_cast %1022 : vector<1x4x128xf32> to vector<4x128xf32>
    %1024 = vector.extract_strided_slice %956 {offsets = [0, 0], sizes = [16, 1], strides = [1, 1]} : vector<16x4xf32> to vector<16x1xf32>
    %1025 = vector.extract_strided_slice %1023 {offsets = [0, 0], sizes = [1, 128], strides = [1, 1]} : vector<4x128xf32> to vector<1x128xf32>
    %1026 = vector.broadcast %1024 : vector<16x1xf32> to vector<16x128xf32>
    %1027 = vector.broadcast %1025 : vector<1x128xf32> to vector<16x128xf32>
    %1028 = arith.mulf %1026, %1027 : vector<16x128xf32>
    %1029 = vector.extract_strided_slice %956 {offsets = [0, 1], sizes = [16, 1], strides = [1, 1]} : vector<16x4xf32> to vector<16x1xf32>
    %1030 = vector.extract_strided_slice %1023 {offsets = [1, 0], sizes = [1, 128], strides = [1, 1]} : vector<4x128xf32> to vector<1x128xf32>
    %1031 = vector.broadcast %1029 : vector<16x1xf32> to vector<16x128xf32>
    %1032 = vector.broadcast %1030 : vector<1x128xf32> to vector<16x128xf32>
    %1033 = arith.mulf %1031, %1032 : vector<16x128xf32>
    %1034 = arith.addf %1028, %1033 : vector<16x128xf32>
    %1035 = vector.extract_strided_slice %956 {offsets = [0, 2], sizes = [16, 1], strides = [1, 1]} : vector<16x4xf32> to vector<16x1xf32>
    %1036 = vector.extract_strided_slice %1023 {offsets = [2, 0], sizes = [1, 128], strides = [1, 1]} : vector<4x128xf32> to vector<1x128xf32>
    %1037 = vector.broadcast %1035 : vector<16x1xf32> to vector<16x128xf32>
    %1038 = vector.broadcast %1036 : vector<1x128xf32> to vector<16x128xf32>
    %1039 = arith.mulf %1037, %1038 : vector<16x128xf32>
    %1040 = arith.addf %1034, %1039 : vector<16x128xf32>
    %1041 = vector.extract_strided_slice %956 {offsets = [0, 3], sizes = [16, 1], strides = [1, 1]} : vector<16x4xf32> to vector<16x1xf32>
    %1042 = vector.extract_strided_slice %1023 {offsets = [3, 0], sizes = [1, 128], strides = [1, 1]} : vector<4x128xf32> to vector<1x128xf32>
    %1043 = vector.broadcast %1041 : vector<16x1xf32> to vector<16x128xf32>
    %1044 = vector.broadcast %1042 : vector<1x128xf32> to vector<16x128xf32>
    %1045 = arith.mulf %1043, %1044 : vector<16x128xf32>
    %1046 = arith.addf %1040, %1045 : vector<16x128xf32>
    %1047 = arith.addf %1021, %1046 : vector<16x128xf32>
    %c2_190 = arith.constant 2 : index
    %c0_191 = arith.constant 0 : index
    %c0_192 = arith.constant 0 : index
    %1048 = vector.load %arg8[%c2_190, %c0_191, %c0_192] : memref<3x4x128xf32, #tpu.memory_space<vmem>>, vector<1x4x128xf32>
    %1049 = vector.shape_cast %1048 : vector<1x4x128xf32> to vector<4x128xf32>
    %1050 = vector.extract_strided_slice %982 {offsets = [0, 0], sizes = [16, 1], strides = [1, 1]} : vector<16x4xf32> to vector<16x1xf32>
    %1051 = vector.extract_strided_slice %1049 {offsets = [0, 0], sizes = [1, 128], strides = [1, 1]} : vector<4x128xf32> to vector<1x128xf32>
    %1052 = vector.broadcast %1050 : vector<16x1xf32> to vector<16x128xf32>
    %1053 = vector.broadcast %1051 : vector<1x128xf32> to vector<16x128xf32>
    %1054 = arith.mulf %1052, %1053 : vector<16x128xf32>
    %1055 = vector.extract_strided_slice %982 {offsets = [0, 1], sizes = [16, 1], strides = [1, 1]} : vector<16x4xf32> to vector<16x1xf32>
    %1056 = vector.extract_strided_slice %1049 {offsets = [1, 0], sizes = [1, 128], strides = [1, 1]} : vector<4x128xf32> to vector<1x128xf32>
    %1057 = vector.broadcast %1055 : vector<16x1xf32> to vector<16x128xf32>
    %1058 = vector.broadcast %1056 : vector<1x128xf32> to vector<16x128xf32>
    %1059 = arith.mulf %1057, %1058 : vector<16x128xf32>
    %1060 = arith.addf %1054, %1059 : vector<16x128xf32>
    %1061 = vector.extract_strided_slice %982 {offsets = [0, 2], sizes = [16, 1], strides = [1, 1]} : vector<16x4xf32> to vector<16x1xf32>
    %1062 = vector.extract_strided_slice %1049 {offsets = [2, 0], sizes = [1, 128], strides = [1, 1]} : vector<4x128xf32> to vector<1x128xf32>
    %1063 = vector.broadcast %1061 : vector<16x1xf32> to vector<16x128xf32>
    %1064 = vector.broadcast %1062 : vector<1x128xf32> to vector<16x128xf32>
    %1065 = arith.mulf %1063, %1064 : vector<16x128xf32>
    %1066 = arith.addf %1060, %1065 : vector<16x128xf32>
    %1067 = vector.extract_strided_slice %982 {offsets = [0, 3], sizes = [16, 1], strides = [1, 1]} : vector<16x4xf32> to vector<16x1xf32>
    %1068 = vector.extract_strided_slice %1049 {offsets = [3, 0], sizes = [1, 128], strides = [1, 1]} : vector<4x128xf32> to vector<1x128xf32>
    %1069 = vector.broadcast %1067 : vector<16x1xf32> to vector<16x128xf32>
    %1070 = vector.broadcast %1068 : vector<1x128xf32> to vector<16x128xf32>
    %1071 = arith.mulf %1069, %1070 : vector<16x128xf32>
    %1072 = arith.addf %1066, %1071 : vector<16x128xf32>
    %1073 = arith.addf %1047, %1072 : vector<16x128xf32>
    %1074 = arith.addf %986, %990 : vector<16x128xf32>
    %1075 = arith.addf %1074, %994 : vector<16x128xf32>
    %1076 = arith.addf %1075, %16 : vector<16x128xf32>
    %1077 = arith.addf %1076, %1073 : vector<16x128xf32>
    %cst_193 = arith.constant 0.000000e+00 : f32
    %1078 = vector.broadcast %cst_193 : f32 to vector<16x128xf32>
    %1079 = arith.cmpf ogt, %1077, %1078 : vector<16x128xf32>
    %cst_194 = arith.constant 0.00999999977 : f32
    %1080 = vector.broadcast %cst_194 : f32 to vector<16x128xf32>
    %1081 = arith.mulf %1080, %1077 : vector<16x128xf32>
    %1082 = arith.select %1079, %1077, %1081 : vector<16x128xi1>, vector<16x128xf32>
    %c0_195 = arith.constant 0 : index
    %c0_196 = arith.constant 0 : index
    %1083 = vector.load %arg10[%c0_195, %c0_196] : memref<128x128xbf16, #tpu.memory_space<vmem>>, vector<128x128xbf16>
    %1084 = arith.truncf %1082 : vector<16x128xf32> to vector<16x128xbf16>
    %cst_197 = arith.constant dense<0.000000e+00> : vector<16x128xf32>
    %1085 = tpu.matmul %1084, %1083, %cst_197 {dimension_numbers = #tpu.dot_dimension_numbers<[1], [0], [0], [1], [0, 0, 1, 1], [], []>} : vector<16x128xbf16>, vector<128x128xbf16>, vector<16x128xf32> -> vector<16x128xf32>
    %1086 = arith.addf %1085, %23 : vector<16x128xf32>
    %cst_198 = arith.constant 0.000000e+00 : f32
    %1087 = vector.broadcast %cst_198 : f32 to vector<16x128xf32>
    %1088 = arith.cmpf ogt, %1086, %1087 : vector<16x128xf32>
    %cst_199 = arith.constant 0.00999999977 : f32
    %1089 = vector.broadcast %cst_199 : f32 to vector<16x128xf32>
    %1090 = arith.mulf %1089, %1086 : vector<16x128xf32>
    %1091 = arith.select %1088, %1086, %1090 : vector<16x128xi1>, vector<16x128xf32>
    %1092 = arith.mulf %1091, %17 : vector<16x128xf32>
    %c0_200 = arith.constant 0 : index
    %c0_201 = arith.constant 0 : index
    %1093 = vector.load %arg12[%c0_200, %c0_201] : memref<128x32xbf16, #tpu.memory_space<vmem>>, vector<128x32xbf16>
    %1094 = arith.truncf %1092 : vector<16x128xf32> to vector<16x128xbf16>
    %cst_202 = arith.constant dense<0.000000e+00> : vector<16x32xf32>
    %1095 = tpu.matmul %1094, %1093, %cst_202 {dimension_numbers = #tpu.dot_dimension_numbers<[1], [0], [0], [1], [0, 0, 1, 1], [], []>} : vector<16x128xbf16>, vector<128x32xbf16>, vector<16x32xf32> -> vector<16x32xf32>
    %cst_203 = arith.constant dense<0.000000e+00> : vector<32xf32>
    %1096 = vector.multi_reduction <add>, %1095, %cst_203 [0] : vector<16x32xf32> to vector<32xf32>
    %1097 = vector.shape_cast %1096 : vector<32xf32> to vector<1x32xf32>
    %cst_204 = arith.constant 1.600000e+01 : f32
    %1098 = vector.broadcast %cst_204 : f32 to vector<1x32xf32>
    %1099 = arith.divf %1097, %1098 : vector<1x32xf32>
    %1100 = vector.broadcast %1099 : vector<1x32xf32> to vector<16x32xf32>
    %1101 = arith.subf %1095, %1100 : vector<16x32xf32>
    %1102 = arith.mulf %1101, %1101 : vector<16x32xf32>
    %cst_205 = arith.constant dense<0.000000e+00> : vector<32xf32>
    %1103 = vector.multi_reduction <add>, %1102, %cst_205 [0] : vector<16x32xf32> to vector<32xf32>
    %1104 = vector.shape_cast %1103 : vector<32xf32> to vector<1x32xf32>
    %cst_206 = arith.constant 1.600000e+01 : f32
    %1105 = vector.broadcast %cst_206 : f32 to vector<1x32xf32>
    %1106 = arith.divf %1104, %1105 : vector<1x32xf32>
    %1107 = arith.mulf %32, %1101 : vector<16x32xf32>
    %cst_207 = arith.constant 9.99999974E-6 : f32
    %1108 = vector.broadcast %cst_207 : f32 to vector<1x32xf32>
    %1109 = arith.addf %1106, %1108 : vector<1x32xf32>
    %1110 = math.rsqrt %1109 : vector<1x32xf32>
    %1111 = vector.broadcast %1110 : vector<1x32xf32> to vector<16x32xf32>
    %1112 = arith.mulf %1107, %1111 : vector<16x32xf32>
    %1113 = arith.addf %1112, %35 : vector<16x32xf32>
    %cst_208 = arith.constant 0.000000e+00 : f32
    %1114 = vector.broadcast %cst_208 : f32 to vector<16x32xf32>
    %1115 = arith.cmpf ogt, %1113, %1114 : vector<16x32xf32>
    %cst_209 = arith.constant 0.00999999977 : f32
    %1116 = vector.broadcast %cst_209 : f32 to vector<16x32xf32>
    %1117 = arith.mulf %1116, %1113 : vector<16x32xf32>
    %1118 = arith.select %1115, %1113, %1117 : vector<16x32xi1>, vector<16x32xf32>
    %c0_210 = arith.constant 0 : index
    %c0_211 = arith.constant 0 : index
    %1119 = vector.load %arg15[%c0_210, %c0_211] : memref<32x128xbf16, #tpu.memory_space<vmem>>, vector<32x128xbf16>
    %1120 = arith.truncf %1118 : vector<16x32xf32> to vector<16x32xbf16>
    %cst_212 = arith.constant dense<0.000000e+00> : vector<16x128xf32>
    %1121 = tpu.matmul %1120, %1119, %cst_212 {dimension_numbers = #tpu.dot_dimension_numbers<[1], [0], [0], [1], [0, 0, 1, 1], [], []>} : vector<16x32xbf16>, vector<32x128xbf16>, vector<16x128xf32> -> vector<16x128xf32>
    %1122 = arith.addf %1121, %26 : vector<16x128xf32>
    %1123 = vector.extract_strided_slice %1122 {offsets = [0, 0], sizes = [16, 32], strides = [1, 1]} : vector<16x128xf32> to vector<16x32xf32>
    %1124 = vector.extract_strided_slice %996 {offsets = [0, 0], sizes = [16, 32], strides = [1, 1]} : vector<16x128xf32> to vector<16x32xf32>
    %1125 = arith.addf %1123, %1124 : vector<16x32xf32>
    %1126 = arith.negf %1125 : vector<16x32xf32>
    %1127 = math.exp %1126 : vector<16x32xf32>
    %cst_213 = arith.constant 1.000000e+00 : f32
    %1128 = vector.broadcast %cst_213 : f32 to vector<16x32xf32>
    %1129 = arith.addf %1128, %1127 : vector<16x32xf32>
    %1130 = arith.divf %1128, %1129 : vector<16x32xf32>
    %1131 = vector.extract_strided_slice %1122 {offsets = [0, 32], sizes = [16, 32], strides = [1, 1]} : vector<16x128xf32> to vector<16x32xf32>
    %1132 = vector.extract_strided_slice %996 {offsets = [0, 32], sizes = [16, 32], strides = [1, 1]} : vector<16x128xf32> to vector<16x32xf32>
    %1133 = arith.addf %1131, %1132 : vector<16x32xf32>
    %1134 = arith.negf %1133 : vector<16x32xf32>
    %1135 = math.exp %1134 : vector<16x32xf32>
    %cst_214 = arith.constant 1.000000e+00 : f32
    %1136 = vector.broadcast %cst_214 : f32 to vector<16x32xf32>
    %1137 = arith.addf %1136, %1135 : vector<16x32xf32>
    %1138 = arith.divf %1136, %1137 : vector<16x32xf32>
    %1139 = vector.extract_strided_slice %1122 {offsets = [0, 64], sizes = [16, 32], strides = [1, 1]} : vector<16x128xf32> to vector<16x32xf32>
    %1140 = vector.extract_strided_slice %996 {offsets = [0, 64], sizes = [16, 32], strides = [1, 1]} : vector<16x128xf32> to vector<16x32xf32>
    %1141 = arith.mulf %1130, %1140 : vector<16x32xf32>
    %1142 = arith.addf %1139, %1141 : vector<16x32xf32>
    %1143 = math.tanh %1142 : vector<16x32xf32>
    %cst_215 = arith.constant 1.000000e+00 : f32
    %1144 = vector.broadcast %cst_215 : f32 to vector<16x32xf32>
    %1145 = arith.subf %1144, %1138 : vector<16x32xf32>
    %1146 = arith.mulf %1145, %1143 : vector<16x32xf32>
    %1147 = arith.mulf %1138, %863 : vector<16x32xf32>
    %1148 = arith.addf %1146, %1147 : vector<16x32xf32>
    %c0_216 = arith.constant 0 : index
    %c0_217 = arith.constant 0 : index
    %1149 = vector.load %arg18[%c0_216, %c0_217] : memref<32x32xbf16, #tpu.memory_space<vmem>>, vector<32x32xbf16>
    %1150 = arith.truncf %1148 : vector<16x32xf32> to vector<16x32xbf16>
    %cst_218 = arith.constant dense<0.000000e+00> : vector<16x32xf32>
    %1151 = tpu.matmul %1150, %1149, %cst_218 {dimension_numbers = #tpu.dot_dimension_numbers<[1], [0], [0], [1], [0, 0, 1, 1], [], []>} : vector<16x32xbf16>, vector<32x32xbf16>, vector<16x32xf32> -> vector<16x32xf32>
    %cst_219 = arith.constant dense<0.000000e+00> : vector<32xf32>
    %1152 = vector.multi_reduction <add>, %1151, %cst_219 [0] : vector<16x32xf32> to vector<32xf32>
    %1153 = vector.shape_cast %1152 : vector<32xf32> to vector<1x32xf32>
    %cst_220 = arith.constant 1.600000e+01 : f32
    %1154 = vector.broadcast %cst_220 : f32 to vector<1x32xf32>
    %1155 = arith.divf %1153, %1154 : vector<1x32xf32>
    %1156 = vector.broadcast %1155 : vector<1x32xf32> to vector<16x32xf32>
    %1157 = arith.subf %1151, %1156 : vector<16x32xf32>
    %1158 = arith.mulf %1157, %1157 : vector<16x32xf32>
    %cst_221 = arith.constant dense<0.000000e+00> : vector<32xf32>
    %1159 = vector.multi_reduction <add>, %1158, %cst_221 [0] : vector<16x32xf32> to vector<32xf32>
    %1160 = vector.shape_cast %1159 : vector<32xf32> to vector<1x32xf32>
    %cst_222 = arith.constant 1.600000e+01 : f32
    %1161 = vector.broadcast %cst_222 : f32 to vector<1x32xf32>
    %1162 = arith.divf %1160, %1161 : vector<1x32xf32>
    %1163 = arith.mulf %38, %1157 : vector<16x32xf32>
    %cst_223 = arith.constant 9.99999974E-6 : f32
    %1164 = vector.broadcast %cst_223 : f32 to vector<1x32xf32>
    %1165 = arith.addf %1162, %1164 : vector<1x32xf32>
    %1166 = math.rsqrt %1165 : vector<1x32xf32>
    %1167 = vector.broadcast %1166 : vector<1x32xf32> to vector<16x32xf32>
    %1168 = arith.mulf %1163, %1167 : vector<16x32xf32>
    %1169 = arith.addf %1168, %41 : vector<16x32xf32>
    %cst_224 = arith.constant 0.000000e+00 : f32
    %1170 = vector.broadcast %cst_224 : f32 to vector<16x32xf32>
    %1171 = arith.maximumf %1169, %1170 : vector<16x32xf32>
    %c0_225 = arith.constant 0 : index
    %c0_226 = arith.constant 0 : index
    %1172 = vector.load %arg21[%c0_225, %c0_226] : memref<32x4xbf16, #tpu.memory_space<vmem>>, vector<32x4xbf16>
    %1173 = arith.truncf %1171 : vector<16x32xf32> to vector<16x32xbf16>
    %cst_227 = arith.constant dense<0.000000e+00> : vector<16x4xf32>
    %1174 = tpu.matmul %1173, %1172, %cst_227 {dimension_numbers = #tpu.dot_dimension_numbers<[1], [0], [0], [1], [0, 0, 1, 1], [], []>} : vector<16x32xbf16>, vector<32x4xbf16>, vector<16x4xf32> -> vector<16x4xf32>
    %1175 = arith.addf %1174, %44 : vector<16x4xf32>
    %1176 = arith.addf %1175, %954 : vector<16x4xf32>
    %1177 = arith.addf %1176, %956 : vector<16x4xf32>
    %1178 = arith.addf %1177, %982 : vector<16x4xf32>
    %cst_228 = arith.constant 5.000000e-03 : f32
    %1179 = vector.broadcast %cst_228 : f32 to vector<16x4xf32>
    %1180 = arith.mulf %1179, %1178 : vector<16x4xf32>
    %1181 = arith.addf %896, %1180 : vector<16x4xf32>
    %c3 = arith.constant 3 : index
    %c0_229 = arith.constant 0 : index
    %c0_230 = arith.constant 0 : index
    %1182 = vector.load %arg23[%c3, %c0_229, %c0_230] : memref<4x16x4xf32, #tpu.memory_space<vmem>>, vector<1x16x4xf32>
    %1183 = vector.shape_cast %1182 : vector<1x16x4xf32> to vector<16x4xf32>
    %1184 = vector.shape_cast %1181 : vector<16x4xf32> to vector<1x16x4xf32>
    tpu.vector_store %arg23[%c3, %c0_229, %c0_230], %1184 {strides = array<i32>} : memref<4x16x4xf32, #tpu.memory_space<vmem>>, vector<1x16x4xf32>,
    return
  }
}

</mosaic_0001>

<llo_original>
// kernel: gnn_kalman_forward.1
$region0: #{gnn_kalman_forward.1}
  #allocation0 [shape = 'u32[]', space=smem, size = 0x4, offset = 0x4, fixed_abs, tag = 'smem constant byte address 0x4 - core index']
  #allocation1 [shape = 'u32[72,128]{1,0:T(1,128)}', space=vmem, size = 0x9000, scoped, tag = 'internal scratch']
  %s0 = inlined_call_operand.vmem [shape: f32[16,4], index: 0, kind: input, shape index: {}]
  %s1 = inlined_call_operand.vmem [shape: f32[16,32], index: 1, kind: input, shape index: {}]
  %s2 = inlined_call_operand.vmem [shape: f32[16,4], index: 2, kind: input, shape index: {}]
  %s3 = inlined_call_operand.vmem [shape: f32[16,128], index: 3, kind: input, shape index: {}]
  %s4 = inlined_call_operand.vmem [shape: f32[16,128], index: 4, kind: input, shape index: {}]
  %s5 = inlined_call_operand.vmem [shape: f32[4,4], index: 5, kind: input, shape index: {}]
  %s6 = inlined_call_operand.vmem [shape: f32[4,4], index: 6, kind: input, shape index: {}]
  %s7 = inlined_call_operand.vmem [shape: f32[4,12], index: 7, kind: input, shape index: {}]
  %s8 = inlined_call_operand.vmem [shape: f32[3,4,128], index: 8, kind: input, shape index: {}]
  %s9 = inlined_call_operand.vmem [shape: bf16[32,512], index: 9, kind: input, shape index: {}]
  %s10 = inlined_call_operand.vmem [shape: bf16[128,128], index: 10, kind: input, shape index: {}]
  %s11 = inlined_call_operand.vmem [shape: f32[1,128], index: 11, kind: input, shape index: {}]
  %s12 = inlined_call_operand.vmem [shape: bf16[128,32], index: 12, kind: input, shape index: {}]
  %s13 = inlined_call_operand.vmem [shape: f32[1,32], index: 13, kind: input, shape index: {}]
  %s14 = inlined_call_operand.vmem [shape: f32[1,32], index: 14, kind: input, shape index: {}]
  %s15 = inlined_call_operand.vmem [shape: bf16[32,128], index: 15, kind: input, shape index: {}]
  %s16 = inlined_call_operand.vmem [shape: f32[1,128], index: 16, kind: input, shape index: {}]
  %s17 = inlined_call_operand.vmem [shape: f32[1,128], index: 17, kind: input, shape index: {}]
  %s18 = inlined_call_operand.vmem [shape: bf16[32,32], index: 18, kind: input, shape index: {}]
  %s19 = inlined_call_operand.vmem [shape: f32[1,32], index: 19, kind: input, shape index: {}]
  %s20 = inlined_call_operand.vmem [shape: f32[1,32], index: 20, kind: input, shape index: {}]
  %s21 = inlined_call_operand.vmem [shape: bf16[32,4], index: 21, kind: input, shape index: {}]
  %s22 = inlined_call_operand.vmem [shape: f32[1,4], index: 22, kind: input, shape index: {}]
  %s23 = inlined_call_operand.vmem [shape: f32[4,16,4], index: 23, kind: output, shape index: {}]
  %s24 = sld [smem:[#allocation0]]
  $region102: #{gnn_kalman_forward.1} parent=0
    _
  %s26 = ssub.s32 1, %s24
  %s27 = scalar_select 0, %s26, %s24
  // Predicated region
  $region2: #{gnn_kalman_forward.1} parent=0 // pred_check
    _
  $region3: #{gnn_kalman_forward.1} parent=0 // pred_check_branch
    %29 = sbr.rel (0) target = $region5
  $region4: #{gnn_kalman_forward.1} parent=0 // pred_region
    _
  $region5: #{gnn_kalman_forward.1} parent=0 // pred_fallthru
    _
  // Predicated region
  $region6: #{gnn_kalman_forward.1} parent=0 // pred_check
    _
  $region7: #{gnn_kalman_forward.1} parent=0 // pred_check_branch
    %31 = sbr.rel (0) target = $region9
  $region8: #{gnn_kalman_forward.1} parent=0 // pred_region
    _
  $region9: #{gnn_kalman_forward.1} parent=0 // pred_fallthru
    _
  // Predicated region
  $region10: #{gnn_kalman_forward.1} parent=0 // pred_check
    _
  $region11: #{gnn_kalman_forward.1} parent=0 // pred_check_branch
    %33 = sbr.rel (0) target = $region13
  $region12: #{gnn_kalman_forward.1} parent=0 // pred_region
    _
  $region13: #{gnn_kalman_forward.1} parent=0 // pred_fallthru
    _
  // Predicated region
  $region14: #{gnn_kalman_forward.1} parent=0 // pred_check
    _
  $region15: #{gnn_kalman_forward.1} parent=0 // pred_check_branch
    %35 = sbr.rel (0) target = $region17
  $region16: #{gnn_kalman_forward.1} parent=0 // pred_region
    _
  $region17: #{gnn_kalman_forward.1} parent=0 // pred_fallthru
    _
  // Predicated region
  $region18: #{gnn_kalman_forward.1} parent=0 // pred_check
    _
  $region19: #{gnn_kalman_forward.1} parent=0 // pred_check_branch
    %37 = sbr.rel (0) target = $region21
  $region20: #{gnn_kalman_forward.1} parent=0 // pred_region
    _
  $region21: #{gnn_kalman_forward.1} parent=0 // pred_fallthru
    _
  // Predicated region
  $region22: #{gnn_kalman_forward.1} parent=0 // pred_check
    _
  $region23: #{gnn_kalman_forward.1} parent=0 // pred_check_branch
    %39 = sbr.rel (0) target = $region25
  $region24: #{gnn_kalman_forward.1} parent=0 // pred_region
    _
  $region25: #{gnn_kalman_forward.1} parent=0 // pred_fallthru
    _
  // Predicated region
  $region26: #{gnn_kalman_forward.1} parent=0 // pred_check
    _
  $region27: #{gnn_kalman_forward.1} parent=0 // pred_check_branch
    %41 = sbr.rel (0) target = $region29
  $region28: #{gnn_kalman_forward.1} parent=0 // pred_region
    _
  $region29: #{gnn_kalman_forward.1} parent=0 // pred_fallthru
    _
  // Predicated region
  $region30: #{gnn_kalman_forward.1} parent=0 // pred_check
    _
  $region31: #{gnn_kalman_forward.1} parent=0 // pred_check_branch
    %43 = sbr.rel (0) target = $region33
  $region32: #{gnn_kalman_forward.1} parent=0 // pred_region
    _
  $region33: #{gnn_kalman_forward.1} parent=0 // pred_fallthru
    _
  // Predicated region
  $region34: #{gnn_kalman_forward.1} parent=0 // pred_check
    _
  $region35: #{gnn_kalman_forward.1} parent=0 // pred_check_branch
    %45 = sbr.rel (0) target = $region37
  $region36: #{gnn_kalman_forward.1} parent=0 // pred_region
    _
  $region37: #{gnn_kalman_forward.1} parent=0 // pred_fallthru
    _
  // Predicated region
  $region38: #{gnn_kalman_forward.1} parent=0 // pred_check
    _
  $region39: #{gnn_kalman_forward.1} parent=0 // pred_check_branch
    %47 = sbr.rel (0) target = $region41
  $region40: #{gnn_kalman_forward.1} parent=0 // pred_region
    _
  $region41: #{gnn_kalman_forward.1} parent=0 // pred_fallthru
    _
  // Predicated region
  $region42: #{gnn_kalman_forward.1} parent=0 // pred_check
    _
  $region43: #{gnn_kalman_forward.1} parent=0 // pred_check_branch
    %49 = sbr.rel (0) target = $region45
  $region44: #{gnn_kalman_forward.1} parent=0 // pred_region
    _
  $region45: #{gnn_kalman_forward.1} parent=0 // pred_fallthru
    _
  // Predicated region
  $region46: #{gnn_kalman_forward.1} parent=0 // pred_check
    _
  $region47: #{gnn_kalman_forward.1} parent=0 // pred_check_branch
    %51 = sbr.rel (0) target = $region49
  $region48: #{gnn_kalman_forward.1} parent=0 // pred_region
    _
  $region49: #{gnn_kalman_forward.1} parent=0 // pred_fallthru
    _
  // Predicated region
  $region50: #{gnn_kalman_forward.1} parent=0 // pred_check
    _
  $region51: #{gnn_kalman_forward.1} parent=0 // pred_check_branch
    %53 = sbr.rel (0) target = $region53
  $region52: #{gnn_kalman_forward.1} parent=0 // pred_region
    _
  $region53: #{gnn_kalman_forward.1} parent=0 // pred_fallthru
    _
  // Predicated region
  $region54: #{gnn_kalman_forward.1} parent=0 // pred_check
    _
  $region55: #{gnn_kalman_forward.1} parent=0 // pred_check_branch
    %55 = sbr.rel (0) target = $region57
  $region56: #{gnn_kalman_forward.1} parent=0 // pred_region
    _
  $region57: #{gnn_kalman_forward.1} parent=0 // pred_fallthru
    _
  // Predicated region
  $region58: #{gnn_kalman_forward.1} parent=0 // pred_check
    _
  $region59: #{gnn_kalman_forward.1} parent=0 // pred_check_branch
    %57 = sbr.rel (0) target = $region61
  $region60: #{gnn_kalman_forward.1} parent=0 // pred_region
    _
  $region61: #{gnn_kalman_forward.1} parent=0 // pred_fallthru
    _
  // Predicated region
  $region62: #{gnn_kalman_forward.1} parent=0 // pred_check
    _
  $region63: #{gnn_kalman_forward.1} parent=0 // pred_check_branch
    %59 = sbr.rel (0) target = $region65
  $region64: #{gnn_kalman_forward.1} parent=0 // pred_region
    _
  $region65: #{gnn_kalman_forward.1} parent=0 // pred_fallthru
    _
  // Predicated region
  $region66: #{gnn_kalman_forward.1} parent=0 // pred_check
    _
  $region67: #{gnn_kalman_forward.1} parent=0 // pred_check_branch
    %61 = sbr.rel (0) target = $region69
  $region68: #{gnn_kalman_forward.1} parent=0 // pred_region
    _
  $region69: #{gnn_kalman_forward.1} parent=0 // pred_fallthru
    _
  // Predicated region
  $region70: #{gnn_kalman_forward.1} parent=0 // pred_check
    _
  $region71: #{gnn_kalman_forward.1} parent=0 // pred_check_branch
    %63 = sbr.rel (0) target = $region73
  $region72: #{gnn_kalman_forward.1} parent=0 // pred_region
    _
  $region73: #{gnn_kalman_forward.1} parent=0 // pred_fallthru
    _
  // Predicated region
  $region74: #{gnn_kalman_forward.1} parent=0 // pred_check
    _
  $region75: #{gnn_kalman_forward.1} parent=0 // pred_check_branch
    %65 = sbr.rel (0) target = $region77
  $region76: #{gnn_kalman_forward.1} parent=0 // pred_region
    _
  $region77: #{gnn_kalman_forward.1} parent=0 // pred_fallthru
    _
  // Predicated region
  $region78: #{gnn_kalman_forward.1} parent=0 // pred_check
    _
  $region79: #{gnn_kalman_forward.1} parent=0 // pred_check_branch
    %67 = sbr.rel (0) target = $region81
  $region80: #{gnn_kalman_forward.1} parent=0 // pred_region
    _
  $region81: #{gnn_kalman_forward.1} parent=0 // pred_fallthru
    _
  // Predicated region
  $region82: #{gnn_kalman_forward.1} parent=0 // pred_check
    _
  $region83: #{gnn_kalman_forward.1} parent=0 // pred_check_branch
    %69 = sbr.rel (0) target = $region85
  $region84: #{gnn_kalman_forward.1} parent=0 // pred_region
    _
  $region85: #{gnn_kalman_forward.1} parent=0 // pred_fallthru
    _
  // Predicated region
  $region86: #{gnn_kalman_forward.1} parent=0 // pred_check
    _
  $region87: #{gnn_kalman_forward.1} parent=0 // pred_check_branch
    %71 = sbr.rel (0) target = $region89
  $region88: #{gnn_kalman_forward.1} parent=0 // pred_region
    _
  $region89: #{gnn_kalman_forward.1} parent=0 // pred_fallthru
    _
  // Predicated region
  $region90: #{gnn_kalman_forward.1} parent=0 // pred_check
    _
  $region91: #{gnn_kalman_forward.1} parent=0 // pred_check_branch
    %73 = sbr.rel (0) target = $region93
  $region92: #{gnn_kalman_forward.1} parent=0 // pred_region
    _
  $region93: #{gnn_kalman_forward.1} parent=0 // pred_fallthru
    _
  %v75 = vld [vmem:[%s0] sm:$0xff]
  %v76 = vld [vmem:[%s0 + $0x8] sm:$0xff]
  %v77 = vld [vmem:[%s1] sm:$0xff]
  %v78 = vld [vmem:[%s1 + $0x8] sm:$0xff]
  %v79 = vld [vmem:[%s2] sm:$0xff]
  %v80 = vld [vmem:[%s2 + $0x8] sm:$0xff]
  %v81 = vlaneseq
  %v82 = vshrl.u32 %v81, 7
  %v83 = vadd.s32 %v82, 8
  %vm84 = vcmp.gt.s32.totalorder %v82, 0
  %vm85 = vcmp.gt.s32.totalorder %v83, 0
  %v86 = vsel %vm84, 1, 0
  %v87 = vsel %vm85, 1, 0
  %v88 = vcvt.s32.f32 %v86
  %v89 = vcvt.s32.f32 %v87
  %vm90 = vcmp.lt.s32.totalorder %v82, 15
  %vm91 = vcmp.lt.s32.totalorder %v83, 15
  %v92 = vsel %vm90, 1, 0
  %v93 = vsel %vm91, 1, 0
  %v94 = vcvt.s32.f32 %v92
  %v95 = vcvt.s32.f32 %v93
  %v96 = vld [vmem:[%s3] sm:$0xff]
  %v97 = vld [vmem:[%s3 + $0x8] sm:$0xff]
  %v98 = vld [vmem:[%s4] sm:$0xff]
  %v99 = vld [vmem:[%s4 + $0x8] sm:$0xff]
  %v100 = vld [vmem:[%s5] sm:$0xf]
  %v101 = vld [vmem:[%s6] sm:$0xf]
  %v102 = vld [vmem:[%s7] sm:$0xf]
  %v103 = vld [vmem:[%s11] sm:$0x1]
  %v105 = vperm.slane %v103, 0
  %v107 = vld [vmem:[%s16] sm:$0x1]
  %v109 = vperm.slane %v107, 0
  %v111 = vld [vmem:[%s17] sm:$0x1]
  %v113 = vperm.slane %v111, 0
  %v115 = vld [vmem:[%s13] sm:$0x1]
  %v117 = vperm.slane %v115, 0
  %v119 = vld [vmem:[%s14] sm:$0x1]
  %v121 = vperm.slane %v119, 0
  %v123 = vld [vmem:[%s19] sm:$0x1]
  %v125 = vperm.slane %v123, 0
  %v127 = vld [vmem:[%s20] sm:$0x1]
  %v129 = vperm.slane %v127, 0
  %v131 = vld [vmem:[%s22] sm:$0x1]
  %v133 = vperm.slane %v131, 0
  %vm137 = vcmask 1040384
  %v138 = vrot.slane %v75, 7
  %v139 = vrot.slane %v76, 7
  %v140 = vsel %vm137, %v138, %v139
  %v142 = vsel %vm137, %v75, %v138
  %vm143 = vcmask 1046528
  %v144 = vrot.slane %v75, 1
  %v145 = vrot.slane %v76, 1
  %v146 = vsel %vm143, %v144, %v145
  %v148 = vsel %vm143, %v145, %v76
  %149 = vset.pattern.permute.xlu0 0
  %150 = vperm.xlu0 %149, %v75
  %v151 = vpop.permute.xlu0 %150
  %153 = vset.pattern.permute.xlu0 0
  %154 = vperm.xlu0 %153, %v76
  %v155 = vpop.permute.xlu0 %154
  %v157 = vperm.slane %v102, 0
  %v158 = vmul.f32 %v151, %v157
  %v159 = vmul.f32 %v155, %v157
  %160 = vset.pattern.permute.xlu0 1
  %161 = vperm.xlu0 %160, %v75
  %v162 = vpop.permute.xlu0 %161
  %164 = vset.pattern.permute.xlu0 1
  %165 = vperm.xlu0 %164, %v76
  %v166 = vpop.permute.xlu0 %165
  %v168 = vperm.slane %v102, 1
  %v169 = vmul.f32 %v162, %v168
  %v170 = vmul.f32 %v166, %v168
  %v171 = vadd.f32 %v158, %v169
  %v172 = vadd.f32 %v159, %v170
  %173 = vset.pattern.permute.xlu0 2
  %174 = vperm.xlu0 %173, %v75
  %v175 = vpop.permute.xlu0 %174
  %177 = vset.pattern.permute.xlu0 2
  %178 = vperm.xlu0 %177, %v76
  %v179 = vpop.permute.xlu0 %178
  %v181 = vperm.slane %v102, 2
  %v182 = vmul.f32 %v175, %v181
  %v183 = vmul.f32 %v179, %v181
  %v184 = vadd.f32 %v171, %v182
  %v185 = vadd.f32 %v172, %v183
  %186 = vset.pattern.permute.xlu0 3
  %187 = vperm.xlu0 %186, %v75
  %v188 = vpop.permute.xlu0 %187
  %190 = vset.pattern.permute.xlu0 3
  %191 = vperm.xlu0 %190, %v76
  %v192 = vpop.permute.xlu0 %191
  %v194 = vperm.slane %v102, 3
  %v195 = vmul.f32 %v188, %v194
  %v196 = vmul.f32 %v192, %v194
  %v197 = vadd.f32 %v184, %v195
  %v198 = vadd.f32 %v185, %v196
  %200 = vset.pattern.permute.xlu0 0
  %201 = vperm.xlu0 %200, %v142
  %v202 = vpop.permute.xlu0 %201
  %204 = vset.pattern.permute.xlu0 0
  %205 = vperm.xlu0 %204, %v140
  %v206 = vpop.permute.xlu0 %205
  %v208 = vperm.slane %v100, 0
  %v209 = vmul.f32 %v202, %v208
  %v210 = vmul.f32 %v206, %v208
  %211 = vset.pattern.permute.xlu0 1
  %212 = vperm.xlu0 %211, %v142
  %v213 = vpop.permute.xlu0 %212
  %215 = vset.pattern.permute.xlu0 1
  %216 = vperm.xlu0 %215, %v140
  %v217 = vpop.permute.xlu0 %216
  %v219 = vperm.slane %v100, 1
  %v220 = vmul.f32 %v213, %v219
  %v221 = vmul.f32 %v217, %v219
  %v222 = vadd.f32 %v209, %v220
  %v223 = vadd.f32 %v210, %v221
  %224 = vset.pattern.permute.xlu0 2
  %225 = vperm.xlu0 %224, %v142
  %v226 = vpop.permute.xlu0 %225
  %228 = vset.pattern.permute.xlu0 2
  %229 = vperm.xlu0 %228, %v140
  %v230 = vpop.permute.xlu0 %229
  %v232 = vperm.slane %v100, 2
  %v233 = vmul.f32 %v226, %v232
  %v234 = vmul.f32 %v230, %v232
  %v235 = vadd.f32 %v222, %v233
  %v236 = vadd.f32 %v223, %v234
  %237 = vset.pattern.permute.xlu0 3
  %238 = vperm.xlu0 %237, %v142
  %v239 = vpop.permute.xlu0 %238
  %241 = vset.pattern.permute.xlu0 3
  %242 = vperm.xlu0 %241, %v140
  %v243 = vpop.permute.xlu0 %242
  %v245 = vperm.slane %v100, 3
  %v246 = vmul.f32 %v239, %v245
  %v247 = vmul.f32 %v243, %v245
  %v248 = vadd.f32 %v235, %v246
  %v249 = vadd.f32 %v236, %v247
  %v250 = vsub.f32 %v248, %v197
  %v251 = vsub.f32 %v249, %v198
  %v252 = vmul.f32 %v250, %v88
  %v253 = vmul.f32 %v251, %v89
  %256 = vrot.lane.b32.xlu0 %v197, 124
  %v257 = vpop.permute.xlu0 %256
  %258 = vrot.lane.b32.xlu0 %v198, 124
  %v259 = vpop.permute.xlu0 %258
  %v262 = vsub.f32 %v79, %v257
  %v263 = vsub.f32 %v80, %v259
  %264 = vset.pattern.permute.xlu0 0
  %265 = vperm.xlu0 %264, %v146
  %v266 = vpop.permute.xlu0 %265
  %269 = vset.pattern.permute.xlu0 0
  %270 = vperm.xlu0 %269, %v148
  %v271 = vpop.permute.xlu0 %270
  %v273 = vperm.slane %v101, 0
  %v274 = vmul.f32 %v266, %v273
  %v275 = vmul.f32 %v271, %v273
  %276 = vset.pattern.permute.xlu0 1
  %277 = vperm.xlu0 %276, %v146
  %v278 = vpop.permute.xlu0 %277
  %280 = vset.pattern.permute.xlu0 1
  %281 = vperm.xlu0 %280, %v148
  %v282 = vpop.permute.xlu0 %281
  %v284 = vperm.slane %v101, 1
  %v285 = vmul.f32 %v278, %v284
  %v286 = vmul.f32 %v282, %v284
  %v287 = vadd.f32 %v274, %v285
  %v288 = vadd.f32 %v275, %v286
  %289 = vset.pattern.permute.xlu0 2
  %290 = vperm.xlu0 %289, %v146
  %v291 = vpop.permute.xlu0 %290
  %293 = vset.pattern.permute.xlu0 2
  %294 = vperm.xlu0 %293, %v148
  %v295 = vpop.permute.xlu0 %294
  %v297 = vperm.slane %v101, 2
  %v298 = vmul.f32 %v291, %v297
  %v299 = vmul.f32 %v295, %v297
  %v300 = vadd.f32 %v287, %v298
  %v301 = vadd.f32 %v288, %v299
  %302 = vset.pattern.permute.xlu0 3
  %303 = vperm.xlu0 %302, %v146
  %v304 = vpop.permute.xlu0 %303
  %306 = vset.pattern.permute.xlu0 3
  %307 = vperm.xlu0 %306, %v148
  %v308 = vpop.permute.xlu0 %307
  %v310 = vperm.slane %v101, 3
  %v311 = vmul.f32 %v304, %v310
  %v312 = vmul.f32 %v308, %v310
  %v313 = vadd.f32 %v300, %v311
  %v314 = vadd.f32 %v301, %v312
  %315 = vrot.lane.b32.xlu0 %v197, 120
  %v316 = vpop.permute.xlu0 %315
  %317 = vrot.lane.b32.xlu0 %v198, 120
  %v318 = vpop.permute.xlu0 %317
  %v321 = vsub.f32 %v313, %v316
  %v322 = vsub.f32 %v314, %v318
  %v323 = vmul.f32 %v321, %v94
  %v324 = vmul.f32 %v322, %v95
  %v325 = vld [vmem:[%s9] sm:$0xff]
  %v326 = vld [vmem:[%s9 + $0x8] sm:$0xff]
  %v327 = vld [vmem:[%s9 + $0x10] sm:$0xff]
  %v328 = vld [vmem:[%s9 + $0x18] sm:$0xff]
  %v329 = vld [vmem:[%s9 + $0x20] sm:$0xff]
  %v330 = vld [vmem:[%s9 + $0x28] sm:$0xff]
  %v331 = vld [vmem:[%s9 + $0x30] sm:$0xff]
  %v332 = vld [vmem:[%s9 + $0x38] sm:$0xff]
  %v333 = vpack.c.bf16 %v78, %v77
  %v342 = vunpack.c.l.b16 %v325
  %v343 = vunpack.c.h.b16 %v325
  %v344 = vunpack.c.l.b16 %v326
  %v345 = vunpack.c.h.b16 %v326
  %v346 = vunpack.c.l.b16 %v327
  %v347 = vunpack.c.h.b16 %v327
  %v348 = vunpack.c.l.b16 %v328
  %v349 = vunpack.c.h.b16 %v328
  %v350 = vunpack.c.l.b16 %v329
  %v351 = vunpack.c.h.b16 %v329
  %v352 = vunpack.c.l.b16 %v330
  %v353 = vunpack.c.h.b16 %v330
  %v354 = vunpack.c.l.b16 %v331
  %v355 = vunpack.c.h.b16 %v331
  %v356 = vunpack.c.l.b16 %v332
  %v357 = vunpack.c.h.b16 %v332
  %v358 = vpack.c.b16 %v346, %v342
  %v359 = vpack.c.b16 %v347, %v343
  %v360 = vpack.c.b16 %v348, %v344
  %v361 = vpack.c.b16 %v349, %v345
  %v362 = vpack.c.b16 %v354, %v350
  %v363 = vpack.c.b16 %v355, %v351
  %v364 = vpack.c.b16 %v356, %v352
  %v365 = vpack.c.b16 %v357, %v353
  %vm374 = vcmask 261120
  %v376 = vsel %vm374, %v333, 0
  %378 = vmatpush.bf16.msra.mxu0 0
  %379 = vmatpush.bf16.msra.mxu0 0
  %380 = vmatpush.bf16.msra.mxu0 0
  %381 = vmatpush.bf16.msra.mxu0 0
  %382 = vmatpush.bf16.msra.mxu0 0
  %383 = vmatpush.bf16.msra.mxu0 0
  %384 = vmatpush.bf16.msra.mxu0 %v362
  %385 = vmatpush.bf16.msra.mxu0 %v358
  %386 = vmatmul.bf16.gmra.mxu0 %v376
  %v387 = vpop.f32.mrf.mxu0
  %v388 = vadd.f32 0.0, %v387
  %v389 = vpop.f32.mrf.mxu0
  %v390 = vadd.f32 0.0, %v389
  %391 = vdwg.mxu0
  %392 = vmatpush.bf16.msra.mxu0 0
  %393 = vmatpush.bf16.msra.mxu0 0
  %394 = vmatpush.bf16.msra.mxu0 0
  %395 = vmatpush.bf16.msra.mxu0 0
  %396 = vmatpush.bf16.msra.mxu0 0
  %397 = vmatpush.bf16.msra.mxu0 0
  %398 = vmatpush.bf16.msra.mxu0 %v363
  %399 = vmatpush.bf16.msra.mxu0 %v359
  %400 = vmatmul.bf16.gmra.mxu0 %v376
  %v401 = vpop.f32.mrf.mxu0
  %v402 = vadd.f32 0.0, %v401
  %v403 = vpop.f32.mrf.mxu0
  %v404 = vadd.f32 0.0, %v403
  %405 = vdwg.mxu0
  %406 = vmatpush.bf16.msra.mxu0 0
  %407 = vmatpush.bf16.msra.mxu0 0
  %408 = vmatpush.bf16.msra.mxu0 0
  %409 = vmatpush.bf16.msra.mxu0 0
  %410 = vmatpush.bf16.msra.mxu0 0
  %411 = vmatpush.bf16.msra.mxu0 0
  %412 = vmatpush.bf16.msra.mxu0 %v364
  %413 = vmatpush.bf16.msra.mxu0 %v360
  %414 = vmatmul.bf16.gmra.mxu0 %v376
  %v415 = vpop.f32.mrf.mxu0
  %v416 = vadd.f32 0.0, %v415
  %v417 = vpop.f32.mrf.mxu0
  %v418 = vadd.f32 0.0, %v417
  %419 = vdwg.mxu0
  %420 = vmatpush.bf16.msra.mxu0 0
  %421 = vmatpush.bf16.msra.mxu0 0
  %422 = vmatpush.bf16.msra.mxu0 0
  %423 = vmatpush.bf16.msra.mxu0 0
  %424 = vmatpush.bf16.msra.mxu0 0
  %425 = vmatpush.bf16.msra.mxu0 0
  %426 = vmatpush.bf16.msra.mxu0 %v365
  %427 = vmatpush.bf16.msra.mxu0 %v361
  %428 = vmatmul.bf16.gmra.mxu0 %v376
  %v429 = vpop.f32.mrf.mxu0
  %v430 = vadd.f32 0.0, %v429
  %v431 = vpop.f32.mrf.mxu0
  %v432 = vadd.f32 0.0, %v431
  %433 = vdwg.mxu0
  %v436 = vrot.slane %v402, 7
  %v437 = vrot.slane %v404, 7
  %v438 = vsel %vm137, %v436, %v437
  %v441 = vsel %vm137, %v402, %v436
  %v444 = vrot.slane %v416, 1
  %v445 = vrot.slane %v418, 1
  %v446 = vsel %vm143, %v444, %v445
  %v449 = vsel %vm143, %v445, %v418
  %v450 = vadd.f32 %v430, %v113
  %v451 = vadd.f32 %v432, %v113
  %v452 = vld [vmem:[%s8] sm:$0xf]
  %454 = vset.pattern.permute.xlu0 0
  %455 = vperm.xlu0 %454, %v252
  %v456 = vpop.permute.xlu0 %455
  %459 = vset.pattern.permute.xlu0 0
  %460 = vperm.xlu0 %459, %v253
  %v461 = vpop.permute.xlu0 %460
  %v463 = vperm.slane %v452, 0
  %v464 = vmul.f32 %v456, %v463
  %v465 = vmul.f32 %v461, %v463
  %466 = vset.pattern.permute.xlu0 1
  %467 = vperm.xlu0 %466, %v252
  %v468 = vpop.permute.xlu0 %467
  %470 = vset.pattern.permute.xlu0 1
  %471 = vperm.xlu0 %470, %v253
  %v472 = vpop.permute.xlu0 %471
  %v474 = vperm.slane %v452, 1
  %v475 = vmul.f32 %v468, %v474
  %v476 = vmul.f32 %v472, %v474
  %v477 = vadd.f32 %v464, %v475
  %v478 = vadd.f32 %v465, %v476
  %479 = vset.pattern.permute.xlu0 2
  %480 = vperm.xlu0 %479, %v252
  %v481 = vpop.permute.xlu0 %480
  %483 = vset.pattern.permute.xlu0 2
  %484 = vperm.xlu0 %483, %v253
  %v485 = vpop.permute.xlu0 %484
  %v487 = vperm.slane %v452, 2
  %v488 = vmul.f32 %v481, %v487
  %v489 = vmul.f32 %v485, %v487
  %v490 = vadd.f32 %v477, %v488
  %v491 = vadd.f32 %v478, %v489
  %492 = vset.pattern.permute.xlu0 3
  %493 = vperm.xlu0 %492, %v252
  %v494 = vpop.permute.xlu0 %493
  %496 = vset.pattern.permute.xlu0 3
  %497 = vperm.xlu0 %496, %v253
  %v498 = vpop.permute.xlu0 %497
  %v500 = vperm.slane %v452, 3
  %v501 = vmul.f32 %v494, %v500
  %v502 = vmul.f32 %v498, %v500
  %v503 = vadd.f32 %v490, %v501
  %v504 = vadd.f32 %v491, %v502
  %s505 = scalar_lea.vmem %s8, 4
  %v506 = vld [vmem:[%s505] sm:$0xf]
  %508 = vset.pattern.permute.xlu0 0
  %509 = vperm.xlu0 %508, %v262
  %v510 = vpop.permute.xlu0 %509
  %513 = vset.pattern.permute.xlu0 0
  %514 = vperm.xlu0 %513, %v263
  %v515 = vpop.permute.xlu0 %514
  %v517 = vperm.slane %v506, 0
  %v518 = vmul.f32 %v510, %v517
  %v519 = vmul.f32 %v515, %v517
  %520 = vset.pattern.permute.xlu0 1
  %521 = vperm.xlu0 %520, %v262
  %v522 = vpop.permute.xlu0 %521
  %524 = vset.pattern.permute.xlu0 1
  %525 = vperm.xlu0 %524, %v263
  %v526 = vpop.permute.xlu0 %525
  %v528 = vperm.slane %v506, 1
  %v529 = vmul.f32 %v522, %v528
  %v530 = vmul.f32 %v526, %v528
  %v531 = vadd.f32 %v518, %v529
  %v532 = vadd.f32 %v519, %v530
  %533 = vset.pattern.permute.xlu0 2
  %534 = vperm.xlu0 %533, %v262
  %v535 = vpop.permute.xlu0 %534
  %537 = vset.pattern.permute.xlu0 2
  %538 = vperm.xlu0 %537, %v263
  %v539 = vpop.permute.xlu0 %538
  %v541 = vperm.slane %v506, 2
  %v542 = vmul.f32 %v535, %v541
  %v543 = vmul.f32 %v539, %v541
  %v544 = vadd.f32 %v531, %v542
  %v545 = vadd.f32 %v532, %v543
  %546 = vset.pattern.permute.xlu0 3
  %547 = vperm.xlu0 %546, %v262
  %v548 = vpop.permute.xlu0 %547
  %550 = vset.pattern.permute.xlu0 3
  %551 = vperm.xlu0 %550, %v263
  %v552 = vpop.permute.xlu0 %551
  %v554 = vperm.slane %v506, 3
  %v555 = vmul.f32 %v548, %v554
  %v556 = vmul.f32 %v552, %v554
  %v557 = vadd.f32 %v544, %v555
  %v558 = vadd.f32 %v545, %v556
  %v559 = vadd.f32 %v503, %v557
  %v560 = vadd.f32 %v504, %v558
  %s561 = scalar_lea.vmem %s8, 8
  %v562 = vld [vmem:[%s561] sm:$0xf]
  %564 = vset.pattern.permute.xlu0 0
  %565 = vperm.xlu0 %564, %v323
  %v566 = vpop.permute.xlu0 %565
  %569 = vset.pattern.permute.xlu0 0
  %570 = vperm.xlu0 %569, %v324
  %v571 = vpop.permute.xlu0 %570
  %v573 = vperm.slane %v562, 0
  %v574 = vmul.f32 %v566, %v573
  %v575 = vmul.f32 %v571, %v573
  %576 = vset.pattern.permute.xlu0 1
  %577 = vperm.xlu0 %576, %v323
  %v578 = vpop.permute.xlu0 %577
  %580 = vset.pattern.permute.xlu0 1
  %581 = vperm.xlu0 %580, %v324
  %v582 = vpop.permute.xlu0 %581
  %v584 = vperm.slane %v562, 1
  %v585 = vmul.f32 %v578, %v584
  %v586 = vmul.f32 %v582, %v584
  %v587 = vadd.f32 %v574, %v585
  %v588 = vadd.f32 %v575, %v586
  %589 = vset.pattern.permute.xlu0 2
  %590 = vperm.xlu0 %589, %v323
  %v591 = vpop.permute.xlu0 %590
  %593 = vset.pattern.permute.xlu0 2
  %594 = vperm.xlu0 %593, %v324
  %v595 = vpop.permute.xlu0 %594
  %v597 = vperm.slane %v562, 2
  %v598 = vmul.f32 %v591, %v597
  %v599 = vmul.f32 %v595, %v597
  %v600 = vadd.f32 %v587, %v598
  %v601 = vadd.f32 %v588, %v599
  %602 = vset.pattern.permute.xlu0 3
  %603 = vperm.xlu0 %602, %v323
  %v604 = vpop.permute.xlu0 %603
  %606 = vset.pattern.permute.xlu0 3
  %607 = vperm.xlu0 %606, %v324
  %v608 = vpop.permute.xlu0 %607
  %v610 = vperm.slane %v562, 3
  %v611 = vmul.f32 %v604, %v610
  %v612 = vmul.f32 %v608, %v610
  %v613 = vadd.f32 %v600, %v611
  %v614 = vadd.f32 %v601, %v612
  %v615 = vadd.f32 %v559, %v613
  %v616 = vadd.f32 %v560, %v614
  %v617 = vadd.f32 %v388, %v441
  %v618 = vadd.f32 %v390, %v438
  %v619 = vadd.f32 %v617, %v446
  %v620 = vadd.f32 %v618, %v449
  %v621 = vadd.f32 %v619, %v96
  %v622 = vadd.f32 %v620, %v97
  %v623 = vadd.f32 %v621, %v615
  %v624 = vadd.f32 %v622, %v616
  %vm625 = vcmp.gt.f32.partialorder %v623, 0.0
  %vm626 = vcmp.gt.f32.partialorder %v624, 0.0
  %v627 = vmul.f32 %v623, 0.01
  %v628 = vmul.f32 %v624, 0.01
  %v629 = vsel %vm625, %v623, %v627
  %v630 = vsel %vm626, %v624, %v628
  %v631 = vld [vmem:[%s10] sm:$0xf]
  %v632 = vld [vmem:[%s10 + $0x4] sm:$0xf]
  %v633 = vld [vmem:[%s10 + $0x8] sm:$0xf]
  %v634 = vld [vmem:[%s10 + $0xc] sm:$0xf]
  %v635 = vld [vmem:[%s10 + $0x10] sm:$0xf]
  %v636 = vld [vmem:[%s10 + $0x14] sm:$0xf]
  %v637 = vld [vmem:[%s10 + $0x18] sm:$0xf]
  %v638 = vld [vmem:[%s10 + $0x1c] sm:$0xf]
  %v639 = vld [vmem:[%s10 + $0x20] sm:$0xf]
  %v640 = vld [vmem:[%s10 + $0x24] sm:$0xf]
  %v641 = vld [vmem:[%s10 + $0x28] sm:$0xf]
  %v642 = vld [vmem:[%s10 + $0x2c] sm:$0xf]
  %v643 = vld [vmem:[%s10 + $0x30] sm:$0xf]
  %v644 = vld [vmem:[%s10 + $0x34] sm:$0xf]
  %v645 = vld [vmem:[%s10 + $0x38] sm:$0xf]
  %v646 = vld [vmem:[%s10 + $0x3c] sm:$0xf]
  %v647 = vpack.c.bf16 %v630, %v629
  %v664 = vunpack.c.l.b16 %v631
  %v665 = vunpack.c.l.b16 %v632
  %v666 = vunpack.c.l.b16 %v633
  %v667 = vunpack.c.l.b16 %v634
  %v668 = vunpack.c.l.b16 %v635
  %v669 = vunpack.c.l.b16 %v636
  %v670 = vunpack.c.l.b16 %v637
  %v671 = vunpack.c.l.b16 %v638
  %v672 = vunpack.c.l.b16 %v639
  %v673 = vunpack.c.l.b16 %v640
  %v674 = vunpack.c.l.b16 %v641
  %v675 = vunpack.c.l.b16 %v642
  %v676 = vunpack.c.l.b16 %v643
  %v677 = vunpack.c.l.b16 %v644
  %v678 = vunpack.c.l.b16 %v645
  %v679 = vunpack.c.l.b16 %v646
  %v680 = vpack.c.b16 %v665, %v664
  %v681 = vpack.c.b16 %v667, %v666
  %v682 = vpack.c.b16 %v669, %v668
  %v683 = vpack.c.b16 %v671, %v670
  %v684 = vpack.c.b16 %v673, %v672
  %v685 = vpack.c.b16 %v675, %v674
  %v686 = vpack.c.b16 %v677, %v676
  %v687 = vpack.c.b16 %v679, %v678
  %696 = vmatpush.bf16.msra.mxu0 %v687
  %697 = vmatpush.bf16.msra.mxu0 %v686
  %698 = vmatpush.bf16.msra.mxu0 %v685
  %699 = vmatpush.bf16.msra.mxu0 %v684
  %700 = vmatpush.bf16.msra.mxu0 %v683
  %701 = vmatpush.bf16.msra.mxu0 %v682
  %702 = vmatpush.bf16.msra.mxu0 %v681
  %703 = vmatpush.bf16.msra.mxu0 %v680
  %704 = vmatmul.bf16.gmra.mxu0 %v647
  %v705 = vpop.f32.mrf.mxu0
  %v706 = vadd.f32 %v105, %v705
  %v707 = vpop.f32.mrf.mxu0
  %v708 = vadd.f32 %v105, %v707
  %709 = vdwg.mxu0
  %vm710 = vcmp.gt.f32.partialorder %v706, 0.0
  %vm711 = vcmp.gt.f32.partialorder %v708, 0.0
  %v712 = vmul.f32 %v706, 0.01
  %v713 = vmul.f32 %v708, 0.01
  %v714 = vsel %vm710, %v706, %v712
  %v715 = vsel %vm711, %v708, %v713
  %v716 = vmul.f32 %v714, %v98
  %v717 = vmul.f32 %v715, %v99
  %v718 = vld [vmem:[%s12] sm:$0xf]
  %v719 = vld [vmem:[%s12 + $0x4] sm:$0xf]
  %v720 = vld [vmem:[%s12 + $0x8] sm:$0xf]
  %v721 = vld [vmem:[%s12 + $0xc] sm:$0xf]
  %v722 = vld [vmem:[%s12 + $0x10] sm:$0xf]
  %v723 = vld [vmem:[%s12 + $0x14] sm:$0xf]
  %v724 = vld [vmem:[%s12 + $0x18] sm:$0xf]
  %v725 = vld [vmem:[%s12 + $0x1c] sm:$0xf]
  %v726 = vld [vmem:[%s12 + $0x20] sm:$0xf]
  %v727 = vld [vmem:[%s12 + $0x24] sm:$0xf]
  %v728 = vld [vmem:[%s12 + $0x28] sm:$0xf]
  %v729 = vld [vmem:[%s12 + $0x2c] sm:$0xf]
  %v730 = vld [vmem:[%s12 + $0x30] sm:$0xf]
  %v731 = vld [vmem:[%s12 + $0x34] sm:$0xf]
  %v732 = vld [vmem:[%s12 + $0x38] sm:$0xf]
  %v733 = vld [vmem:[%s12 + $0x3c] sm:$0xf]
  %v734 = vpack.c.bf16 %v717, %v716
  %v751 = vunpack.c.l.b16 %v718
  %v752 = vunpack.c.l.b16 %v719
  %v753 = vunpack.c.l.b16 %v720
  %v754 = vunpack.c.l.b16 %v721
  %v755 = vunpack.c.l.b16 %v722
  %v756 = vunpack.c.l.b16 %v723
  %v757 = vunpack.c.l.b16 %v724
  %v758 = vunpack.c.l.b16 %v725
  %v759 = vunpack.c.l.b16 %v726
  %v760 = vunpack.c.l.b16 %v727
  %v761 = vunpack.c.l.b16 %v728
  %v762 = vunpack.c.l.b16 %v729
  %v763 = vunpack.c.l.b16 %v730
  %v764 = vunpack.c.l.b16 %v731
  %v765 = vunpack.c.l.b16 %v732
  %v766 = vunpack.c.l.b16 %v733
  %v767 = vpack.c.b16 %v752, %v751
  %v768 = vpack.c.b16 %v754, %v753
  %v769 = vpack.c.b16 %v756, %v755
  %v770 = vpack.c.b16 %v758, %v757
  %v771 = vpack.c.b16 %v760, %v759
  %v772 = vpack.c.b16 %v762, %v761
  %v773 = vpack.c.b16 %v764, %v763
  %v774 = vpack.c.b16 %v766, %v765
  %783 = vmatpush.bf16.msra.mxu0 %v774
  %784 = vmatpush.bf16.msra.mxu0 %v773
  %785 = vmatpush.bf16.msra.mxu0 %v772
  %786 = vmatpush.bf16.msra.mxu0 %v771
  %787 = vmatpush.bf16.msra.mxu0 %v770
  %788 = vmatpush.bf16.msra.mxu0 %v769
  %789 = vmatpush.bf16.msra.mxu0 %v768
  %790 = vmatpush.bf16.msra.mxu0 %v767
  %791 = vmatmul.bf16.gmra.mxu0 %v734
  %v792 = vpop.f32.mrf.mxu0
  %v793 = vadd.f32 0.0, %v792
  %v794 = vpop.f32.mrf.mxu0
  %v795 = vadd.f32 0.0, %v794
  %796 = vdwg.mxu0
  %v797 = vsel %vm374, %v793, 0.0
  %v798 = vsel %vm374, %v795, 0.0
  %v799 = vadd.f32 %v797, %v798
  %v800 = vrot.slane %v799, 4
  %v801 = vadd.f32 %v799, %v800
  %v802 = vrot.slane %v801, 2
  %v803 = vadd.f32 %v801, %v802
  %v804 = vrot.slane %v803, 1
  %v805 = vadd.f32 %v803, %v804
  %v806 = vrcp.pop 16.0
  %v807 = vmul.f32 16.0, %v806
  %v808 = vsub.f32 1.0, %v807
  %v809 = vmul.f32 %v806, %v808
  %v810 = vadd.f32 %v806, %v809
  %vm811 = vweird.f32 %v806
  %v812 = vsel %vm811, %v806, %v810
  %v813 = vmul.f32 %v805, %v812
  %v814 = vsub.f32 %v793, %v813
  %v815 = vsub.f32 %v795, %v813
  %v816 = vmul.f32 %v814, %v814
  %v817 = vmul.f32 %v815, %v815
  %v818 = vsel %vm374, %v816, 0.0
  %v819 = vsel %vm374, %v817, 0.0
  %v820 = vadd.f32 %v818, %v819
  %v821 = vrot.slane %v820, 4
  %v822 = vadd.f32 %v820, %v821
  %v823 = vrot.slane %v822, 2
  %v824 = vadd.f32 %v822, %v823
  %v825 = vrot.slane %v824, 1
  %v826 = vadd.f32 %v824, %v825
  %v827 = vmul.f32 %v826, %v812
  %v828 = vmul.f32 %v117, %v814
  %v829 = vmul.f32 %v117, %v815
  %v830 = vadd.f32 %v827, 1e-05
  %v831 = vrsqrt.pop %v830
  %v832 = vmul.f32 %v831, %v830
  %v833 = vmul.f32 %v832, %v831
  %v834 = vmul.f32 0.5, %v833
  %v835 = vsub.f32 1.5, %v834
  %v836 = vmul.f32 %v831, %v835
  %vm837 = vweird.f32 %v830
  %vm838 = vweird.f32 %v831
  %vm839 = vmor %vm837, %vm838
  %v840 = vsel %vm839, %v831, %v836
  %v841 = vmul.f32 %v828, %v840
  %v842 = vmul.f32 %v829, %v840
  %v843 = vadd.f32 %v841, %v121
  %v844 = vadd.f32 %v842, %v121
  %vm845 = vcmp.gt.f32.partialorder %v843, 0.0
  %vm846 = vcmp.gt.f32.partialorder %v844, 0.0
  %v847 = vmul.f32 %v843, 0.01
  %v848 = vmul.f32 %v844, 0.01
  %v849 = vsel %vm845, %v843, %v847
  %v850 = vsel %vm846, %v844, %v848
  %v851 = vld [vmem:[%s15] sm:$0xf]
  %v852 = vld [vmem:[%s15 + $0x4] sm:$0xf]
  %v853 = vld [vmem:[%s15 + $0x8] sm:$0xf]
  %v854 = vld [vmem:[%s15 + $0xc] sm:$0xf]
  %v855 = vpack.c.bf16 %v850, %v849
  %v860 = vunpack.c.l.b16 %v851
  %v861 = vunpack.c.l.b16 %v852
  %v862 = vunpack.c.l.b16 %v853
  %v863 = vunpack.c.l.b16 %v854
  %v864 = vpack.c.b16 %v861, %v860
  %v865 = vpack.c.b16 %v863, %v862
  %v869 = vsel %vm374, %v855, 0
  %871 = vmatpush.bf16.msra.mxu0 0
  %872 = vmatpush.bf16.msra.mxu0 0
  %873 = vmatpush.bf16.msra.mxu0 0
  %874 = vmatpush.bf16.msra.mxu0 0
  %875 = vmatpush.bf16.msra.mxu0 0
  %876 = vmatpush.bf16.msra.mxu0 0
  %877 = vmatpush.bf16.msra.mxu0 %v865
  %878 = vmatpush.bf16.msra.mxu0 %v864
  %879 = vmatmul.bf16.gmra.mxu0 %v869
  %v880 = vpop.f32.mrf.mxu0
  %v881 = vadd.f32 %v109, %v880
  %v882 = vpop.f32.mrf.mxu0
  %v883 = vadd.f32 %v109, %v882
  %884 = vdwg.mxu0
  %v885 = vadd.f32 %v881, %v450
  %v886 = vadd.f32 %v883, %v451
  %v887 = vxor.u32 %v885, 2147483648
  %v888 = vxor.u32 %v886, 2147483648
  %v889 = vmul.f32 %v887, 1.442695
  %v890 = vpow.pop %v889
  %v891 = vmul.f32 %v888, 1.442695
  %v892 = vpow.pop %v891
  %v893 = vadd.f32 %v890, 1.0
  %v894 = vadd.f32 %v892, 1.0
  %v895 = vrcp.pop %v893
  %v896 = vmul.f32 %v893, %v895
  %v897 = vsub.f32 1.0, %v896
  %v898 = vmul.f32 %v895, %v897
  %v899 = vadd.f32 %v895, %v898
  %vm900 = vweird.f32 %v893
  %vm901 = vweird.f32 %v895
  %vm902 = vmor %vm900, %vm901
  %v903 = vsel %vm902, %v895, %v899
  %v904 = vand.u32 2147483647, %v893
  %vm905 = vcmp.eq.f32.partialorder %v904, 8.507059e+37
  %v906 = vand.u32 %v893, 2147483648
  %v907 = vor.u32 1.1754944e-38, %v906
  %v908 = vsel %vm905, %v907, %v903
  %v909 = vmul.f32 1.0, %v908
  %v910 = vrcp.pop %v894
  %v911 = vmul.f32 %v894, %v910
  %v912 = vsub.f32 1.0, %v911
  %v913 = vmul.f32 %v910, %v912
  %v914 = vadd.f32 %v910, %v913
  %vm915 = vweird.f32 %v894
  %vm916 = vweird.f32 %v910
  %vm917 = vmor %vm915, %vm916
  %v918 = vsel %vm917, %v910, %v914
  %v919 = vand.u32 2147483647, %v894
  %vm920 = vcmp.eq.f32.partialorder %v919, 8.507059e+37
  %v921 = vand.u32 %v894, 2147483648
  %v922 = vor.u32 1.1754944e-38, %v921
  %v923 = vsel %vm920, %v922, %v918
  %v924 = vmul.f32 1.0, %v923
  %927 = vrot.lane.b32.xlu0 %v450, 64
  %v928 = vpop.permute.xlu0 %927
  %929 = vrot.lane.b32.xlu0 %v451, 64
  %v930 = vpop.permute.xlu0 %929
  %v933 = vmul.f32 %v909, %v928
  %v934 = vmul.f32 %v924, %v930
  %937 = vrot.lane.b32.xlu0 %v933, 64
  %v938 = vpop.permute.xlu0 %937
  %939 = vrot.lane.b32.xlu0 %v934, 64
  %v940 = vpop.permute.xlu0 %939
  %v943 = vadd.f32 %v881, %v938
  %v944 = vadd.f32 %v883, %v940
  %v945 = vtanh.pop %v943
  %v946 = vtanh.pop %v944
  %v947 = vsub.f32 1.0, %v909
  %v948 = vsub.f32 1.0, %v924
  %951 = vrot.lane.b32.xlu0 %v945, 96
  %v952 = vpop.permute.xlu0 %951
  %953 = vrot.lane.b32.xlu0 %v946, 96
  %v954 = vpop.permute.xlu0 %953
  %v957 = vmul.f32 %v947, %v952
  %v958 = vmul.f32 %v948, %v954
  %961 = vrot.lane.b32.xlu0 %v77, 32
  %v962 = vpop.permute.xlu0 %961
  %963 = vrot.lane.b32.xlu0 %v78, 32
  %v964 = vpop.permute.xlu0 %963
  %v967 = vmul.f32 %v909, %v962
  %v968 = vmul.f32 %v924, %v964
  %v969 = vadd.f32 %v957, %v967
  %v970 = vadd.f32 %v958, %v968
  %v971 = vld [vmem:[%s18] sm:$0xf]
  %v972 = vld [vmem:[%s18 + $0x4] sm:$0xf]
  %v973 = vld [vmem:[%s18 + $0x8] sm:$0xf]
  %v974 = vld [vmem:[%s18 + $0xc] sm:$0xf]
  %v975 = vpack.c.bf16 %v970, %v969
  %977 = vrot.lane.b32.xlu0 %v975, 96
  %v978 = vpop.permute.xlu0 %977
  %v983 = vunpack.c.l.b16 %v971
  %v984 = vunpack.c.l.b16 %v972
  %v985 = vunpack.c.l.b16 %v973
  %v986 = vunpack.c.l.b16 %v974
  %v987 = vpack.c.b16 %v984, %v983
  %v988 = vpack.c.b16 %v986, %v985
  %v992 = vsel %vm374, %v978, 0
  %994 = vmatpush.bf16.msra.mxu0 0
  %995 = vmatpush.bf16.msra.mxu0 0
  %996 = vmatpush.bf16.msra.mxu0 0
  %997 = vmatpush.bf16.msra.mxu0 0
  %998 = vmatpush.bf16.msra.mxu0 0
  %999 = vmatpush.bf16.msra.mxu0 0
  %1000 = vmatpush.bf16.msra.mxu0 %v988
  %1001 = vmatpush.bf16.msra.mxu0 %v987
  %1002 = vmatmul.bf16.gmra.mxu0 %v992
  %v1003 = vpop.f32.mrf.mxu0
  %v1004 = vadd.f32 0.0, %v1003
  %v1005 = vpop.f32.mrf.mxu0
  %v1006 = vadd.f32 0.0, %v1005
  %1007 = vdwg.mxu0
  %v1008 = vsel %vm374, %v1004, 0.0
  %v1009 = vsel %vm374, %v1006, 0.0
  %v1010 = vadd.f32 %v1008, %v1009
  %v1011 = vrot.slane %v1010, 4
  %v1012 = vadd.f32 %v1010, %v1011
  %v1013 = vrot.slane %v1012, 2
  %v1014 = vadd.f32 %v1012, %v1013
  %v1015 = vrot.slane %v1014, 1
  %v1016 = vadd.f32 %v1014, %v1015
  %v1017 = vmul.f32 %v1016, %v812
  %v1018 = vsub.f32 %v1004, %v1017
  %v1019 = vsub.f32 %v1006, %v1017
  %v1020 = vmul.f32 %v1018, %v1018
  %v1021 = vmul.f32 %v1019, %v1019
  %v1022 = vsel %vm374, %v1020, 0.0
  %v1023 = vsel %vm374, %v1021, 0.0
  %v1024 = vadd.f32 %v1022, %v1023
  %v1025 = vrot.slane %v1024, 4
  %v1026 = vadd.f32 %v1024, %v1025
  %v1027 = vrot.slane %v1026, 2
  %v1028 = vadd.f32 %v1026, %v1027
  %v1029 = vrot.slane %v1028, 1
  %v1030 = vadd.f32 %v1028, %v1029
  %v1031 = vmul.f32 %v1030, %v812
  %v1032 = vmul.f32 %v125, %v1018
  %v1033 = vmul.f32 %v125, %v1019
  %v1034 = vadd.f32 %v1031, 1e-05
  %v1035 = vrsqrt.pop %v1034
  %v1036 = vmul.f32 %v1035, %v1034
  %v1037 = vmul.f32 %v1036, %v1035
  %v1038 = vmul.f32 0.5, %v1037
  %v1039 = vsub.f32 1.5, %v1038
  %v1040 = vmul.f32 %v1035, %v1039
  %vm1041 = vweird.f32 %v1034
  %vm1042 = vweird.f32 %v1035
  %vm1043 = vmor %vm1041, %vm1042
  %v1044 = vsel %vm1043, %v1035, %v1040
  %v1045 = vmul.f32 %v1032, %v1044
  %v1046 = vmul.f32 %v1033, %v1044
  %v1047 = vadd.f32 %v1045, %v129
  %v1048 = vadd.f32 %v1046, %v129
  %v1049 = vmax.f32 %v1047, 0.0
  %v1050 = vmax.f32 %v1048, 0.0
  %v1051 = vld [vmem:[%s21] sm:$0xf]
  %v1052 = vld [vmem:[%s21 + $0x4] sm:$0xf]
  %v1053 = vld [vmem:[%s21 + $0x8] sm:$0xf]
  %v1054 = vld [vmem:[%s21 + $0xc] sm:$0xf]
  %v1055 = vpack.c.bf16 %v1050, %v1049
  %v1060 = vunpack.c.l.b16 %v1051
  %v1061 = vunpack.c.l.b16 %v1052
  %v1062 = vunpack.c.l.b16 %v1053
  %v1063 = vunpack.c.l.b16 %v1054
  %v1064 = vpack.c.b16 %v1061, %v1060
  %v1065 = vpack.c.b16 %v1063, %v1062
  %v1069 = vsel %vm374, %v1055, 0
  %1071 = vmatpush.bf16.msra.mxu0 0
  %1072 = vmatpush.bf16.msra.mxu0 0
  %1073 = vmatpush.bf16.msra.mxu0 0
  %1074 = vmatpush.bf16.msra.mxu0 0
  %1075 = vmatpush.bf16.msra.mxu0 0
  %1076 = vmatpush.bf16.msra.mxu0 0
  %1077 = vmatpush.bf16.msra.mxu0 %v1065
  %1078 = vmatpush.bf16.msra.mxu0 %v1064
  %1079 = vmatmul.bf16.gmra.mxu0 %v1069
  %v1080 = vpop.f32.mrf.mxu0
  %v1081 = vadd.f32 %v133, %v1080
  %v1082 = vpop.f32.mrf.mxu0
  %v1083 = vadd.f32 %v133, %v1082
  %1084 = vdwg.mxu0
  %v1085 = vadd.f32 %v1081, %v252
  %v1086 = vadd.f32 %v1083, %v253
  %v1087 = vadd.f32 %v1085, %v262
  %v1088 = vadd.f32 %v1086, %v263
  %v1089 = vadd.f32 %v1087, %v323
  %v1090 = vadd.f32 %v1088, %v324
  %v1091 = vmul.f32 %v1089, 0.005
  %v1092 = vmul.f32 %v1090, 0.005
  %v1093 = vadd.f32 %v75, %v1091
  %v1094 = vadd.f32 %v76, %v1092
  %vm1095 = vcmask 31744
  %1096 = vst.msk [vmem:[%s23] sm:$0xff] %vm1095, %v1093
  %1097 = vst.msk [vmem:[%s23 + $0x8] sm:$0xff] %vm1095, %v1094
  %v1100 = vrot.slane %v1093, 7
  %v1101 = vrot.slane %v1094, 7
  %v1102 = vsel %vm137, %v1100, %v1101
  %v1104 = vsel %vm137, %v1093, %v1100
  %v1105 = vrot.slane %v1093, 1
  %v1106 = vrot.slane %v1094, 1
  %v1107 = vsel %vm143, %v1105, %v1106
  %v1109 = vsel %vm143, %v1106, %v1094
  %1110 = vset.pattern.permute.xlu0 0
  %1111 = vperm.xlu0 %1110, %v1093
  %v1112 = vpop.permute.xlu0 %1111
  %1114 = vset.pattern.permute.xlu0 0
  %1115 = vperm.xlu0 %1114, %v1094
  %v1116 = vpop.permute.xlu0 %1115
  %v1118 = vmul.f32 %v1112, %v157
  %v1119 = vmul.f32 %v1116, %v157
  %1120 = vset.pattern.permute.xlu0 1
  %1121 = vperm.xlu0 %1120, %v1093
  %v1122 = vpop.permute.xlu0 %1121
  %1124 = vset.pattern.permute.xlu0 1
  %1125 = vperm.xlu0 %1124, %v1094
  %v1126 = vpop.permute.xlu0 %1125
  %v1128 = vmul.f32 %v1122, %v168
  %v1129 = vmul.f32 %v1126, %v168
  %v1130 = vadd.f32 %v1118, %v1128
  %v1131 = vadd.f32 %v1119, %v1129
  %1132 = vset.pattern.permute.xlu0 2
  %1133 = vperm.xlu0 %1132, %v1093
  %v1134 = vpop.permute.xlu0 %1133
  %1136 = vset.pattern.permute.xlu0 2
  %1137 = vperm.xlu0 %1136, %v1094
  %v1138 = vpop.permute.xlu0 %1137
  %v1140 = vmul.f32 %v1134, %v181
  %v1141 = vmul.f32 %v1138, %v181
  %v1142 = vadd.f32 %v1130, %v1140
  %v1143 = vadd.f32 %v1131, %v1141
  %1144 = vset.pattern.permute.xlu0 3
  %1145 = vperm.xlu0 %1144, %v1093
  %v1146 = vpop.permute.xlu0 %1145
  %1148 = vset.pattern.permute.xlu0 3
  %1149 = vperm.xlu0 %1148, %v1094
  %v1150 = vpop.permute.xlu0 %1149
  %v1152 = vmul.f32 %v1146, %v194
  %v1153 = vmul.f32 %v1150, %v194
  %v1154 = vadd.f32 %v1142, %v1152
  %v1155 = vadd.f32 %v1143, %v1153
  %1157 = vset.pattern.permute.xlu0 0
  %1158 = vperm.xlu0 %1157, %v1104
  %v1159 = vpop.permute.xlu0 %1158
  %1161 = vset.pattern.permute.xlu0 0
  %1162 = vperm.xlu0 %1161, %v1102
  %v1163 = vpop.permute.xlu0 %1162
  %v1165 = vmul.f32 %v1159, %v208
  %v1166 = vmul.f32 %v1163, %v208
  %1167 = vset.pattern.permute.xlu0 1
  %1168 = vperm.xlu0 %1167, %v1104
  %v1169 = vpop.permute.xlu0 %1168
  %1171 = vset.pattern.permute.xlu0 1
  %1172 = vperm.xlu0 %1171, %v1102
  %v1173 = vpop.permute.xlu0 %1172
  %v1175 = vmul.f32 %v1169, %v219
  %v1176 = vmul.f32 %v1173, %v219
  %v1177 = vadd.f32 %v1165, %v1175
  %v1178 = vadd.f32 %v1166, %v1176
  %1179 = vset.pattern.permute.xlu0 2
  %1180 = vperm.xlu0 %1179, %v1104
  %v1181 = vpop.permute.xlu0 %1180
  %1183 = vset.pattern.permute.xlu0 2
  %1184 = vperm.xlu0 %1183, %v1102
  %v1185 = vpop.permute.xlu0 %1184
  %v1187 = vmul.f32 %v1181, %v232
  %v1188 = vmul.f32 %v1185, %v232
  %v1189 = vadd.f32 %v1177, %v1187
  %v1190 = vadd.f32 %v1178, %v1188
  %1191 = vset.pattern.permute.xlu0 3
  %1192 = vperm.xlu0 %1191, %v1104
  %v1193 = vpop.permute.xlu0 %1192
  %1195 = vset.pattern.permute.xlu0 3
  %1196 = vperm.xlu0 %1195, %v1102
  %v1197 = vpop.permute.xlu0 %1196
  %v1199 = vmul.f32 %v1193, %v245
  %v1200 = vmul.f32 %v1197, %v245
  %v1201 = vadd.f32 %v1189, %v1199
  %v1202 = vadd.f32 %v1190, %v1200
  %v1203 = vsub.f32 %v1201, %v1154
  %v1204 = vsub.f32 %v1202, %v1155
  %v1205 = vmul.f32 %v1203, %v88
  %v1206 = vmul.f32 %v1204, %v89
  %1209 = vrot.lane.b32.xlu0 %v1154, 124
  %v1210 = vpop.permute.xlu0 %1209
  %1211 = vrot.lane.b32.xlu0 %v1155, 124
  %v1212 = vpop.permute.xlu0 %1211
  %v1215 = vsub.f32 %v79, %v1210
  %v1216 = vsub.f32 %v80, %v1212
  %1217 = vset.pattern.permute.xlu0 0
  %1218 = vperm.xlu0 %1217, %v1107
  %v1219 = vpop.permute.xlu0 %1218
  %1222 = vset.pattern.permute.xlu0 0
  %1223 = vperm.xlu0 %1222, %v1109
  %v1224 = vpop.permute.xlu0 %1223
  %v1226 = vmul.f32 %v1219, %v273
  %v1227 = vmul.f32 %v1224, %v273
  %1228 = vset.pattern.permute.xlu0 1
  %1229 = vperm.xlu0 %1228, %v1107
  %v1230 = vpop.permute.xlu0 %1229
  %1232 = vset.pattern.permute.xlu0 1
  %1233 = vperm.xlu0 %1232, %v1109
  %v1234 = vpop.permute.xlu0 %1233
  %v1236 = vmul.f32 %v1230, %v284
  %v1237 = vmul.f32 %v1234, %v284
  %v1238 = vadd.f32 %v1226, %v1236
  %v1239 = vadd.f32 %v1227, %v1237
  %1240 = vset.pattern.permute.xlu0 2
  %1241 = vperm.xlu0 %1240, %v1107
  %v1242 = vpop.permute.xlu0 %1241
  %1244 = vset.pattern.permute.xlu0 2
  %1245 = vperm.xlu0 %1244, %v1109
  %v1246 = vpop.permute.xlu0 %1245
  %v1248 = vmul.f32 %v1242, %v297
  %v1249 = vmul.f32 %v1246, %v297
  %v1250 = vadd.f32 %v1238, %v1248
  %v1251 = vadd.f32 %v1239, %v1249
  %1252 = vset.pattern.permute.xlu0 3
  %1253 = vperm.xlu0 %1252, %v1107
  %v1254 = vpop.permute.xlu0 %1253
  %1256 = vset.pattern.permute.xlu0 3
  %1257 = vperm.xlu0 %1256, %v1109
  %v1258 = vpop.permute.xlu0 %1257
  %v1260 = vmul.f32 %v1254, %v310
  %v1261 = vmul.f32 %v1258, %v310
  %v1262 = vadd.f32 %v1250, %v1260
  %v1263 = vadd.f32 %v1251, %v1261
  %1264 = vrot.lane.b32.xlu0 %v1154, 120
  %v1265 = vpop.permute.xlu0 %1264
  %1266 = vrot.lane.b32.xlu0 %v1155, 120
  %v1267 = vpop.permute.xlu0 %1266
  %v1270 = vsub.f32 %v1262, %v1265
  %v1271 = vsub.f32 %v1263, %v1267
  %v1272 = vmul.f32 %v1270, %v94
  %v1273 = vmul.f32 %v1271, %v95
  %v1274 = vld [vmem:[%s9] sm:$0xff]
  %v1275 = vld [vmem:[%s9 + $0x8] sm:$0xff]
  %v1276 = vld [vmem:[%s9 + $0x10] sm:$0xff]
  %v1277 = vld [vmem:[%s9 + $0x18] sm:$0xff]
  %v1278 = vld [vmem:[%s9 + $0x20] sm:$0xff]
  %v1279 = vld [vmem:[%s9 + $0x28] sm:$0xff]
  %v1280 = vld [vmem:[%s9 + $0x30] sm:$0xff]
  %v1281 = vld [vmem:[%s9 + $0x38] sm:$0xff]
  %v1290 = vunpack.c.l.b16 %v1274
  %v1291 = vunpack.c.h.b16 %v1274
  %v1292 = vunpack.c.l.b16 %v1275
  %v1293 = vunpack.c.h.b16 %v1275
  %v1294 = vunpack.c.l.b16 %v1276
  %v1295 = vunpack.c.h.b16 %v1276
  %v1296 = vunpack.c.l.b16 %v1277
  %v1297 = vunpack.c.h.b16 %v1277
  %v1298 = vunpack.c.l.b16 %v1278
  %v1299 = vunpack.c.h.b16 %v1278
  %v1300 = vunpack.c.l.b16 %v1279
  %v1301 = vunpack.c.h.b16 %v1279
  %v1302 = vunpack.c.l.b16 %v1280
  %v1303 = vunpack.c.h.b16 %v1280
  %v1304 = vunpack.c.l.b16 %v1281
  %v1305 = vunpack.c.h.b16 %v1281
  %v1306 = vpack.c.b16 %v1294, %v1290
  %v1307 = vpack.c.b16 %v1295, %v1291
  %v1308 = vpack.c.b16 %v1296, %v1292
  %v1309 = vpack.c.b16 %v1297, %v1293
  %v1310 = vpack.c.b16 %v1302, %v1298
  %v1311 = vpack.c.b16 %v1303, %v1299
  %v1312 = vpack.c.b16 %v1304, %v1300
  %v1313 = vpack.c.b16 %v1305, %v1301
  %1322 = vmatpush.bf16.msra.mxu0 0
  %1323 = vmatpush.bf16.msra.mxu0 0
  %1324 = vmatpush.bf16.msra.mxu0 0
  %1325 = vmatpush.bf16.msra.mxu0 0
  %1326 = vmatpush.bf16.msra.mxu0 0
  %1327 = vmatpush.bf16.msra.mxu0 0
  %1328 = vmatpush.bf16.msra.mxu0 %v1310
  %1329 = vmatpush.bf16.msra.mxu0 %v1306
  %1330 = vmatmul.bf16.gmra.mxu0 %v992
  %v1331 = vpop.f32.mrf.mxu0
  %v1332 = vadd.f32 0.0, %v1331
  %v1333 = vpop.f32.mrf.mxu0
  %v1334 = vadd.f32 0.0, %v1333
  %1335 = vdwg.mxu0
  %1336 = vmatpush.bf16.msra.mxu0 0
  %1337 = vmatpush.bf16.msra.mxu0 0
  %1338 = vmatpush.bf16.msra.mxu0 0
  %1339 = vmatpush.bf16.msra.mxu0 0
  %1340 = vmatpush.bf16.msra.mxu0 0
  %1341 = vmatpush.bf16.msra.mxu0 0
  %1342 = vmatpush.bf16.msra.mxu0 %v1311
  %1343 = vmatpush.bf16.msra.mxu0 %v1307
  %1344 = vmatmul.bf16.gmra.mxu0 %v992
  %v1345 = vpop.f32.mrf.mxu0
  %v1346 = vadd.f32 0.0, %v1345
  %v1347 = vpop.f32.mrf.mxu0
  %v1348 = vadd.f32 0.0, %v1347
  %1349 = vdwg.mxu0
  %1350 = vmatpush.bf16.msra.mxu0 0
  %1351 = vmatpush.bf16.msra.mxu0 0
  %1352 = vmatpush.bf16.msra.mxu0 0
  %1353 = vmatpush.bf16.msra.mxu0 0
  %1354 = vmatpush.bf16.msra.mxu0 0
  %1355 = vmatpush.bf16.msra.mxu0 0
  %1356 = vmatpush.bf16.msra.mxu0 %v1312
  %1357 = vmatpush.bf16.msra.mxu0 %v1308
  %1358 = vmatmul.bf16.gmra.mxu0 %v992
  %v1359 = vpop.f32.mrf.mxu0
  %v1360 = vadd.f32 0.0, %v1359
  %v1361 = vpop.f32.mrf.mxu0
  %v1362 = vadd.f32 0.0, %v1361
  %1363 = vdwg.mxu0
  %1364 = vmatpush.bf16.msra.mxu0 0
  %1365 = vmatpush.bf16.msra.mxu0 0
  %1366 = vmatpush.bf16.msra.mxu0 0
  %1367 = vmatpush.bf16.msra.mxu0 0
  %1368 = vmatpush.bf16.msra.mxu0 0
  %1369 = vmatpush.bf16.msra.mxu0 0
  %1370 = vmatpush.bf16.msra.mxu0 %v1313
  %1371 = vmatpush.bf16.msra.mxu0 %v1309
  %1372 = vmatmul.bf16.gmra.mxu0 %v992
  %v1373 = vpop.f32.mrf.mxu0
  %v1374 = vadd.f32 0.0, %v1373
  %v1375 = vpop.f32.mrf.mxu0
  %v1376 = vadd.f32 0.0, %v1375
  %1377 = vdwg.mxu0
  %v1380 = vrot.slane %v1346, 7
  %v1381 = vrot.slane %v1348, 7
  %v1382 = vsel %vm137, %v1380, %v1381
  %v1385 = vsel %vm137, %v1346, %v1380
  %v1388 = vrot.slane %v1360, 1
  %v1389 = vrot.slane %v1362, 1
  %v1390 = vsel %vm143, %v1388, %v1389
  %v1393 = vsel %vm143, %v1389, %v1362
  %v1394 = vadd.f32 %v1374, %v113
  %v1395 = vadd.f32 %v1376, %v113
  %v1396 = vld [vmem:[%s8] sm:$0xf]
  %1398 = vset.pattern.permute.xlu0 0
  %1399 = vperm.xlu0 %1398, %v1205
  %v1400 = vpop.permute.xlu0 %1399
  %1403 = vset.pattern.permute.xlu0 0
  %1404 = vperm.xlu0 %1403, %v1206
  %v1405 = vpop.permute.xlu0 %1404
  %v1407 = vperm.slane %v1396, 0
  %v1408 = vmul.f32 %v1400, %v1407
  %v1409 = vmul.f32 %v1405, %v1407
  %1410 = vset.pattern.permute.xlu0 1
  %1411 = vperm.xlu0 %1410, %v1205
  %v1412 = vpop.permute.xlu0 %1411
  %1414 = vset.pattern.permute.xlu0 1
  %1415 = vperm.xlu0 %1414, %v1206
  %v1416 = vpop.permute.xlu0 %1415
  %v1418 = vperm.slane %v1396, 1
  %v1419 = vmul.f32 %v1412, %v1418
  %v1420 = vmul.f32 %v1416, %v1418
  %v1421 = vadd.f32 %v1408, %v1419
  %v1422 = vadd.f32 %v1409, %v1420
  %1423 = vset.pattern.permute.xlu0 2
  %1424 = vperm.xlu0 %1423, %v1205
  %v1425 = vpop.permute.xlu0 %1424
  %1427 = vset.pattern.permute.xlu0 2
  %1428 = vperm.xlu0 %1427, %v1206
  %v1429 = vpop.permute.xlu0 %1428
  %v1431 = vperm.slane %v1396, 2
  %v1432 = vmul.f32 %v1425, %v1431
  %v1433 = vmul.f32 %v1429, %v1431
  %v1434 = vadd.f32 %v1421, %v1432
  %v1435 = vadd.f32 %v1422, %v1433
  %1436 = vset.pattern.permute.xlu0 3
  %1437 = vperm.xlu0 %1436, %v1205
  %v1438 = vpop.permute.xlu0 %1437
  %1440 = vset.pattern.permute.xlu0 3
  %1441 = vperm.xlu0 %1440, %v1206
  %v1442 = vpop.permute.xlu0 %1441
  %v1444 = vperm.slane %v1396, 3
  %v1445 = vmul.f32 %v1438, %v1444
  %v1446 = vmul.f32 %v1442, %v1444
  %v1447 = vadd.f32 %v1434, %v1445
  %v1448 = vadd.f32 %v1435, %v1446
  %v1449 = vld [vmem:[%s505] sm:$0xf]
  %1451 = vset.pattern.permute.xlu0 0
  %1452 = vperm.xlu0 %1451, %v1215
  %v1453 = vpop.permute.xlu0 %1452
  %1456 = vset.pattern.permute.xlu0 0
  %1457 = vperm.xlu0 %1456, %v1216
  %v1458 = vpop.permute.xlu0 %1457
  %v1460 = vperm.slane %v1449, 0
  %v1461 = vmul.f32 %v1453, %v1460
  %v1462 = vmul.f32 %v1458, %v1460
  %1463 = vset.pattern.permute.xlu0 1
  %1464 = vperm.xlu0 %1463, %v1215
  %v1465 = vpop.permute.xlu0 %1464
  %1467 = vset.pattern.permute.xlu0 1
  %1468 = vperm.xlu0 %1467, %v1216
  %v1469 = vpop.permute.xlu0 %1468
  %v1471 = vperm.slane %v1449, 1
  %v1472 = vmul.f32 %v1465, %v1471
  %v1473 = vmul.f32 %v1469, %v1471
  %v1474 = vadd.f32 %v1461, %v1472
  %v1475 = vadd.f32 %v1462, %v1473
  %1476 = vset.pattern.permute.xlu0 2
  %1477 = vperm.xlu0 %1476, %v1215
  %v1478 = vpop.permute.xlu0 %1477
  %1480 = vset.pattern.permute.xlu0 2
  %1481 = vperm.xlu0 %1480, %v1216
  %v1482 = vpop.permute.xlu0 %1481
  %v1484 = vperm.slane %v1449, 2
  %v1485 = vmul.f32 %v1478, %v1484
  %v1486 = vmul.f32 %v1482, %v1484
  %v1487 = vadd.f32 %v1474, %v1485
  %v1488 = vadd.f32 %v1475, %v1486
  %1489 = vset.pattern.permute.xlu0 3
  %1490 = vperm.xlu0 %1489, %v1215
  %v1491 = vpop.permute.xlu0 %1490
  %1493 = vset.pattern.permute.xlu0 3
  %1494 = vperm.xlu0 %1493, %v1216
  %v1495 = vpop.permute.xlu0 %1494
  %v1497 = vperm.slane %v1449, 3
  %v1498 = vmul.f32 %v1491, %v1497
  %v1499 = vmul.f32 %v1495, %v1497
  %v1500 = vadd.f32 %v1487, %v1498
  %v1501 = vadd.f32 %v1488, %v1499
  %v1502 = vadd.f32 %v1447, %v1500
  %v1503 = vadd.f32 %v1448, %v1501
  %v1504 = vld [vmem:[%s561] sm:$0xf]
  %1506 = vset.pattern.permute.xlu0 0
  %1507 = vperm.xlu0 %1506, %v1272
  %v1508 = vpop.permute.xlu0 %1507
  %1511 = vset.pattern.permute.xlu0 0
  %1512 = vperm.xlu0 %1511, %v1273
  %v1513 = vpop.permute.xlu0 %1512
  %v1515 = vperm.slane %v1504, 0
  %v1516 = vmul.f32 %v1508, %v1515
  %v1517 = vmul.f32 %v1513, %v1515
  %1518 = vset.pattern.permute.xlu0 1
  %1519 = vperm.xlu0 %1518, %v1272
  %v1520 = vpop.permute.xlu0 %1519
  %1522 = vset.pattern.permute.xlu0 1
  %1523 = vperm.xlu0 %1522, %v1273
  %v1524 = vpop.permute.xlu0 %1523
  %v1526 = vperm.slane %v1504, 1
  %v1527 = vmul.f32 %v1520, %v1526
  %v1528 = vmul.f32 %v1524, %v1526
  %v1529 = vadd.f32 %v1516, %v1527
  %v1530 = vadd.f32 %v1517, %v1528
  %1531 = vset.pattern.permute.xlu0 2
  %1532 = vperm.xlu0 %1531, %v1272
  %v1533 = vpop.permute.xlu0 %1532
  %1535 = vset.pattern.permute.xlu0 2
  %1536 = vperm.xlu0 %1535, %v1273
  %v1537 = vpop.permute.xlu0 %1536
  %v1539 = vperm.slane %v1504, 2
  %v1540 = vmul.f32 %v1533, %v1539
  %v1541 = vmul.f32 %v1537, %v1539
  %v1542 = vadd.f32 %v1529, %v1540
  %v1543 = vadd.f32 %v1530, %v1541
  %1544 = vset.pattern.permute.xlu0 3
  %1545 = vperm.xlu0 %1544, %v1272
  %v1546 = vpop.permute.xlu0 %1545
  %1548 = vset.pattern.permute.xlu0 3
  %1549 = vperm.xlu0 %1548, %v1273
  %v1550 = vpop.permute.xlu0 %1549
  %v1552 = vperm.slane %v1504, 3
  %v1553 = vmul.f32 %v1546, %v1552
  %v1554 = vmul.f32 %v1550, %v1552
  %v1555 = vadd.f32 %v1542, %v1553
  %v1556 = vadd.f32 %v1543, %v1554
  %v1557 = vadd.f32 %v1502, %v1555
  %v1558 = vadd.f32 %v1503, %v1556
  %v1559 = vadd.f32 %v1332, %v1385
  %v1560 = vadd.f32 %v1334, %v1382
  %v1561 = vadd.f32 %v1559, %v1390
  %v1562 = vadd.f32 %v1560, %v1393
  %v1563 = vadd.f32 %v1561, %v96
  %v1564 = vadd.f32 %v1562, %v97
  %v1565 = vadd.f32 %v1563, %v1557
  %v1566 = vadd.f32 %v1564, %v1558
  %vm1567 = vcmp.gt.f32.partialorder %v1565, 0.0
  %vm1568 = vcmp.gt.f32.partialorder %v1566, 0.0
  %v1569 = vmul.f32 %v1565, 0.01
  %v1570 = vmul.f32 %v1566, 0.01
  %v1571 = vsel %vm1567, %v1565, %v1569
  %v1572 = vsel %vm1568, %v1566, %v1570
  %v1573 = vld [vmem:[%s10] sm:$0xf]
  %v1574 = vld [vmem:[%s10 + $0x4] sm:$0xf]
  %v1575 = vld [vmem:[%s10 + $0x8] sm:$0xf]
  %v1576 = vld [vmem:[%s10 + $0xc] sm:$0xf]
  %v1577 = vld [vmem:[%s10 + $0x10] sm:$0xf]
  %v1578 = vld [vmem:[%s10 + $0x14] sm:$0xf]
  %v1579 = vld [vmem:[%s10 + $0x18] sm:$0xf]
  %v1580 = vld [vmem:[%s10 + $0x1c] sm:$0xf]
  %v1581 = vld [vmem:[%s10 + $0x20] sm:$0xf]
  %v1582 = vld [vmem:[%s10 + $0x24] sm:$0xf]
  %v1583 = vld [vmem:[%s10 + $0x28] sm:$0xf]
  %v1584 = vld [vmem:[%s10 + $0x2c] sm:$0xf]
  %v1585 = vld [vmem:[%s10 + $0x30] sm:$0xf]
  %v1586 = vld [vmem:[%s10 + $0x34] sm:$0xf]
  %v1587 = vld [vmem:[%s10 + $0x38] sm:$0xf]
  %v1588 = vld [vmem:[%s10 + $0x3c] sm:$0xf]
  %v1589 = vpack.c.bf16 %v1572, %v1571
  %v1606 = vunpack.c.l.b16 %v1573
  %v1607 = vunpack.c.l.b16 %v1574
  %v1608 = vunpack.c.l.b16 %v1575
  %v1609 = vunpack.c.l.b16 %v1576
  %v1610 = vunpack.c.l.b16 %v1577
  %v1611 = vunpack.c.l.b16 %v1578
  %v1612 = vunpack.c.l.b16 %v1579
  %v1613 = vunpack.c.l.b16 %v1580
  %v1614 = vunpack.c.l.b16 %v1581
  %v1615 = vunpack.c.l.b16 %v1582
  %v1616 = vunpack.c.l.b16 %v1583
  %v1617 = vunpack.c.l.b16 %v1584
  %v1618 = vunpack.c.l.b16 %v1585
  %v1619 = vunpack.c.l.b16 %v1586
  %v1620 = vunpack.c.l.b16 %v1587
  %v1621 = vunpack.c.l.b16 %v1588
  %v1622 = vpack.c.b16 %v1607, %v1606
  %v1623 = vpack.c.b16 %v1609, %v1608
  %v1624 = vpack.c.b16 %v1611, %v1610
  %v1625 = vpack.c.b16 %v1613, %v1612
  %v1626 = vpack.c.b16 %v1615, %v1614
  %v1627 = vpack.c.b16 %v1617, %v1616
  %v1628 = vpack.c.b16 %v1619, %v1618
  %v1629 = vpack.c.b16 %v1621, %v1620
  %1638 = vmatpush.bf16.msra.mxu0 %v1629
  %1639 = vmatpush.bf16.msra.mxu0 %v1628
  %1640 = vmatpush.bf16.msra.mxu0 %v1627
  %1641 = vmatpush.bf16.msra.mxu0 %v1626
  %1642 = vmatpush.bf16.msra.mxu0 %v1625
  %1643 = vmatpush.bf16.msra.mxu0 %v1624
  %1644 = vmatpush.bf16.msra.mxu0 %v1623
  %1645 = vmatpush.bf16.msra.mxu0 %v1622
  %1646 = vmatmul.bf16.gmra.mxu0 %v1589
  %v1647 = vpop.f32.mrf.mxu0
  %v1648 = vadd.f32 %v105, %v1647
  %v1649 = vpop.f32.mrf.mxu0
  %v1650 = vadd.f32 %v105, %v1649
  %1651 = vdwg.mxu0
  %vm1652 = vcmp.gt.f32.partialorder %v1648, 0.0
  %vm1653 = vcmp.gt.f32.partialorder %v1650, 0.0
  %v1654 = vmul.f32 %v1648, 0.01
  %v1655 = vmul.f32 %v1650, 0.01
  %v1656 = vsel %vm1652, %v1648, %v1654
  %v1657 = vsel %vm1653, %v1650, %v1655
  %v1658 = vmul.f32 %v1656, %v98
  %v1659 = vmul.f32 %v1657, %v99
  %v1660 = vld [vmem:[%s12] sm:$0xf]
  %v1661 = vld [vmem:[%s12 + $0x4] sm:$0xf]
  %v1662 = vld [vmem:[%s12 + $0x8] sm:$0xf]
  %v1663 = vld [vmem:[%s12 + $0xc] sm:$0xf]
  %v1664 = vld [vmem:[%s12 + $0x10] sm:$0xf]
  %v1665 = vld [vmem:[%s12 + $0x14] sm:$0xf]
  %v1666 = vld [vmem:[%s12 + $0x18] sm:$0xf]
  %v1667 = vld [vmem:[%s12 + $0x1c] sm:$0xf]
  %v1668 = vld [vmem:[%s12 + $0x20] sm:$0xf]
  %v1669 = vld [vmem:[%s12 + $0x24] sm:$0xf]
  %v1670 = vld [vmem:[%s12 + $0x28] sm:$0xf]
  %v1671 = vld [vmem:[%s12 + $0x2c] sm:$0xf]
  %v1672 = vld [vmem:[%s12 + $0x30] sm:$0xf]
  %v1673 = vld [vmem:[%s12 + $0x34] sm:$0xf]
  %v1674 = vld [vmem:[%s12 + $0x38] sm:$0xf]
  %v1675 = vld [vmem:[%s12 + $0x3c] sm:$0xf]
  %v1676 = vpack.c.bf16 %v1659, %v1658
  %v1693 = vunpack.c.l.b16 %v1660
  %v1694 = vunpack.c.l.b16 %v1661
  %v1695 = vunpack.c.l.b16 %v1662
  %v1696 = vunpack.c.l.b16 %v1663
  %v1697 = vunpack.c.l.b16 %v1664
  %v1698 = vunpack.c.l.b16 %v1665
  %v1699 = vunpack.c.l.b16 %v1666
  %v1700 = vunpack.c.l.b16 %v1667
  %v1701 = vunpack.c.l.b16 %v1668
  %v1702 = vunpack.c.l.b16 %v1669
  %v1703 = vunpack.c.l.b16 %v1670
  %v1704 = vunpack.c.l.b16 %v1671
  %v1705 = vunpack.c.l.b16 %v1672
  %v1706 = vunpack.c.l.b16 %v1673
  %v1707 = vunpack.c.l.b16 %v1674
  %v1708 = vunpack.c.l.b16 %v1675
  %v1709 = vpack.c.b16 %v1694, %v1693
  %v1710 = vpack.c.b16 %v1696, %v1695
  %v1711 = vpack.c.b16 %v1698, %v1697
  %v1712 = vpack.c.b16 %v1700, %v1699
  %v1713 = vpack.c.b16 %v1702, %v1701
  %v1714 = vpack.c.b16 %v1704, %v1703
  %v1715 = vpack.c.b16 %v1706, %v1705
  %v1716 = vpack.c.b16 %v1708, %v1707
  %1725 = vmatpush.bf16.msra.mxu0 %v1716
  %1726 = vmatpush.bf16.msra.mxu0 %v1715
  %1727 = vmatpush.bf16.msra.mxu0 %v1714
  %1728 = vmatpush.bf16.msra.mxu0 %v1713
  %1729 = vmatpush.bf16.msra.mxu0 %v1712
  %1730 = vmatpush.bf16.msra.mxu0 %v1711
  %1731 = vmatpush.bf16.msra.mxu0 %v1710
  %1732 = vmatpush.bf16.msra.mxu0 %v1709
  %1733 = vmatmul.bf16.gmra.mxu0 %v1676
  %v1734 = vpop.f32.mrf.mxu0
  %v1735 = vadd.f32 0.0, %v1734
  %v1736 = vpop.f32.mrf.mxu0
  %v1737 = vadd.f32 0.0, %v1736
  %1738 = vdwg.mxu0
  %v1739 = vsel %vm374, %v1735, 0.0
  %v1740 = vsel %vm374, %v1737, 0.0
  %v1741 = vadd.f32 %v1739, %v1740
  %v1742 = vrot.slane %v1741, 4
  %v1743 = vadd.f32 %v1741, %v1742
  %v1744 = vrot.slane %v1743, 2
  %v1745 = vadd.f32 %v1743, %v1744
  %v1746 = vrot.slane %v1745, 1
  %v1747 = vadd.f32 %v1745, %v1746
  %v1748 = vmul.f32 %v1747, %v812
  %v1749 = vsub.f32 %v1735, %v1748
  %v1750 = vsub.f32 %v1737, %v1748
  %v1751 = vmul.f32 %v1749, %v1749
  %v1752 = vmul.f32 %v1750, %v1750
  %v1753 = vsel %vm374, %v1751, 0.0
  %v1754 = vsel %vm374, %v1752, 0.0
  %v1755 = vadd.f32 %v1753, %v1754
  %v1756 = vrot.slane %v1755, 4
  %v1757 = vadd.f32 %v1755, %v1756
  %v1758 = vrot.slane %v1757, 2
  %v1759 = vadd.f32 %v1757, %v1758
  %v1760 = vrot.slane %v1759, 1
  %v1761 = vadd.f32 %v1759, %v1760
  %v1762 = vmul.f32 %v1761, %v812
  %v1763 = vmul.f32 %v117, %v1749
  %v1764 = vmul.f32 %v117, %v1750
  %v1765 = vadd.f32 %v1762, 1e-05
  %v1766 = vrsqrt.pop %v1765
  %v1767 = vmul.f32 %v1766, %v1765
  %v1768 = vmul.f32 %v1767, %v1766
  %v1769 = vmul.f32 0.5, %v1768
  %v1770 = vsub.f32 1.5, %v1769
  %v1771 = vmul.f32 %v1766, %v1770
  %vm1772 = vweird.f32 %v1765
  %vm1773 = vweird.f32 %v1766
  %vm1774 = vmor %vm1772, %vm1773
  %v1775 = vsel %vm1774, %v1766, %v1771
  %v1776 = vmul.f32 %v1763, %v1775
  %v1777 = vmul.f32 %v1764, %v1775
  %v1778 = vadd.f32 %v1776, %v121
  %v1779 = vadd.f32 %v1777, %v121
  %vm1780 = vcmp.gt.f32.partialorder %v1778, 0.0
  %vm1781 = vcmp.gt.f32.partialorder %v1779, 0.0
  %v1782 = vmul.f32 %v1778, 0.01
  %v1783 = vmul.f32 %v1779, 0.01
  %v1784 = vsel %vm1780, %v1778, %v1782
  %v1785 = vsel %vm1781, %v1779, %v1783
  %v1786 = vld [vmem:[%s15] sm:$0xf]
  %v1787 = vld [vmem:[%s15 + $0x4] sm:$0xf]
  %v1788 = vld [vmem:[%s15 + $0x8] sm:$0xf]
  %v1789 = vld [vmem:[%s15 + $0xc] sm:$0xf]
  %v1790 = vpack.c.bf16 %v1785, %v1784
  %v1795 = vunpack.c.l.b16 %v1786
  %v1796 = vunpack.c.l.b16 %v1787
  %v1797 = vunpack.c.l.b16 %v1788
  %v1798 = vunpack.c.l.b16 %v1789
  %v1799 = vpack.c.b16 %v1796, %v1795
  %v1800 = vpack.c.b16 %v1798, %v1797
  %v1804 = vsel %vm374, %v1790, 0
  %1806 = vmatpush.bf16.msra.mxu0 0
  %1807 = vmatpush.bf16.msra.mxu0 0
  %1808 = vmatpush.bf16.msra.mxu0 0
  %1809 = vmatpush.bf16.msra.mxu0 0
  %1810 = vmatpush.bf16.msra.mxu0 0
  %1811 = vmatpush.bf16.msra.mxu0 0
  %1812 = vmatpush.bf16.msra.mxu0 %v1800
  %1813 = vmatpush.bf16.msra.mxu0 %v1799
  %1814 = vmatmul.bf16.gmra.mxu0 %v1804
  %v1815 = vpop.f32.mrf.mxu0
  %v1816 = vadd.f32 %v109, %v1815
  %v1817 = vpop.f32.mrf.mxu0
  %v1818 = vadd.f32 %v109, %v1817
  %1819 = vdwg.mxu0
  %v1820 = vadd.f32 %v1816, %v1394
  %v1821 = vadd.f32 %v1818, %v1395
  %v1822 = vxor.u32 %v1820, 2147483648
  %v1823 = vxor.u32 %v1821, 2147483648
  %v1824 = vmul.f32 %v1822, 1.442695
  %v1825 = vpow.pop %v1824
  %v1826 = vmul.f32 %v1823, 1.442695
  %v1827 = vpow.pop %v1826
  %v1828 = vadd.f32 %v1825, 1.0
  %v1829 = vadd.f32 %v1827, 1.0
  %v1830 = vrcp.pop %v1828
  %v1831 = vmul.f32 %v1828, %v1830
  %v1832 = vsub.f32 1.0, %v1831
  %v1833 = vmul.f32 %v1830, %v1832
  %v1834 = vadd.f32 %v1830, %v1833
  %vm1835 = vweird.f32 %v1828
  %vm1836 = vweird.f32 %v1830
  %vm1837 = vmor %vm1835, %vm1836
  %v1838 = vsel %vm1837, %v1830, %v1834
  %v1839 = vand.u32 2147483647, %v1828
  %vm1840 = vcmp.eq.f32.partialorder %v1839, 8.507059e+37
  %v1841 = vand.u32 %v1828, 2147483648
  %v1842 = vor.u32 1.1754944e-38, %v1841
  %v1843 = vsel %vm1840, %v1842, %v1838
  %v1844 = vmul.f32 1.0, %v1843
  %v1845 = vrcp.pop %v1829
  %v1846 = vmul.f32 %v1829, %v1845
  %v1847 = vsub.f32 1.0, %v1846
  %v1848 = vmul.f32 %v1845, %v1847
  %v1849 = vadd.f32 %v1845, %v1848
  %vm1850 = vweird.f32 %v1829
  %vm1851 = vweird.f32 %v1845
  %vm1852 = vmor %vm1850, %vm1851
  %v1853 = vsel %vm1852, %v1845, %v1849
  %v1854 = vand.u32 2147483647, %v1829
  %vm1855 = vcmp.eq.f32.partialorder %v1854, 8.507059e+37
  %v1856 = vand.u32 %v1829, 2147483648
  %v1857 = vor.u32 1.1754944e-38, %v1856
  %v1858 = vsel %vm1855, %v1857, %v1853
  %v1859 = vmul.f32 1.0, %v1858
  %1862 = vrot.lane.b32.xlu0 %v1394, 64
  %v1863 = vpop.permute.xlu0 %1862
  %1864 = vrot.lane.b32.xlu0 %v1395, 64
  %v1865 = vpop.permute.xlu0 %1864
  %v1868 = vmul.f32 %v1844, %v1863
  %v1869 = vmul.f32 %v1859, %v1865
  %1872 = vrot.lane.b32.xlu0 %v1868, 64
  %v1873 = vpop.permute.xlu0 %1872
  %1874 = vrot.lane.b32.xlu0 %v1869, 64
  %v1875 = vpop.permute.xlu0 %1874
  %v1878 = vadd.f32 %v1816, %v1873
  %v1879 = vadd.f32 %v1818, %v1875
  %v1880 = vtanh.pop %v1878
  %v1881 = vtanh.pop %v1879
  %v1882 = vsub.f32 1.0, %v1844
  %v1883 = vsub.f32 1.0, %v1859
  %1886 = vrot.lane.b32.xlu0 %v1880, 96
  %v1887 = vpop.permute.xlu0 %1886
  %1888 = vrot.lane.b32.xlu0 %v1881, 96
  %v1889 = vpop.permute.xlu0 %1888
  %v1892 = vmul.f32 %v1882, %v1887
  %v1893 = vmul.f32 %v1883, %v1889
  %v1894 = vmul.f32 %v1844, %v969
  %v1895 = vmul.f32 %v1859, %v970
  %v1896 = vadd.f32 %v1892, %v1894
  %v1897 = vadd.f32 %v1893, %v1895
  %v1898 = vld [vmem:[%s18] sm:$0xf]
  %v1899 = vld [vmem:[%s18 + $0x4] sm:$0xf]
  %v1900 = vld [vmem:[%s18 + $0x8] sm:$0xf]
  %v1901 = vld [vmem:[%s18 + $0xc] sm:$0xf]
  %v1902 = vpack.c.bf16 %v1897, %v1896
  %1904 = vrot.lane.b32.xlu0 %v1902, 96
  %v1905 = vpop.permute.xlu0 %1904
  %v1910 = vunpack.c.l.b16 %v1898
  %v1911 = vunpack.c.l.b16 %v1899
  %v1912 = vunpack.c.l.b16 %v1900
  %v1913 = vunpack.c.l.b16 %v1901
  %v1914 = vpack.c.b16 %v1911, %v1910
  %v1915 = vpack.c.b16 %v1913, %v1912
  %v1919 = vsel %vm374, %v1905, 0
  %1921 = vmatpush.bf16.msra.mxu0 0
  %1922 = vmatpush.bf16.msra.mxu0 0
  %1923 = vmatpush.bf16.msra.mxu0 0
  %1924 = vmatpush.bf16.msra.mxu0 0
  %1925 = vmatpush.bf16.msra.mxu0 0
  %1926 = vmatpush.bf16.msra.mxu0 0
  %1927 = vmatpush.bf16.msra.mxu0 %v1915
  %1928 = vmatpush.bf16.msra.mxu0 %v1914
  %1929 = vmatmul.bf16.gmra.mxu0 %v1919
  %v1930 = vpop.f32.mrf.mxu0
  %v1931 = vadd.f32 0.0, %v1930
  %v1932 = vpop.f32.mrf.mxu0
  %v1933 = vadd.f32 0.0, %v1932
  %1934 = vdwg.mxu0
  %v1935 = vsel %vm374, %v1931, 0.0
  %v1936 = vsel %vm374, %v1933, 0.0
  %v1937 = vadd.f32 %v1935, %v1936
  %v1938 = vrot.slane %v1937, 4
  %v1939 = vadd.f32 %v1937, %v1938
  %v1940 = vrot.slane %v1939, 2
  %v1941 = vadd.f32 %v1939, %v1940
  %v1942 = vrot.slane %v1941, 1
  %v1943 = vadd.f32 %v1941, %v1942
  %v1944 = vmul.f32 %v1943, %v812
  %v1945 = vsub.f32 %v1931, %v1944
  %v1946 = vsub.f32 %v1933, %v1944
  %v1947 = vmul.f32 %v1945, %v1945
  %v1948 = vmul.f32 %v1946, %v1946
  %v1949 = vsel %vm374, %v1947, 0.0
  %v1950 = vsel %vm374, %v1948, 0.0
  %v1951 = vadd.f32 %v1949, %v1950
  %v1952 = vrot.slane %v1951, 4
  %v1953 = vadd.f32 %v1951, %v1952
  %v1954 = vrot.slane %v1953, 2
  %v1955 = vadd.f32 %v1953, %v1954
  %v1956 = vrot.slane %v1955, 1
  %v1957 = vadd.f32 %v1955, %v1956
  %v1958 = vmul.f32 %v1957, %v812
  %v1959 = vmul.f32 %v125, %v1945
  %v1960 = vmul.f32 %v125, %v1946
  %v1961 = vadd.f32 %v1958, 1e-05
  %v1962 = vrsqrt.pop %v1961
  %v1963 = vmul.f32 %v1962, %v1961
  %v1964 = vmul.f32 %v1963, %v1962
  %v1965 = vmul.f32 0.5, %v1964
  %v1966 = vsub.f32 1.5, %v1965
  %v1967 = vmul.f32 %v1962, %v1966
  %vm1968 = vweird.f32 %v1961
  %vm1969 = vweird.f32 %v1962
  %vm1970 = vmor %vm1968, %vm1969
  %v1971 = vsel %vm1970, %v1962, %v1967
  %v1972 = vmul.f32 %v1959, %v1971
  %v1973 = vmul.f32 %v1960, %v1971
  %v1974 = vadd.f32 %v1972, %v129
  %v1975 = vadd.f32 %v1973, %v129
  %v1976 = vmax.f32 %v1974, 0.0
  %v1977 = vmax.f32 %v1975, 0.0
  %v1978 = vld [vmem:[%s21] sm:$0xf]
  %v1979 = vld [vmem:[%s21 + $0x4] sm:$0xf]
  %v1980 = vld [vmem:[%s21 + $0x8] sm:$0xf]
  %v1981 = vld [vmem:[%s21 + $0xc] sm:$0xf]
  %v1982 = vpack.c.bf16 %v1977, %v1976
  %v1987 = vunpack.c.l.b16 %v1978
  %v1988 = vunpack.c.l.b16 %v1979
  %v1989 = vunpack.c.l.b16 %v1980
  %v1990 = vunpack.c.l.b16 %v1981
  %v1991 = vpack.c.b16 %v1988, %v1987
  %v1992 = vpack.c.b16 %v1990, %v1989
  %v1996 = vsel %vm374, %v1982, 0
  %1998 = vmatpush.bf16.msra.mxu0 0
  %1999 = vmatpush.bf16.msra.mxu0 0
  %2000 = vmatpush.bf16.msra.mxu0 0
  %2001 = vmatpush.bf16.msra.mxu0 0
  %2002 = vmatpush.bf16.msra.mxu0 0
  %2003 = vmatpush.bf16.msra.mxu0 0
  %2004 = vmatpush.bf16.msra.mxu0 %v1992
  %2005 = vmatpush.bf16.msra.mxu0 %v1991
  %2006 = vmatmul.bf16.gmra.mxu0 %v1996
  %v2007 = vpop.f32.mrf.mxu0
  %v2008 = vadd.f32 %v133, %v2007
  %v2009 = vpop.f32.mrf.mxu0
  %v2010 = vadd.f32 %v133, %v2009
  %2011 = vdwg.mxu0
  %v2012 = vadd.f32 %v2008, %v1205
  %v2013 = vadd.f32 %v2010, %v1206
  %v2014 = vadd.f32 %v2012, %v1215
  %v2015 = vadd.f32 %v2013, %v1216
  %v2016 = vadd.f32 %v2014, %v1272
  %v2017 = vadd.f32 %v2015, %v1273
  %v2018 = vmul.f32 %v2016, 0.005
  %v2019 = vmul.f32 %v2017, 0.005
  %v2020 = vadd.f32 %v1093, %v2018
  %v2021 = vadd.f32 %v1094, %v2019
  %s2022 = scalar_lea.vmem %s23, 16
  %2023 = vst.msk [vmem:[%s2022] sm:$0xff] %vm1095, %v2020
  %2024 = vst.msk [vmem:[%s2022 + $0x8] sm:$0xff] %vm1095, %v2021
  %v2027 = vrot.slane %v2020, 7
  %v2028 = vrot.slane %v2021, 7
  %v2029 = vsel %vm137, %v2027, %v2028
  %v2031 = vsel %vm137, %v2020, %v2027
  %v2032 = vrot.slane %v2020, 1
  %v2033 = vrot.slane %v2021, 1
  %v2034 = vsel %vm143, %v2032, %v2033
  %v2036 = vsel %vm143, %v2033, %v2021
  %2037 = vset.pattern.permute.xlu0 0
  %2038 = vperm.xlu0 %2037, %v2020
  %v2039 = vpop.permute.xlu0 %2038
  %2041 = vset.pattern.permute.xlu0 0
  %2042 = vperm.xlu0 %2041, %v2021
  %v2043 = vpop.permute.xlu0 %2042
  %v2045 = vmul.f32 %v2039, %v157
  %v2046 = vmul.f32 %v2043, %v157
  %2047 = vset.pattern.permute.xlu0 1
  %2048 = vperm.xlu0 %2047, %v2020
  %v2049 = vpop.permute.xlu0 %2048
  %2051 = vset.pattern.permute.xlu0 1
  %2052 = vperm.xlu0 %2051, %v2021
  %v2053 = vpop.permute.xlu0 %2052
  %v2055 = vmul.f32 %v2049, %v168
  %v2056 = vmul.f32 %v2053, %v168
  %v2057 = vadd.f32 %v2045, %v2055
  %v2058 = vadd.f32 %v2046, %v2056
  %2059 = vset.pattern.permute.xlu0 2
  %2060 = vperm.xlu0 %2059, %v2020
  %v2061 = vpop.permute.xlu0 %2060
  %2063 = vset.pattern.permute.xlu0 2
  %2064 = vperm.xlu0 %2063, %v2021
  %v2065 = vpop.permute.xlu0 %2064
  %v2067 = vmul.f32 %v2061, %v181
  %v2068 = vmul.f32 %v2065, %v181
  %v2069 = vadd.f32 %v2057, %v2067
  %v2070 = vadd.f32 %v2058, %v2068
  %2071 = vset.pattern.permute.xlu0 3
  %2072 = vperm.xlu0 %2071, %v2020
  %v2073 = vpop.permute.xlu0 %2072
  %2075 = vset.pattern.permute.xlu0 3
  %2076 = vperm.xlu0 %2075, %v2021
  %v2077 = vpop.permute.xlu0 %2076
  %v2079 = vmul.f32 %v2073, %v194
  %v2080 = vmul.f32 %v2077, %v194
  %v2081 = vadd.f32 %v2069, %v2079
  %v2082 = vadd.f32 %v2070, %v2080
  %2084 = vset.pattern.permute.xlu0 0
  %2085 = vperm.xlu0 %2084, %v2031
  %v2086 = vpop.permute.xlu0 %2085
  %2088 = vset.pattern.permute.xlu0 0
  %2089 = vperm.xlu0 %2088, %v2029
  %v2090 = vpop.permute.xlu0 %2089
  %v2092 = vmul.f32 %v2086, %v208
  %v2093 = vmul.f32 %v2090, %v208
  %2094 = vset.pattern.permute.xlu0 1
  %2095 = vperm.xlu0 %2094, %v2031
  %v2096 = vpop.permute.xlu0 %2095
  %2098 = vset.pattern.permute.xlu0 1
  %2099 = vperm.xlu0 %2098, %v2029
  %v2100 = vpop.permute.xlu0 %2099
  %v2102 = vmul.f32 %v2096, %v219
  %v2103 = vmul.f32 %v2100, %v219
  %v2104 = vadd.f32 %v2092, %v2102
  %v2105 = vadd.f32 %v2093, %v2103
  %2106 = vset.pattern.permute.xlu0 2
  %2107 = vperm.xlu0 %2106, %v2031
  %v2108 = vpop.permute.xlu0 %2107
  %2110 = vset.pattern.permute.xlu0 2
  %2111 = vperm.xlu0 %2110, %v2029
  %v2112 = vpop.permute.xlu0 %2111
  %v2114 = vmul.f32 %v2108, %v232
  %v2115 = vmul.f32 %v2112, %v232
  %v2116 = vadd.f32 %v2104, %v2114
  %v2117 = vadd.f32 %v2105, %v2115
  %2118 = vset.pattern.permute.xlu0 3
  %2119 = vperm.xlu0 %2118, %v2031
  %v2120 = vpop.permute.xlu0 %2119
  %2122 = vset.pattern.permute.xlu0 3
  %2123 = vperm.xlu0 %2122, %v2029
  %v2124 = vpop.permute.xlu0 %2123
  %v2126 = vmul.f32 %v2120, %v245
  %v2127 = vmul.f32 %v2124, %v245
  %v2128 = vadd.f32 %v2116, %v2126
  %v2129 = vadd.f32 %v2117, %v2127
  %v2130 = vsub.f32 %v2128, %v2081
  %v2131 = vsub.f32 %v2129, %v2082
  %v2132 = vmul.f32 %v2130, %v88
  %v2133 = vmul.f32 %v2131, %v89
  %2136 = vrot.lane.b32.xlu0 %v2081, 124
  %v2137 = vpop.permute.xlu0 %2136
  %2138 = vrot.lane.b32.xlu0 %v2082, 124
  %v2139 = vpop.permute.xlu0 %2138
  %v2142 = vsub.f32 %v79, %v2137
  %v2143 = vsub.f32 %v80, %v2139
  %2144 = vset.pattern.permute.xlu0 0
  %2145 = vperm.xlu0 %2144, %v2034
  %v2146 = vpop.permute.xlu0 %2145
  %2149 = vset.pattern.permute.xlu0 0
  %2150 = vperm.xlu0 %2149, %v2036
  %v2151 = vpop.permute.xlu0 %2150
  %v2153 = vmul.f32 %v2146, %v273
  %v2154 = vmul.f32 %v2151, %v273
  %2155 = vset.pattern.permute.xlu0 1
  %2156 = vperm.xlu0 %2155, %v2034
  %v2157 = vpop.permute.xlu0 %2156
  %2159 = vset.pattern.permute.xlu0 1
  %2160 = vperm.xlu0 %2159, %v2036
  %v2161 = vpop.permute.xlu0 %2160
  %v2163 = vmul.f32 %v2157, %v284
  %v2164 = vmul.f32 %v2161, %v284
  %v2165 = vadd.f32 %v2153, %v2163
  %v2166 = vadd.f32 %v2154, %v2164
  %2167 = vset.pattern.permute.xlu0 2
  %2168 = vperm.xlu0 %2167, %v2034
  %v2169 = vpop.permute.xlu0 %2168
  %2171 = vset.pattern.permute.xlu0 2
  %2172 = vperm.xlu0 %2171, %v2036
  %v2173 = vpop.permute.xlu0 %2172
  %v2175 = vmul.f32 %v2169, %v297
  %v2176 = vmul.f32 %v2173, %v297
  %v2177 = vadd.f32 %v2165, %v2175
  %v2178 = vadd.f32 %v2166, %v2176
  %2179 = vset.pattern.permute.xlu0 3
  %2180 = vperm.xlu0 %2179, %v2034
  %v2181 = vpop.permute.xlu0 %2180
  %2183 = vset.pattern.permute.xlu0 3
  %2184 = vperm.xlu0 %2183, %v2036
  %v2185 = vpop.permute.xlu0 %2184
  %v2187 = vmul.f32 %v2181, %v310
  %v2188 = vmul.f32 %v2185, %v310
  %v2189 = vadd.f32 %v2177, %v2187
  %v2190 = vadd.f32 %v2178, %v2188
  %2191 = vrot.lane.b32.xlu0 %v2081, 120
  %v2192 = vpop.permute.xlu0 %2191
  %2193 = vrot.lane.b32.xlu0 %v2082, 120
  %v2194 = vpop.permute.xlu0 %2193
  %v2197 = vsub.f32 %v2189, %v2192
  %v2198 = vsub.f32 %v2190, %v2194
  %v2199 = vmul.f32 %v2197, %v94
  %v2200 = vmul.f32 %v2198, %v95
  %v2201 = vld [vmem:[%s9] sm:$0xff]
  %v2202 = vld [vmem:[%s9 + $0x8] sm:$0xff]
  %v2203 = vld [vmem:[%s9 + $0x10] sm:$0xff]
  %v2204 = vld [vmem:[%s9 + $0x18] sm:$0xff]
  %v2205 = vld [vmem:[%s9 + $0x20] sm:$0xff]
  %v2206 = vld [vmem:[%s9 + $0x28] sm:$0xff]
  %v2207 = vld [vmem:[%s9 + $0x30] sm:$0xff]
  %v2208 = vld [vmem:[%s9 + $0x38] sm:$0xff]
  %v2217 = vunpack.c.l.b16 %v2201
  %v2218 = vunpack.c.h.b16 %v2201
  %v2219 = vunpack.c.l.b16 %v2202
  %v2220 = vunpack.c.h.b16 %v2202
  %v2221 = vunpack.c.l.b16 %v2203
  %v2222 = vunpack.c.h.b16 %v2203
  %v2223 = vunpack.c.l.b16 %v2204
  %v2224 = vunpack.c.h.b16 %v2204
  %v2225 = vunpack.c.l.b16 %v2205
  %v2226 = vunpack.c.h.b16 %v2205
  %v2227 = vunpack.c.l.b16 %v2206
  %v2228 = vunpack.c.h.b16 %v2206
  %v2229 = vunpack.c.l.b16 %v2207
  %v2230 = vunpack.c.h.b16 %v2207
  %v2231 = vunpack.c.l.b16 %v2208
  %v2232 = vunpack.c.h.b16 %v2208
  %v2233 = vpack.c.b16 %v2221, %v2217
  %v2234 = vpack.c.b16 %v2222, %v2218
  %v2235 = vpack.c.b16 %v2223, %v2219
  %v2236 = vpack.c.b16 %v2224, %v2220
  %v2237 = vpack.c.b16 %v2229, %v2225
  %v2238 = vpack.c.b16 %v2230, %v2226
  %v2239 = vpack.c.b16 %v2231, %v2227
  %v2240 = vpack.c.b16 %v2232, %v2228
  %2249 = vmatpush.bf16.msra.mxu0 0
  %2250 = vmatpush.bf16.msra.mxu0 0
  %2251 = vmatpush.bf16.msra.mxu0 0
  %2252 = vmatpush.bf16.msra.mxu0 0
  %2253 = vmatpush.bf16.msra.mxu0 0
  %2254 = vmatpush.bf16.msra.mxu0 0
  %2255 = vmatpush.bf16.msra.mxu0 %v2237
  %2256 = vmatpush.bf16.msra.mxu0 %v2233
  %2257 = vmatmul.bf16.gmra.mxu0 %v1919
  %v2258 = vpop.f32.mrf.mxu0
  %v2259 = vadd.f32 0.0, %v2258
  %v2260 = vpop.f32.mrf.mxu0
  %v2261 = vadd.f32 0.0, %v2260
  %2262 = vdwg.mxu0
  %2263 = vmatpush.bf16.msra.mxu0 0
  %2264 = vmatpush.bf16.msra.mxu0 0
  %2265 = vmatpush.bf16.msra.mxu0 0
  %2266 = vmatpush.bf16.msra.mxu0 0
  %2267 = vmatpush.bf16.msra.mxu0 0
  %2268 = vmatpush.bf16.msra.mxu0 0
  %2269 = vmatpush.bf16.msra.mxu0 %v2238
  %2270 = vmatpush.bf16.msra.mxu0 %v2234
  %2271 = vmatmul.bf16.gmra.mxu0 %v1919
  %v2272 = vpop.f32.mrf.mxu0
  %v2273 = vadd.f32 0.0, %v2272
  %v2274 = vpop.f32.mrf.mxu0
  %v2275 = vadd.f32 0.0, %v2274
  %2276 = vdwg.mxu0
  %2277 = vmatpush.bf16.msra.mxu0 0
  %2278 = vmatpush.bf16.msra.mxu0 0
  %2279 = vmatpush.bf16.msra.mxu0 0
  %2280 = vmatpush.bf16.msra.mxu0 0
  %2281 = vmatpush.bf16.msra.mxu0 0
  %2282 = vmatpush.bf16.msra.mxu0 0
  %2283 = vmatpush.bf16.msra.mxu0 %v2239
  %2284 = vmatpush.bf16.msra.mxu0 %v2235
  %2285 = vmatmul.bf16.gmra.mxu0 %v1919
  %v2286 = vpop.f32.mrf.mxu0
  %v2287 = vadd.f32 0.0, %v2286
  %v2288 = vpop.f32.mrf.mxu0
  %v2289 = vadd.f32 0.0, %v2288
  %2290 = vdwg.mxu0
  %2291 = vmatpush.bf16.msra.mxu0 0
  %2292 = vmatpush.bf16.msra.mxu0 0
  %2293 = vmatpush.bf16.msra.mxu0 0
  %2294 = vmatpush.bf16.msra.mxu0 0
  %2295 = vmatpush.bf16.msra.mxu0 0
  %2296 = vmatpush.bf16.msra.mxu0 0
  %2297 = vmatpush.bf16.msra.mxu0 %v2240
  %2298 = vmatpush.bf16.msra.mxu0 %v2236
  %2299 = vmatmul.bf16.gmra.mxu0 %v1919
  %v2300 = vpop.f32.mrf.mxu0
  %v2301 = vadd.f32 0.0, %v2300
  %v2302 = vpop.f32.mrf.mxu0
  %v2303 = vadd.f32 0.0, %v2302
  %2304 = vdwg.mxu0
  %v2307 = vrot.slane %v2273, 7
  %v2308 = vrot.slane %v2275, 7
  %v2309 = vsel %vm137, %v2307, %v2308
  %v2312 = vsel %vm137, %v2273, %v2307
  %v2315 = vrot.slane %v2287, 1
  %v2316 = vrot.slane %v2289, 1
  %v2317 = vsel %vm143, %v2315, %v2316
  %v2320 = vsel %vm143, %v2316, %v2289
  %v2321 = vadd.f32 %v2301, %v113
  %v2322 = vadd.f32 %v2303, %v113
  %v2323 = vld [vmem:[%s8] sm:$0xf]
  %2325 = vset.pattern.permute.xlu0 0
  %2326 = vperm.xlu0 %2325, %v2132
  %v2327 = vpop.permute.xlu0 %2326
  %2330 = vset.pattern.permute.xlu0 0
  %2331 = vperm.xlu0 %2330, %v2133
  %v2332 = vpop.permute.xlu0 %2331
  %v2334 = vperm.slane %v2323, 0
  %v2335 = vmul.f32 %v2327, %v2334
  %v2336 = vmul.f32 %v2332, %v2334
  %2337 = vset.pattern.permute.xlu0 1
  %2338 = vperm.xlu0 %2337, %v2132
  %v2339 = vpop.permute.xlu0 %2338
  %2341 = vset.pattern.permute.xlu0 1
  %2342 = vperm.xlu0 %2341, %v2133
  %v2343 = vpop.permute.xlu0 %2342
  %v2345 = vperm.slane %v2323, 1
  %v2346 = vmul.f32 %v2339, %v2345
  %v2347 = vmul.f32 %v2343, %v2345
  %v2348 = vadd.f32 %v2335, %v2346
  %v2349 = vadd.f32 %v2336, %v2347
  %2350 = vset.pattern.permute.xlu0 2
  %2351 = vperm.xlu0 %2350, %v2132
  %v2352 = vpop.permute.xlu0 %2351
  %2354 = vset.pattern.permute.xlu0 2
  %2355 = vperm.xlu0 %2354, %v2133
  %v2356 = vpop.permute.xlu0 %2355
  %v2358 = vperm.slane %v2323, 2
  %v2359 = vmul.f32 %v2352, %v2358
  %v2360 = vmul.f32 %v2356, %v2358
  %v2361 = vadd.f32 %v2348, %v2359
  %v2362 = vadd.f32 %v2349, %v2360
  %2363 = vset.pattern.permute.xlu0 3
  %2364 = vperm.xlu0 %2363, %v2132
  %v2365 = vpop.permute.xlu0 %2364
  %2367 = vset.pattern.permute.xlu0 3
  %2368 = vperm.xlu0 %2367, %v2133
  %v2369 = vpop.permute.xlu0 %2368
  %v2371 = vperm.slane %v2323, 3
  %v2372 = vmul.f32 %v2365, %v2371
  %v2373 = vmul.f32 %v2369, %v2371
  %v2374 = vadd.f32 %v2361, %v2372
  %v2375 = vadd.f32 %v2362, %v2373
  %v2376 = vld [vmem:[%s505] sm:$0xf]
  %2378 = vset.pattern.permute.xlu0 0
  %2379 = vperm.xlu0 %2378, %v2142
  %v2380 = vpop.permute.xlu0 %2379
  %2383 = vset.pattern.permute.xlu0 0
  %2384 = vperm.xlu0 %2383, %v2143
  %v2385 = vpop.permute.xlu0 %2384
  %v2387 = vperm.slane %v2376, 0
  %v2388 = vmul.f32 %v2380, %v2387
  %v2389 = vmul.f32 %v2385, %v2387
  %2390 = vset.pattern.permute.xlu0 1
  %2391 = vperm.xlu0 %2390, %v2142
  %v2392 = vpop.permute.xlu0 %2391
  %2394 = vset.pattern.permute.xlu0 1
  %2395 = vperm.xlu0 %2394, %v2143
  %v2396 = vpop.permute.xlu0 %2395
  %v2398 = vperm.slane %v2376, 1
  %v2399 = vmul.f32 %v2392, %v2398
  %v2400 = vmul.f32 %v2396, %v2398
  %v2401 = vadd.f32 %v2388, %v2399
  %v2402 = vadd.f32 %v2389, %v2400
  %2403 = vset.pattern.permute.xlu0 2
  %2404 = vperm.xlu0 %2403, %v2142
  %v2405 = vpop.permute.xlu0 %2404
  %2407 = vset.pattern.permute.xlu0 2
  %2408 = vperm.xlu0 %2407, %v2143
  %v2409 = vpop.permute.xlu0 %2408
  %v2411 = vperm.slane %v2376, 2
  %v2412 = vmul.f32 %v2405, %v2411
  %v2413 = vmul.f32 %v2409, %v2411
  %v2414 = vadd.f32 %v2401, %v2412
  %v2415 = vadd.f32 %v2402, %v2413
  %2416 = vset.pattern.permute.xlu0 3
  %2417 = vperm.xlu0 %2416, %v2142
  %v2418 = vpop.permute.xlu0 %2417
  %2420 = vset.pattern.permute.xlu0 3
  %2421 = vperm.xlu0 %2420, %v2143
  %v2422 = vpop.permute.xlu0 %2421
  %v2424 = vperm.slane %v2376, 3
  %v2425 = vmul.f32 %v2418, %v2424
  %v2426 = vmul.f32 %v2422, %v2424
  %v2427 = vadd.f32 %v2414, %v2425
  %v2428 = vadd.f32 %v2415, %v2426
  %v2429 = vadd.f32 %v2374, %v2427
  %v2430 = vadd.f32 %v2375, %v2428
  %v2431 = vld [vmem:[%s561] sm:$0xf]
  %2433 = vset.pattern.permute.xlu0 0
  %2434 = vperm.xlu0 %2433, %v2199
  %v2435 = vpop.permute.xlu0 %2434
  %2438 = vset.pattern.permute.xlu0 0
  %2439 = vperm.xlu0 %2438, %v2200
  %v2440 = vpop.permute.xlu0 %2439
  %v2442 = vperm.slane %v2431, 0
  %v2443 = vmul.f32 %v2435, %v2442
  %v2444 = vmul.f32 %v2440, %v2442
  %2445 = vset.pattern.permute.xlu0 1
  %2446 = vperm.xlu0 %2445, %v2199
  %v2447 = vpop.permute.xlu0 %2446
  %2449 = vset.pattern.permute.xlu0 1
  %2450 = vperm.xlu0 %2449, %v2200
  %v2451 = vpop.permute.xlu0 %2450
  %v2453 = vperm.slane %v2431, 1
  %v2454 = vmul.f32 %v2447, %v2453
  %v2455 = vmul.f32 %v2451, %v2453
  %v2456 = vadd.f32 %v2443, %v2454
  %v2457 = vadd.f32 %v2444, %v2455
  %2458 = vset.pattern.permute.xlu0 2
  %2459 = vperm.xlu0 %2458, %v2199
  %v2460 = vpop.permute.xlu0 %2459
  %2462 = vset.pattern.permute.xlu0 2
  %2463 = vperm.xlu0 %2462, %v2200
  %v2464 = vpop.permute.xlu0 %2463
  %v2466 = vperm.slane %v2431, 2
  %v2467 = vmul.f32 %v2460, %v2466
  %v2468 = vmul.f32 %v2464, %v2466
  %v2469 = vadd.f32 %v2456, %v2467
  %v2470 = vadd.f32 %v2457, %v2468
  %2471 = vset.pattern.permute.xlu0 3
  %2472 = vperm.xlu0 %2471, %v2199
  %v2473 = vpop.permute.xlu0 %2472
  %2475 = vset.pattern.permute.xlu0 3
  %2476 = vperm.xlu0 %2475, %v2200
  %v2477 = vpop.permute.xlu0 %2476
  %v2479 = vperm.slane %v2431, 3
  %v2480 = vmul.f32 %v2473, %v2479
  %v2481 = vmul.f32 %v2477, %v2479
  %v2482 = vadd.f32 %v2469, %v2480
  %v2483 = vadd.f32 %v2470, %v2481
  %v2484 = vadd.f32 %v2429, %v2482
  %v2485 = vadd.f32 %v2430, %v2483
  %v2486 = vadd.f32 %v2259, %v2312
  %v2487 = vadd.f32 %v2261, %v2309
  %v2488 = vadd.f32 %v2486, %v2317
  %v2489 = vadd.f32 %v2487, %v2320
  %v2490 = vadd.f32 %v2488, %v96
  %v2491 = vadd.f32 %v2489, %v97
  %v2492 = vadd.f32 %v2490, %v2484
  %v2493 = vadd.f32 %v2491, %v2485
  %vm2494 = vcmp.gt.f32.partialorder %v2492, 0.0
  %vm2495 = vcmp.gt.f32.partialorder %v2493, 0.0
  %v2496 = vmul.f32 %v2492, 0.01
  %v2497 = vmul.f32 %v2493, 0.01
  %v2498 = vsel %vm2494, %v2492, %v2496
  %v2499 = vsel %vm2495, %v2493, %v2497
  %v2500 = vld [vmem:[%s10] sm:$0xf]
  %v2501 = vld [vmem:[%s10 + $0x4] sm:$0xf]
  %v2502 = vld [vmem:[%s10 + $0x8] sm:$0xf]
  %v2503 = vld [vmem:[%s10 + $0xc] sm:$0xf]
  %v2504 = vld [vmem:[%s10 + $0x10] sm:$0xf]
  %v2505 = vld [vmem:[%s10 + $0x14] sm:$0xf]
  %v2506 = vld [vmem:[%s10 + $0x18] sm:$0xf]
  %v2507 = vld [vmem:[%s10 + $0x1c] sm:$0xf]
  %v2508 = vld [vmem:[%s10 + $0x20] sm:$0xf]
  %v2509 = vld [vmem:[%s10 + $0x24] sm:$0xf]
  %v2510 = vld [vmem:[%s10 + $0x28] sm:$0xf]
  %v2511 = vld [vmem:[%s10 + $0x2c] sm:$0xf]
  %v2512 = vld [vmem:[%s10 + $0x30] sm:$0xf]
  %v2513 = vld [vmem:[%s10 + $0x34] sm:$0xf]
  %v2514 = vld [vmem:[%s10 + $0x38] sm:$0xf]
  %v2515 = vld [vmem:[%s10 + $0x3c] sm:$0xf]
  %v2516 = vpack.c.bf16 %v2499, %v2498
  %v2533 = vunpack.c.l.b16 %v2500
  %v2534 = vunpack.c.l.b16 %v2501
  %v2535 = vunpack.c.l.b16 %v2502
  %v2536 = vunpack.c.l.b16 %v2503
  %v2537 = vunpack.c.l.b16 %v2504
  %v2538 = vunpack.c.l.b16 %v2505
  %v2539 = vunpack.c.l.b16 %v2506
  %v2540 = vunpack.c.l.b16 %v2507
  %v2541 = vunpack.c.l.b16 %v2508
  %v2542 = vunpack.c.l.b16 %v2509
  %v2543 = vunpack.c.l.b16 %v2510
  %v2544 = vunpack.c.l.b16 %v2511
  %v2545 = vunpack.c.l.b16 %v2512
  %v2546 = vunpack.c.l.b16 %v2513
  %v2547 = vunpack.c.l.b16 %v2514
  %v2548 = vunpack.c.l.b16 %v2515
  %v2549 = vpack.c.b16 %v2534, %v2533
  %v2550 = vpack.c.b16 %v2536, %v2535
  %v2551 = vpack.c.b16 %v2538, %v2537
  %v2552 = vpack.c.b16 %v2540, %v2539
  %v2553 = vpack.c.b16 %v2542, %v2541
  %v2554 = vpack.c.b16 %v2544, %v2543
  %v2555 = vpack.c.b16 %v2546, %v2545
  %v2556 = vpack.c.b16 %v2548, %v2547
  %2565 = vmatpush.bf16.msra.mxu0 %v2556
  %2566 = vmatpush.bf16.msra.mxu0 %v2555
  %2567 = vmatpush.bf16.msra.mxu0 %v2554
  %2568 = vmatpush.bf16.msra.mxu0 %v2553
  %2569 = vmatpush.bf16.msra.mxu0 %v2552
  %2570 = vmatpush.bf16.msra.mxu0 %v2551
  %2571 = vmatpush.bf16.msra.mxu0 %v2550
  %2572 = vmatpush.bf16.msra.mxu0 %v2549
  %2573 = vmatmul.bf16.gmra.mxu0 %v2516
  %v2574 = vpop.f32.mrf.mxu0
  %v2575 = vadd.f32 %v105, %v2574
  %v2576 = vpop.f32.mrf.mxu0
  %v2577 = vadd.f32 %v105, %v2576
  %2578 = vdwg.mxu0
  %vm2579 = vcmp.gt.f32.partialorder %v2575, 0.0
  %vm2580 = vcmp.gt.f32.partialorder %v2577, 0.0
  %v2581 = vmul.f32 %v2575, 0.01
  %v2582 = vmul.f32 %v2577, 0.01
  %v2583 = vsel %vm2579, %v2575, %v2581
  %v2584 = vsel %vm2580, %v2577, %v2582
  %v2585 = vmul.f32 %v2583, %v98
  %v2586 = vmul.f32 %v2584, %v99
  %v2587 = vld [vmem:[%s12] sm:$0xf]
  %v2588 = vld [vmem:[%s12 + $0x4] sm:$0xf]
  %v2589 = vld [vmem:[%s12 + $0x8] sm:$0xf]
  %v2590 = vld [vmem:[%s12 + $0xc] sm:$0xf]
  %v2591 = vld [vmem:[%s12 + $0x10] sm:$0xf]
  %v2592 = vld [vmem:[%s12 + $0x14] sm:$0xf]
  %v2593 = vld [vmem:[%s12 + $0x18] sm:$0xf]
  %v2594 = vld [vmem:[%s12 + $0x1c] sm:$0xf]
  %v2595 = vld [vmem:[%s12 + $0x20] sm:$0xf]
  %v2596 = vld [vmem:[%s12 + $0x24] sm:$0xf]
  %v2597 = vld [vmem:[%s12 + $0x28] sm:$0xf]
  %v2598 = vld [vmem:[%s12 + $0x2c] sm:$0xf]
  %v2599 = vld [vmem:[%s12 + $0x30] sm:$0xf]
  %v2600 = vld [vmem:[%s12 + $0x34] sm:$0xf]
  %v2601 = vld [vmem:[%s12 + $0x38] sm:$0xf]
  %v2602 = vld [vmem:[%s12 + $0x3c] sm:$0xf]
  %v2603 = vpack.c.bf16 %v2586, %v2585
  %v2620 = vunpack.c.l.b16 %v2587
  %v2621 = vunpack.c.l.b16 %v2588
  %v2622 = vunpack.c.l.b16 %v2589
  %v2623 = vunpack.c.l.b16 %v2590
  %v2624 = vunpack.c.l.b16 %v2591
  %v2625 = vunpack.c.l.b16 %v2592
  %v2626 = vunpack.c.l.b16 %v2593
  %v2627 = vunpack.c.l.b16 %v2594
  %v2628 = vunpack.c.l.b16 %v2595
  %v2629 = vunpack.c.l.b16 %v2596
  %v2630 = vunpack.c.l.b16 %v2597
  %v2631 = vunpack.c.l.b16 %v2598
  %v2632 = vunpack.c.l.b16 %v2599
  %v2633 = vunpack.c.l.b16 %v2600
  %v2634 = vunpack.c.l.b16 %v2601
  %v2635 = vunpack.c.l.b16 %v2602
  %v2636 = vpack.c.b16 %v2621, %v2620
  %v2637 = vpack.c.b16 %v2623, %v2622
  %v2638 = vpack.c.b16 %v2625, %v2624
  %v2639 = vpack.c.b16 %v2627, %v2626
  %v2640 = vpack.c.b16 %v2629, %v2628
  %v2641 = vpack.c.b16 %v2631, %v2630
  %v2642 = vpack.c.b16 %v2633, %v2632
  %v2643 = vpack.c.b16 %v2635, %v2634
  %2652 = vmatpush.bf16.msra.mxu0 %v2643
  %2653 = vmatpush.bf16.msra.mxu0 %v2642
  %2654 = vmatpush.bf16.msra.mxu0 %v2641
  %2655 = vmatpush.bf16.msra.mxu0 %v2640
  %2656 = vmatpush.bf16.msra.mxu0 %v2639
  %2657 = vmatpush.bf16.msra.mxu0 %v2638
  %2658 = vmatpush.bf16.msra.mxu0 %v2637
  %2659 = vmatpush.bf16.msra.mxu0 %v2636
  %2660 = vmatmul.bf16.gmra.mxu0 %v2603
  %v2661 = vpop.f32.mrf.mxu0
  %v2662 = vadd.f32 0.0, %v2661
  %v2663 = vpop.f32.mrf.mxu0
  %v2664 = vadd.f32 0.0, %v2663
  %2665 = vdwg.mxu0
  %v2666 = vsel %vm374, %v2662, 0.0
  %v2667 = vsel %vm374, %v2664, 0.0
  %v2668 = vadd.f32 %v2666, %v2667
  %v2669 = vrot.slane %v2668, 4
  %v2670 = vadd.f32 %v2668, %v2669
  %v2671 = vrot.slane %v2670, 2
  %v2672 = vadd.f32 %v2670, %v2671
  %v2673 = vrot.slane %v2672, 1
  %v2674 = vadd.f32 %v2672, %v2673
  %v2675 = vmul.f32 %v2674, %v812
  %v2676 = vsub.f32 %v2662, %v2675
  %v2677 = vsub.f32 %v2664, %v2675
  %v2678 = vmul.f32 %v2676, %v2676
  %v2679 = vmul.f32 %v2677, %v2677
  %v2680 = vsel %vm374, %v2678, 0.0
  %v2681 = vsel %vm374, %v2679, 0.0
  %v2682 = vadd.f32 %v2680, %v2681
  %v2683 = vrot.slane %v2682, 4
  %v2684 = vadd.f32 %v2682, %v2683
  %v2685 = vrot.slane %v2684, 2
  %v2686 = vadd.f32 %v2684, %v2685
  %v2687 = vrot.slane %v2686, 1
  %v2688 = vadd.f32 %v2686, %v2687
  %v2689 = vmul.f32 %v2688, %v812
  %v2690 = vmul.f32 %v117, %v2676
  %v2691 = vmul.f32 %v117, %v2677
  %v2692 = vadd.f32 %v2689, 1e-05
  %v2693 = vrsqrt.pop %v2692
  %v2694 = vmul.f32 %v2693, %v2692
  %v2695 = vmul.f32 %v2694, %v2693
  %v2696 = vmul.f32 0.5, %v2695
  %v2697 = vsub.f32 1.5, %v2696
  %v2698 = vmul.f32 %v2693, %v2697
  %vm2699 = vweird.f32 %v2692
  %vm2700 = vweird.f32 %v2693
  %vm2701 = vmor %vm2699, %vm2700
  %v2702 = vsel %vm2701, %v2693, %v2698
  %v2703 = vmul.f32 %v2690, %v2702
  %v2704 = vmul.f32 %v2691, %v2702
  %v2705 = vadd.f32 %v2703, %v121
  %v2706 = vadd.f32 %v2704, %v121
  %vm2707 = vcmp.gt.f32.partialorder %v2705, 0.0
  %vm2708 = vcmp.gt.f32.partialorder %v2706, 0.0
  %v2709 = vmul.f32 %v2705, 0.01
  %v2710 = vmul.f32 %v2706, 0.01
  %v2711 = vsel %vm2707, %v2705, %v2709
  %v2712 = vsel %vm2708, %v2706, %v2710
  %v2713 = vld [vmem:[%s15] sm:$0xf]
  %v2714 = vld [vmem:[%s15 + $0x4] sm:$0xf]
  %v2715 = vld [vmem:[%s15 + $0x8] sm:$0xf]
  %v2716 = vld [vmem:[%s15 + $0xc] sm:$0xf]
  %v2717 = vpack.c.bf16 %v2712, %v2711
  %v2722 = vunpack.c.l.b16 %v2713
  %v2723 = vunpack.c.l.b16 %v2714
  %v2724 = vunpack.c.l.b16 %v2715
  %v2725 = vunpack.c.l.b16 %v2716
  %v2726 = vpack.c.b16 %v2723, %v2722
  %v2727 = vpack.c.b16 %v2725, %v2724
  %v2731 = vsel %vm374, %v2717, 0
  %2733 = vmatpush.bf16.msra.mxu0 0
  %2734 = vmatpush.bf16.msra.mxu0 0
  %2735 = vmatpush.bf16.msra.mxu0 0
  %2736 = vmatpush.bf16.msra.mxu0 0
  %2737 = vmatpush.bf16.msra.mxu0 0
  %2738 = vmatpush.bf16.msra.mxu0 0
  %2739 = vmatpush.bf16.msra.mxu0 %v2727
  %2740 = vmatpush.bf16.msra.mxu0 %v2726
  %2741 = vmatmul.bf16.gmra.mxu0 %v2731
  %v2742 = vpop.f32.mrf.mxu0
  %v2743 = vadd.f32 %v109, %v2742
  %v2744 = vpop.f32.mrf.mxu0
  %v2745 = vadd.f32 %v109, %v2744
  %2746 = vdwg.mxu0
  %v2747 = vadd.f32 %v2743, %v2321
  %v2748 = vadd.f32 %v2745, %v2322
  %v2749 = vxor.u32 %v2747, 2147483648
  %v2750 = vxor.u32 %v2748, 2147483648
  %v2751 = vmul.f32 %v2749, 1.442695
  %v2752 = vpow.pop %v2751
  %v2753 = vmul.f32 %v2750, 1.442695
  %v2754 = vpow.pop %v2753
  %v2755 = vadd.f32 %v2752, 1.0
  %v2756 = vadd.f32 %v2754, 1.0
  %v2757 = vrcp.pop %v2755
  %v2758 = vmul.f32 %v2755, %v2757
  %v2759 = vsub.f32 1.0, %v2758
  %v2760 = vmul.f32 %v2757, %v2759
  %v2761 = vadd.f32 %v2757, %v2760
  %vm2762 = vweird.f32 %v2755
  %vm2763 = vweird.f32 %v2757
  %vm2764 = vmor %vm2762, %vm2763
  %v2765 = vsel %vm2764, %v2757, %v2761
  %v2766 = vand.u32 2147483647, %v2755
  %vm2767 = vcmp.eq.f32.partialorder %v2766, 8.507059e+37
  %v2768 = vand.u32 %v2755, 2147483648
  %v2769 = vor.u32 1.1754944e-38, %v2768
  %v2770 = vsel %vm2767, %v2769, %v2765
  %v2771 = vmul.f32 1.0, %v2770
  %v2772 = vrcp.pop %v2756
  %v2773 = vmul.f32 %v2756, %v2772
  %v2774 = vsub.f32 1.0, %v2773
  %v2775 = vmul.f32 %v2772, %v2774
  %v2776 = vadd.f32 %v2772, %v2775
  %vm2777 = vweird.f32 %v2756
  %vm2778 = vweird.f32 %v2772
  %vm2779 = vmor %vm2777, %vm2778
  %v2780 = vsel %vm2779, %v2772, %v2776
  %v2781 = vand.u32 2147483647, %v2756
  %vm2782 = vcmp.eq.f32.partialorder %v2781, 8.507059e+37
  %v2783 = vand.u32 %v2756, 2147483648
  %v2784 = vor.u32 1.1754944e-38, %v2783
  %v2785 = vsel %vm2782, %v2784, %v2780
  %v2786 = vmul.f32 1.0, %v2785
  %2789 = vrot.lane.b32.xlu0 %v2321, 64
  %v2790 = vpop.permute.xlu0 %2789
  %2791 = vrot.lane.b32.xlu0 %v2322, 64
  %v2792 = vpop.permute.xlu0 %2791
  %v2795 = vmul.f32 %v2771, %v2790
  %v2796 = vmul.f32 %v2786, %v2792
  %2799 = vrot.lane.b32.xlu0 %v2795, 64
  %v2800 = vpop.permute.xlu0 %2799
  %2801 = vrot.lane.b32.xlu0 %v2796, 64
  %v2802 = vpop.permute.xlu0 %2801
  %v2805 = vadd.f32 %v2743, %v2800
  %v2806 = vadd.f32 %v2745, %v2802
  %v2807 = vtanh.pop %v2805
  %v2808 = vtanh.pop %v2806
  %v2809 = vsub.f32 1.0, %v2771
  %v2810 = vsub.f32 1.0, %v2786
  %2813 = vrot.lane.b32.xlu0 %v2807, 96
  %v2814 = vpop.permute.xlu0 %2813
  %2815 = vrot.lane.b32.xlu0 %v2808, 96
  %v2816 = vpop.permute.xlu0 %2815
  %v2819 = vmul.f32 %v2809, %v2814
  %v2820 = vmul.f32 %v2810, %v2816
  %v2821 = vmul.f32 %v2771, %v1896
  %v2822 = vmul.f32 %v2786, %v1897
  %v2823 = vadd.f32 %v2819, %v2821
  %v2824 = vadd.f32 %v2820, %v2822
  %v2825 = vld [vmem:[%s18] sm:$0xf]
  %v2826 = vld [vmem:[%s18 + $0x4] sm:$0xf]
  %v2827 = vld [vmem:[%s18 + $0x8] sm:$0xf]
  %v2828 = vld [vmem:[%s18 + $0xc] sm:$0xf]
  %v2829 = vpack.c.bf16 %v2824, %v2823
  %2831 = vrot.lane.b32.xlu0 %v2829, 96
  %v2832 = vpop.permute.xlu0 %2831
  %v2837 = vunpack.c.l.b16 %v2825
  %v2838 = vunpack.c.l.b16 %v2826
  %v2839 = vunpack.c.l.b16 %v2827
  %v2840 = vunpack.c.l.b16 %v2828
  %v2841 = vpack.c.b16 %v2838, %v2837
  %v2842 = vpack.c.b16 %v2840, %v2839
  %v2846 = vsel %vm374, %v2832, 0
  %2848 = vmatpush.bf16.msra.mxu0 0
  %2849 = vmatpush.bf16.msra.mxu0 0
  %2850 = vmatpush.bf16.msra.mxu0 0
  %2851 = vmatpush.bf16.msra.mxu0 0
  %2852 = vmatpush.bf16.msra.mxu0 0
  %2853 = vmatpush.bf16.msra.mxu0 0
  %2854 = vmatpush.bf16.msra.mxu0 %v2842
  %2855 = vmatpush.bf16.msra.mxu0 %v2841
  %2856 = vmatmul.bf16.gmra.mxu0 %v2846
  %v2857 = vpop.f32.mrf.mxu0
  %v2858 = vadd.f32 0.0, %v2857
  %v2859 = vpop.f32.mrf.mxu0
  %v2860 = vadd.f32 0.0, %v2859
  %2861 = vdwg.mxu0
  %v2862 = vsel %vm374, %v2858, 0.0
  %v2863 = vsel %vm374, %v2860, 0.0
  %v2864 = vadd.f32 %v2862, %v2863
  %v2865 = vrot.slane %v2864, 4
  %v2866 = vadd.f32 %v2864, %v2865
  %v2867 = vrot.slane %v2866, 2
  %v2868 = vadd.f32 %v2866, %v2867
  %v2869 = vrot.slane %v2868, 1
  %v2870 = vadd.f32 %v2868, %v2869
  %v2871 = vmul.f32 %v2870, %v812
  %v2872 = vsub.f32 %v2858, %v2871
  %v2873 = vsub.f32 %v2860, %v2871
  %v2874 = vmul.f32 %v2872, %v2872
  %v2875 = vmul.f32 %v2873, %v2873
  %v2876 = vsel %vm374, %v2874, 0.0
  %v2877 = vsel %vm374, %v2875, 0.0
  %v2878 = vadd.f32 %v2876, %v2877
  %v2879 = vrot.slane %v2878, 4
  %v2880 = vadd.f32 %v2878, %v2879
  %v2881 = vrot.slane %v2880, 2
  %v2882 = vadd.f32 %v2880, %v2881
  %v2883 = vrot.slane %v2882, 1
  %v2884 = vadd.f32 %v2882, %v2883
  %v2885 = vmul.f32 %v2884, %v812
  %v2886 = vmul.f32 %v125, %v2872
  %v2887 = vmul.f32 %v125, %v2873
  %v2888 = vadd.f32 %v2885, 1e-05
  %v2889 = vrsqrt.pop %v2888
  %v2890 = vmul.f32 %v2889, %v2888
  %v2891 = vmul.f32 %v2890, %v2889
  %v2892 = vmul.f32 0.5, %v2891
  %v2893 = vsub.f32 1.5, %v2892
  %v2894 = vmul.f32 %v2889, %v2893
  %vm2895 = vweird.f32 %v2888
  %vm2896 = vweird.f32 %v2889
  %vm2897 = vmor %vm2895, %vm2896
  %v2898 = vsel %vm2897, %v2889, %v2894
  %v2899 = vmul.f32 %v2886, %v2898
  %v2900 = vmul.f32 %v2887, %v2898
  %v2901 = vadd.f32 %v2899, %v129
  %v2902 = vadd.f32 %v2900, %v129
  %v2903 = vmax.f32 %v2901, 0.0
  %v2904 = vmax.f32 %v2902, 0.0
  %v2905 = vld [vmem:[%s21] sm:$0xf]
  %v2906 = vld [vmem:[%s21 + $0x4] sm:$0xf]
  %v2907 = vld [vmem:[%s21 + $0x8] sm:$0xf]
  %v2908 = vld [vmem:[%s21 + $0xc] sm:$0xf]
  %v2909 = vpack.c.bf16 %v2904, %v2903
  %v2914 = vunpack.c.l.b16 %v2905
  %v2915 = vunpack.c.l.b16 %v2906
  %v2916 = vunpack.c.l.b16 %v2907
  %v2917 = vunpack.c.l.b16 %v2908
  %v2918 = vpack.c.b16 %v2915, %v2914
  %v2919 = vpack.c.b16 %v2917, %v2916
  %v2923 = vsel %vm374, %v2909, 0
  %2925 = vmatpush.bf16.msra.mxu0 0
  %2926 = vmatpush.bf16.msra.mxu0 0
  %2927 = vmatpush.bf16.msra.mxu0 0
  %2928 = vmatpush.bf16.msra.mxu0 0
  %2929 = vmatpush.bf16.msra.mxu0 0
  %2930 = vmatpush.bf16.msra.mxu0 0
  %2931 = vmatpush.bf16.msra.mxu0 %v2919
  %2932 = vmatpush.bf16.msra.mxu0 %v2918
  %2933 = vmatmul.bf16.gmra.mxu0 %v2923
  %v2934 = vpop.f32.mrf.mxu0
  %v2935 = vadd.f32 %v133, %v2934
  %v2936 = vpop.f32.mrf.mxu0
  %v2937 = vadd.f32 %v133, %v2936
  %2938 = vdwg.mxu0
  %v2939 = vadd.f32 %v2935, %v2132
  %v2940 = vadd.f32 %v2937, %v2133
  %v2941 = vadd.f32 %v2939, %v2142
  %v2942 = vadd.f32 %v2940, %v2143
  %v2943 = vadd.f32 %v2941, %v2199
  %v2944 = vadd.f32 %v2942, %v2200
  %v2945 = vmul.f32 %v2943, 0.005
  %v2946 = vmul.f32 %v2944, 0.005
  %v2947 = vadd.f32 %v2020, %v2945
  %v2948 = vadd.f32 %v2021, %v2946
  %s2949 = scalar_lea.vmem %s23, 32
  %2950 = vst.msk [vmem:[%s2949] sm:$0xff] %vm1095, %v2947
  %2951 = vst.msk [vmem:[%s2949 + $0x8] sm:$0xff] %vm1095, %v2948
  %v2954 = vrot.slane %v2947, 7
  %v2955 = vrot.slane %v2948, 7
  %v2956 = vsel %vm137, %v2954, %v2955
  %v2958 = vsel %vm137, %v2947, %v2954
  %v2959 = vrot.slane %v2947, 1
  %v2960 = vrot.slane %v2948, 1
  %v2961 = vsel %vm143, %v2959, %v2960
  %v2963 = vsel %vm143, %v2960, %v2948
  %2964 = vset.pattern.permute.xlu0 0
  %2965 = vperm.xlu0 %2964, %v2947
  %v2966 = vpop.permute.xlu0 %2965
  %2968 = vset.pattern.permute.xlu0 0
  %2969 = vperm.xlu0 %2968, %v2948
  %v2970 = vpop.permute.xlu0 %2969
  %v2972 = vmul.f32 %v2966, %v157
  %v2973 = vmul.f32 %v2970, %v157
  %2974 = vset.pattern.permute.xlu0 1
  %2975 = vperm.xlu0 %2974, %v2947
  %v2976 = vpop.permute.xlu0 %2975
  %2978 = vset.pattern.permute.xlu0 1
  %2979 = vperm.xlu0 %2978, %v2948
  %v2980 = vpop.permute.xlu0 %2979
  %v2982 = vmul.f32 %v2976, %v168
  %v2983 = vmul.f32 %v2980, %v168
  %v2984 = vadd.f32 %v2972, %v2982
  %v2985 = vadd.f32 %v2973, %v2983
  %2986 = vset.pattern.permute.xlu0 2
  %2987 = vperm.xlu0 %2986, %v2947
  %v2988 = vpop.permute.xlu0 %2987
  %2990 = vset.pattern.permute.xlu0 2
  %2991 = vperm.xlu0 %2990, %v2948
  %v2992 = vpop.permute.xlu0 %2991
  %v2994 = vmul.f32 %v2988, %v181
  %v2995 = vmul.f32 %v2992, %v181
  %v2996 = vadd.f32 %v2984, %v2994
  %v2997 = vadd.f32 %v2985, %v2995
  %2998 = vset.pattern.permute.xlu0 3
  %2999 = vperm.xlu0 %2998, %v2947
  %v3000 = vpop.permute.xlu0 %2999
  %3002 = vset.pattern.permute.xlu0 3
  %3003 = vperm.xlu0 %3002, %v2948
  %v3004 = vpop.permute.xlu0 %3003
  %v3006 = vmul.f32 %v3000, %v194
  %v3007 = vmul.f32 %v3004, %v194
  %v3008 = vadd.f32 %v2996, %v3006
  %v3009 = vadd.f32 %v2997, %v3007
  %3011 = vset.pattern.permute.xlu0 0
  %3012 = vperm.xlu0 %3011, %v2958
  %v3013 = vpop.permute.xlu0 %3012
  %3015 = vset.pattern.permute.xlu0 0
  %3016 = vperm.xlu0 %3015, %v2956
  %v3017 = vpop.permute.xlu0 %3016
  %v3019 = vmul.f32 %v3013, %v208
  %v3020 = vmul.f32 %v3017, %v208
  %3021 = vset.pattern.permute.xlu0 1
  %3022 = vperm.xlu0 %3021, %v2958
  %v3023 = vpop.permute.xlu0 %3022
  %3025 = vset.pattern.permute.xlu0 1
  %3026 = vperm.xlu0 %3025, %v2956
  %v3027 = vpop.permute.xlu0 %3026
  %v3029 = vmul.f32 %v3023, %v219
  %v3030 = vmul.f32 %v3027, %v219
  %v3031 = vadd.f32 %v3019, %v3029
  %v3032 = vadd.f32 %v3020, %v3030
  %3033 = vset.pattern.permute.xlu0 2
  %3034 = vperm.xlu0 %3033, %v2958
  %v3035 = vpop.permute.xlu0 %3034
  %3037 = vset.pattern.permute.xlu0 2
  %3038 = vperm.xlu0 %3037, %v2956
  %v3039 = vpop.permute.xlu0 %3038
  %v3041 = vmul.f32 %v3035, %v232
  %v3042 = vmul.f32 %v3039, %v232
  %v3043 = vadd.f32 %v3031, %v3041
  %v3044 = vadd.f32 %v3032, %v3042
  %3045 = vset.pattern.permute.xlu0 3
  %3046 = vperm.xlu0 %3045, %v2958
  %v3047 = vpop.permute.xlu0 %3046
  %3049 = vset.pattern.permute.xlu0 3
  %3050 = vperm.xlu0 %3049, %v2956
  %v3051 = vpop.permute.xlu0 %3050
  %v3053 = vmul.f32 %v3047, %v245
  %v3054 = vmul.f32 %v3051, %v245
  %v3055 = vadd.f32 %v3043, %v3053
  %v3056 = vadd.f32 %v3044, %v3054
  %v3057 = vsub.f32 %v3055, %v3008
  %v3058 = vsub.f32 %v3056, %v3009
  %v3059 = vmul.f32 %v3057, %v88
  %v3060 = vmul.f32 %v3058, %v89
  %3063 = vrot.lane.b32.xlu0 %v3008, 124
  %v3064 = vpop.permute.xlu0 %3063
  %3065 = vrot.lane.b32.xlu0 %v3009, 124
  %v3066 = vpop.permute.xlu0 %3065
  %v3069 = vsub.f32 %v79, %v3064
  %v3070 = vsub.f32 %v80, %v3066
  %3071 = vset.pattern.permute.xlu0 0
  %3072 = vperm.xlu0 %3071, %v2961
  %v3073 = vpop.permute.xlu0 %3072
  %3076 = vset.pattern.permute.xlu0 0
  %3077 = vperm.xlu0 %3076, %v2963
  %v3078 = vpop.permute.xlu0 %3077
  %v3080 = vmul.f32 %v3073, %v273
  %v3081 = vmul.f32 %v3078, %v273
  %3082 = vset.pattern.permute.xlu0 1
  %3083 = vperm.xlu0 %3082, %v2961
  %v3084 = vpop.permute.xlu0 %3083
  %3086 = vset.pattern.permute.xlu0 1
  %3087 = vperm.xlu0 %3086, %v2963
  %v3088 = vpop.permute.xlu0 %3087
  %v3090 = vmul.f32 %v3084, %v284
  %v3091 = vmul.f32 %v3088, %v284
  %v3092 = vadd.f32 %v3080, %v3090
  %v3093 = vadd.f32 %v3081, %v3091
  %3094 = vset.pattern.permute.xlu0 2
  %3095 = vperm.xlu0 %3094, %v2961
  %v3096 = vpop.permute.xlu0 %3095
  %3098 = vset.pattern.permute.xlu0 2
  %3099 = vperm.xlu0 %3098, %v2963
  %v3100 = vpop.permute.xlu0 %3099
  %v3102 = vmul.f32 %v3096, %v297
  %v3103 = vmul.f32 %v3100, %v297
  %v3104 = vadd.f32 %v3092, %v3102
  %v3105 = vadd.f32 %v3093, %v3103
  %3106 = vset.pattern.permute.xlu0 3
  %3107 = vperm.xlu0 %3106, %v2961
  %v3108 = vpop.permute.xlu0 %3107
  %3110 = vset.pattern.permute.xlu0 3
  %3111 = vperm.xlu0 %3110, %v2963
  %v3112 = vpop.permute.xlu0 %3111
  %v3114 = vmul.f32 %v3108, %v310
  %v3115 = vmul.f32 %v3112, %v310
  %v3116 = vadd.f32 %v3104, %v3114
  %v3117 = vadd.f32 %v3105, %v3115
  %3118 = vrot.lane.b32.xlu0 %v3008, 120
  %v3119 = vpop.permute.xlu0 %3118
  %3120 = vrot.lane.b32.xlu0 %v3009, 120
  %v3121 = vpop.permute.xlu0 %3120
  %v3124 = vsub.f32 %v3116, %v3119
  %v3125 = vsub.f32 %v3117, %v3121
  %v3126 = vmul.f32 %v3124, %v94
  %v3127 = vmul.f32 %v3125, %v95
  %v3128 = vld [vmem:[%s9] sm:$0xff]
  %v3129 = vld [vmem:[%s9 + $0x8] sm:$0xff]
  %v3130 = vld [vmem:[%s9 + $0x10] sm:$0xff]
  %v3131 = vld [vmem:[%s9 + $0x18] sm:$0xff]
  %v3132 = vld [vmem:[%s9 + $0x20] sm:$0xff]
  %v3133 = vld [vmem:[%s9 + $0x28] sm:$0xff]
  %v3134 = vld [vmem:[%s9 + $0x30] sm:$0xff]
  %v3135 = vld [vmem:[%s9 + $0x38] sm:$0xff]
  %v3144 = vunpack.c.l.b16 %v3128
  %v3145 = vunpack.c.h.b16 %v3128
  %v3146 = vunpack.c.l.b16 %v3129
  %v3147 = vunpack.c.h.b16 %v3129
  %v3148 = vunpack.c.l.b16 %v3130
  %v3149 = vunpack.c.h.b16 %v3130
  %v3150 = vunpack.c.l.b16 %v3131
  %v3151 = vunpack.c.h.b16 %v3131
  %v3152 = vunpack.c.l.b16 %v3132
  %v3153 = vunpack.c.h.b16 %v3132
  %v3154 = vunpack.c.l.b16 %v3133
  %v3155 = vunpack.c.h.b16 %v3133
  %v3156 = vunpack.c.l.b16 %v3134
  %v3157 = vunpack.c.h.b16 %v3134
  %v3158 = vunpack.c.l.b16 %v3135
  %v3159 = vunpack.c.h.b16 %v3135
  %v3160 = vpack.c.b16 %v3148, %v3144
  %v3161 = vpack.c.b16 %v3149, %v3145
  %v3162 = vpack.c.b16 %v3150, %v3146
  %v3163 = vpack.c.b16 %v3151, %v3147
  %v3164 = vpack.c.b16 %v3156, %v3152
  %v3165 = vpack.c.b16 %v3157, %v3153
  %v3166 = vpack.c.b16 %v3158, %v3154
  %v3167 = vpack.c.b16 %v3159, %v3155
  %3176 = vmatpush.bf16.msra.mxu0 0
  %3177 = vmatpush.bf16.msra.mxu0 0
  %3178 = vmatpush.bf16.msra.mxu0 0
  %3179 = vmatpush.bf16.msra.mxu0 0
  %3180 = vmatpush.bf16.msra.mxu0 0
  %3181 = vmatpush.bf16.msra.mxu0 0
  %3182 = vmatpush.bf16.msra.mxu0 %v3164
  %3183 = vmatpush.bf16.msra.mxu0 %v3160
  %3184 = vmatmul.bf16.gmra.mxu0 %v2846
  %v3185 = vpop.f32.mrf.mxu0
  %v3186 = vadd.f32 0.0, %v3185
  %v3187 = vpop.f32.mrf.mxu0
  %v3188 = vadd.f32 0.0, %v3187
  %3189 = vdwg.mxu0
  %3190 = vmatpush.bf16.msra.mxu0 0
  %3191 = vmatpush.bf16.msra.mxu0 0
  %3192 = vmatpush.bf16.msra.mxu0 0
  %3193 = vmatpush.bf16.msra.mxu0 0
  %3194 = vmatpush.bf16.msra.mxu0 0
  %3195 = vmatpush.bf16.msra.mxu0 0
  %3196 = vmatpush.bf16.msra.mxu0 %v3165
  %3197 = vmatpush.bf16.msra.mxu0 %v3161
  %3198 = vmatmul.bf16.gmra.mxu0 %v2846
  %v3199 = vpop.f32.mrf.mxu0
  %v3200 = vadd.f32 0.0, %v3199
  %v3201 = vpop.f32.mrf.mxu0
  %v3202 = vadd.f32 0.0, %v3201
  %3203 = vdwg.mxu0
  %3204 = vmatpush.bf16.msra.mxu0 0
  %3205 = vmatpush.bf16.msra.mxu0 0
  %3206 = vmatpush.bf16.msra.mxu0 0
  %3207 = vmatpush.bf16.msra.mxu0 0
  %3208 = vmatpush.bf16.msra.mxu0 0
  %3209 = vmatpush.bf16.msra.mxu0 0
  %3210 = vmatpush.bf16.msra.mxu0 %v3166
  %3211 = vmatpush.bf16.msra.mxu0 %v3162
  %3212 = vmatmul.bf16.gmra.mxu0 %v2846
  %v3213 = vpop.f32.mrf.mxu0
  %v3214 = vadd.f32 0.0, %v3213
  %v3215 = vpop.f32.mrf.mxu0
  %v3216 = vadd.f32 0.0, %v3215
  %3217 = vdwg.mxu0
  %3218 = vmatpush.bf16.msra.mxu0 0
  %3219 = vmatpush.bf16.msra.mxu0 0
  %3220 = vmatpush.bf16.msra.mxu0 0
  %3221 = vmatpush.bf16.msra.mxu0 0
  %3222 = vmatpush.bf16.msra.mxu0 0
  %3223 = vmatpush.bf16.msra.mxu0 0
  %3224 = vmatpush.bf16.msra.mxu0 %v3167
  %3225 = vmatpush.bf16.msra.mxu0 %v3163
  %3226 = vmatmul.bf16.gmra.mxu0 %v2846
  %v3227 = vpop.f32.mrf.mxu0
  %v3228 = vadd.f32 0.0, %v3227
  %v3229 = vpop.f32.mrf.mxu0
  %v3230 = vadd.f32 0.0, %v3229
  %3231 = vdwg.mxu0
  %v3234 = vrot.slane %v3200, 7
  %v3235 = vrot.slane %v3202, 7
  %v3236 = vsel %vm137, %v3234, %v3235
  %v3239 = vsel %vm137, %v3200, %v3234
  %v3242 = vrot.slane %v3214, 1
  %v3243 = vrot.slane %v3216, 1
  %v3244 = vsel %vm143, %v3242, %v3243
  %v3247 = vsel %vm143, %v3243, %v3216
  %v3248 = vadd.f32 %v3228, %v113
  %v3249 = vadd.f32 %v3230, %v113
  %v3250 = vld [vmem:[%s8] sm:$0xf]
  %3252 = vset.pattern.permute.xlu0 0
  %3253 = vperm.xlu0 %3252, %v3059
  %v3254 = vpop.permute.xlu0 %3253
  %3257 = vset.pattern.permute.xlu0 0
  %3258 = vperm.xlu0 %3257, %v3060
  %v3259 = vpop.permute.xlu0 %3258
  %v3261 = vperm.slane %v3250, 0
  %v3262 = vmul.f32 %v3254, %v3261
  %v3263 = vmul.f32 %v3259, %v3261
  %3264 = vset.pattern.permute.xlu0 1
  %3265 = vperm.xlu0 %3264, %v3059
  %v3266 = vpop.permute.xlu0 %3265
  %3268 = vset.pattern.permute.xlu0 1
  %3269 = vperm.xlu0 %3268, %v3060
  %v3270 = vpop.permute.xlu0 %3269
  %v3272 = vperm.slane %v3250, 1
  %v3273 = vmul.f32 %v3266, %v3272
  %v3274 = vmul.f32 %v3270, %v3272
  %v3275 = vadd.f32 %v3262, %v3273
  %v3276 = vadd.f32 %v3263, %v3274
  %3277 = vset.pattern.permute.xlu0 2
  %3278 = vperm.xlu0 %3277, %v3059
  %v3279 = vpop.permute.xlu0 %3278
  %3281 = vset.pattern.permute.xlu0 2
  %3282 = vperm.xlu0 %3281, %v3060
  %v3283 = vpop.permute.xlu0 %3282
  %v3285 = vperm.slane %v3250, 2
  %v3286 = vmul.f32 %v3279, %v3285
  %v3287 = vmul.f32 %v3283, %v3285
  %v3288 = vadd.f32 %v3275, %v3286
  %v3289 = vadd.f32 %v3276, %v3287
  %3290 = vset.pattern.permute.xlu0 3
  %3291 = vperm.xlu0 %3290, %v3059
  %v3292 = vpop.permute.xlu0 %3291
  %3294 = vset.pattern.permute.xlu0 3
  %3295 = vperm.xlu0 %3294, %v3060
  %v3296 = vpop.permute.xlu0 %3295
  %v3298 = vperm.slane %v3250, 3
  %v3299 = vmul.f32 %v3292, %v3298
  %v3300 = vmul.f32 %v3296, %v3298
  %v3301 = vadd.f32 %v3288, %v3299
  %v3302 = vadd.f32 %v3289, %v3300
  %v3303 = vld [vmem:[%s505] sm:$0xf]
  %3305 = vset.pattern.permute.xlu0 0
  %3306 = vperm.xlu0 %3305, %v3069
  %v3307 = vpop.permute.xlu0 %3306
  %3310 = vset.pattern.permute.xlu0 0
  %3311 = vperm.xlu0 %3310, %v3070
  %v3312 = vpop.permute.xlu0 %3311
  %v3314 = vperm.slane %v3303, 0
  %v3315 = vmul.f32 %v3307, %v3314
  %v3316 = vmul.f32 %v3312, %v3314
  %3317 = vset.pattern.permute.xlu0 1
  %3318 = vperm.xlu0 %3317, %v3069
  %v3319 = vpop.permute.xlu0 %3318
  %3321 = vset.pattern.permute.xlu0 1
  %3322 = vperm.xlu0 %3321, %v3070
  %v3323 = vpop.permute.xlu0 %3322
  %v3325 = vperm.slane %v3303, 1
  %v3326 = vmul.f32 %v3319, %v3325
  %v3327 = vmul.f32 %v3323, %v3325
  %v3328 = vadd.f32 %v3315, %v3326
  %v3329 = vadd.f32 %v3316, %v3327
  %3330 = vset.pattern.permute.xlu0 2
  %3331 = vperm.xlu0 %3330, %v3069
  %v3332 = vpop.permute.xlu0 %3331
  %3334 = vset.pattern.permute.xlu0 2
  %3335 = vperm.xlu0 %3334, %v3070
  %v3336 = vpop.permute.xlu0 %3335
  %v3338 = vperm.slane %v3303, 2
  %v3339 = vmul.f32 %v3332, %v3338
  %v3340 = vmul.f32 %v3336, %v3338
  %v3341 = vadd.f32 %v3328, %v3339
  %v3342 = vadd.f32 %v3329, %v3340
  %3343 = vset.pattern.permute.xlu0 3
  %3344 = vperm.xlu0 %3343, %v3069
  %v3345 = vpop.permute.xlu0 %3344
  %3347 = vset.pattern.permute.xlu0 3
  %3348 = vperm.xlu0 %3347, %v3070
  %v3349 = vpop.permute.xlu0 %3348
  %v3351 = vperm.slane %v3303, 3
  %v3352 = vmul.f32 %v3345, %v3351
  %v3353 = vmul.f32 %v3349, %v3351
  %v3354 = vadd.f32 %v3341, %v3352
  %v3355 = vadd.f32 %v3342, %v3353
  %v3356 = vadd.f32 %v3301, %v3354
  %v3357 = vadd.f32 %v3302, %v3355
  %v3358 = vld [vmem:[%s561] sm:$0xf]
  %3360 = vset.pattern.permute.xlu0 0
  %3361 = vperm.xlu0 %3360, %v3126
  %v3362 = vpop.permute.xlu0 %3361
  %3365 = vset.pattern.permute.xlu0 0
  %3366 = vperm.xlu0 %3365, %v3127
  %v3367 = vpop.permute.xlu0 %3366
  %v3369 = vperm.slane %v3358, 0
  %v3370 = vmul.f32 %v3362, %v3369
  %v3371 = vmul.f32 %v3367, %v3369
  %3372 = vset.pattern.permute.xlu0 1
  %3373 = vperm.xlu0 %3372, %v3126
  %v3374 = vpop.permute.xlu0 %3373
  %3376 = vset.pattern.permute.xlu0 1
  %3377 = vperm.xlu0 %3376, %v3127
  %v3378 = vpop.permute.xlu0 %3377
  %v3380 = vperm.slane %v3358, 1
  %v3381 = vmul.f32 %v3374, %v3380
  %v3382 = vmul.f32 %v3378, %v3380
  %v3383 = vadd.f32 %v3370, %v3381
  %v3384 = vadd.f32 %v3371, %v3382
  %3385 = vset.pattern.permute.xlu0 2
  %3386 = vperm.xlu0 %3385, %v3126
  %v3387 = vpop.permute.xlu0 %3386
  %3389 = vset.pattern.permute.xlu0 2
  %3390 = vperm.xlu0 %3389, %v3127
  %v3391 = vpop.permute.xlu0 %3390
  %v3393 = vperm.slane %v3358, 2
  %v3394 = vmul.f32 %v3387, %v3393
  %v3395 = vmul.f32 %v3391, %v3393
  %v3396 = vadd.f32 %v3383, %v3394
  %v3397 = vadd.f32 %v3384, %v3395
  %3398 = vset.pattern.permute.xlu0 3
  %3399 = vperm.xlu0 %3398, %v3126
  %v3400 = vpop.permute.xlu0 %3399
  %3402 = vset.pattern.permute.xlu0 3
  %3403 = vperm.xlu0 %3402, %v3127
  %v3404 = vpop.permute.xlu0 %3403
  %v3406 = vperm.slane %v3358, 3
  %v3407 = vmul.f32 %v3400, %v3406
  %v3408 = vmul.f32 %v3404, %v3406
  %v3409 = vadd.f32 %v3396, %v3407
  %v3410 = vadd.f32 %v3397, %v3408
  %v3411 = vadd.f32 %v3356, %v3409
  %v3412 = vadd.f32 %v3357, %v3410
  %v3413 = vadd.f32 %v3186, %v3239
  %v3414 = vadd.f32 %v3188, %v3236
  %v3415 = vadd.f32 %v3413, %v3244
  %v3416 = vadd.f32 %v3414, %v3247
  %v3417 = vadd.f32 %v3415, %v96
  %v3418 = vadd.f32 %v3416, %v97
  %v3419 = vadd.f32 %v3417, %v3411
  %v3420 = vadd.f32 %v3418, %v3412
  %vm3421 = vcmp.gt.f32.partialorder %v3419, 0.0
  %vm3422 = vcmp.gt.f32.partialorder %v3420, 0.0
  %v3423 = vmul.f32 %v3419, 0.01
  %v3424 = vmul.f32 %v3420, 0.01
  %v3425 = vsel %vm3421, %v3419, %v3423
  %v3426 = vsel %vm3422, %v3420, %v3424
  %v3427 = vld [vmem:[%s10] sm:$0xf]
  %v3428 = vld [vmem:[%s10 + $0x4] sm:$0xf]
  %v3429 = vld [vmem:[%s10 + $0x8] sm:$0xf]
  %v3430 = vld [vmem:[%s10 + $0xc] sm:$0xf]
  %v3431 = vld [vmem:[%s10 + $0x10] sm:$0xf]
  %v3432 = vld [vmem:[%s10 + $0x14] sm:$0xf]
  %v3433 = vld [vmem:[%s10 + $0x18] sm:$0xf]
  %v3434 = vld [vmem:[%s10 + $0x1c] sm:$0xf]
  %v3435 = vld [vmem:[%s10 + $0x20] sm:$0xf]
  %v3436 = vld [vmem:[%s10 + $0x24] sm:$0xf]
  %v3437 = vld [vmem:[%s10 + $0x28] sm:$0xf]
  %v3438 = vld [vmem:[%s10 + $0x2c] sm:$0xf]
  %v3439 = vld [vmem:[%s10 + $0x30] sm:$0xf]
  %v3440 = vld [vmem:[%s10 + $0x34] sm:$0xf]
  %v3441 = vld [vmem:[%s10 + $0x38] sm:$0xf]
  %v3442 = vld [vmem:[%s10 + $0x3c] sm:$0xf]
  %v3443 = vpack.c.bf16 %v3426, %v3425
  %v3460 = vunpack.c.l.b16 %v3427
  %v3461 = vunpack.c.l.b16 %v3428
  %v3462 = vunpack.c.l.b16 %v3429
  %v3463 = vunpack.c.l.b16 %v3430
  %v3464 = vunpack.c.l.b16 %v3431
  %v3465 = vunpack.c.l.b16 %v3432
  %v3466 = vunpack.c.l.b16 %v3433
  %v3467 = vunpack.c.l.b16 %v3434
  %v3468 = vunpack.c.l.b16 %v3435
  %v3469 = vunpack.c.l.b16 %v3436
  %v3470 = vunpack.c.l.b16 %v3437
  %v3471 = vunpack.c.l.b16 %v3438
  %v3472 = vunpack.c.l.b16 %v3439
  %v3473 = vunpack.c.l.b16 %v3440
  %v3474 = vunpack.c.l.b16 %v3441
  %v3475 = vunpack.c.l.b16 %v3442
  %v3476 = vpack.c.b16 %v3461, %v3460
  %v3477 = vpack.c.b16 %v3463, %v3462
  %v3478 = vpack.c.b16 %v3465, %v3464
  %v3479 = vpack.c.b16 %v3467, %v3466
  %v3480 = vpack.c.b16 %v3469, %v3468
  %v3481 = vpack.c.b16 %v3471, %v3470
  %v3482 = vpack.c.b16 %v3473, %v3472
  %v3483 = vpack.c.b16 %v3475, %v3474
  %3492 = vmatpush.bf16.msra.mxu0 %v3483
  %3493 = vmatpush.bf16.msra.mxu0 %v3482
  %3494 = vmatpush.bf16.msra.mxu0 %v3481
  %3495 = vmatpush.bf16.msra.mxu0 %v3480
  %3496 = vmatpush.bf16.msra.mxu0 %v3479
  %3497 = vmatpush.bf16.msra.mxu0 %v3478
  %3498 = vmatpush.bf16.msra.mxu0 %v3477
  %3499 = vmatpush.bf16.msra.mxu0 %v3476
  %3500 = vmatmul.bf16.gmra.mxu0 %v3443
  %v3501 = vpop.f32.mrf.mxu0
  %v3502 = vadd.f32 %v105, %v3501
  %v3503 = vpop.f32.mrf.mxu0
  %v3504 = vadd.f32 %v105, %v3503
  %3505 = vdwg.mxu0
  %vm3506 = vcmp.gt.f32.partialorder %v3502, 0.0
  %vm3507 = vcmp.gt.f32.partialorder %v3504, 0.0
  %v3508 = vmul.f32 %v3502, 0.01
  %v3509 = vmul.f32 %v3504, 0.01
  %v3510 = vsel %vm3506, %v3502, %v3508
  %v3511 = vsel %vm3507, %v3504, %v3509
  %v3512 = vmul.f32 %v3510, %v98
  %v3513 = vmul.f32 %v3511, %v99
  %v3514 = vld [vmem:[%s12] sm:$0xf]
  %v3515 = vld [vmem:[%s12 + $0x4] sm:$0xf]
  %v3516 = vld [vmem:[%s12 + $0x8] sm:$0xf]
  %v3517 = vld [vmem:[%s12 + $0xc] sm:$0xf]
  %v3518 = vld [vmem:[%s12 + $0x10] sm:$0xf]
  %v3519 = vld [vmem:[%s12 + $0x14] sm:$0xf]
  %v3520 = vld [vmem:[%s12 + $0x18] sm:$0xf]
  %v3521 = vld [vmem:[%s12 + $0x1c] sm:$0xf]
  %v3522 = vld [vmem:[%s12 + $0x20] sm:$0xf]
  %v3523 = vld [vmem:[%s12 + $0x24] sm:$0xf]
  %v3524 = vld [vmem:[%s12 + $0x28] sm:$0xf]
  %v3525 = vld [vmem:[%s12 + $0x2c] sm:$0xf]
  %v3526 = vld [vmem:[%s12 + $0x30] sm:$0xf]
  %v3527 = vld [vmem:[%s12 + $0x34] sm:$0xf]
  %v3528 = vld [vmem:[%s12 + $0x38] sm:$0xf]
  %v3529 = vld [vmem:[%s12 + $0x3c] sm:$0xf]
  %v3530 = vpack.c.bf16 %v3513, %v3512
  %v3547 = vunpack.c.l.b16 %v3514
  %v3548 = vunpack.c.l.b16 %v3515
  %v3549 = vunpack.c.l.b16 %v3516
  %v3550 = vunpack.c.l.b16 %v3517
  %v3551 = vunpack.c.l.b16 %v3518
  %v3552 = vunpack.c.l.b16 %v3519
  %v3553 = vunpack.c.l.b16 %v3520
  %v3554 = vunpack.c.l.b16 %v3521
  %v3555 = vunpack.c.l.b16 %v3522
  %v3556 = vunpack.c.l.b16 %v3523
  %v3557 = vunpack.c.l.b16 %v3524
  %v3558 = vunpack.c.l.b16 %v3525
  %v3559 = vunpack.c.l.b16 %v3526
  %v3560 = vunpack.c.l.b16 %v3527
  %v3561 = vunpack.c.l.b16 %v3528
  %v3562 = vunpack.c.l.b16 %v3529
  %v3563 = vpack.c.b16 %v3548, %v3547
  %v3564 = vpack.c.b16 %v3550, %v3549
  %v3565 = vpack.c.b16 %v3552, %v3551
  %v3566 = vpack.c.b16 %v3554, %v3553
  %v3567 = vpack.c.b16 %v3556, %v3555
  %v3568 = vpack.c.b16 %v3558, %v3557
  %v3569 = vpack.c.b16 %v3560, %v3559
  %v3570 = vpack.c.b16 %v3562, %v3561
  %3579 = vmatpush.bf16.msra.mxu0 %v3570
  %3580 = vmatpush.bf16.msra.mxu0 %v3569
  %3581 = vmatpush.bf16.msra.mxu0 %v3568
  %3582 = vmatpush.bf16.msra.mxu0 %v3567
  %3583 = vmatpush.bf16.msra.mxu0 %v3566
  %3584 = vmatpush.bf16.msra.mxu0 %v3565
  %3585 = vmatpush.bf16.msra.mxu0 %v3564
  %3586 = vmatpush.bf16.msra.mxu0 %v3563
  %3587 = vmatmul.bf16.gmra.mxu0 %v3530
  %v3588 = vpop.f32.mrf.mxu0
  %v3589 = vadd.f32 0.0, %v3588
  %v3590 = vpop.f32.mrf.mxu0
  %v3591 = vadd.f32 0.0, %v3590
  %3592 = vdwg.mxu0
  %v3593 = vsel %vm374, %v3589, 0.0
  %v3594 = vsel %vm374, %v3591, 0.0
  %v3595 = vadd.f32 %v3593, %v3594
  %v3596 = vrot.slane %v3595, 4
  %v3597 = vadd.f32 %v3595, %v3596
  %v3598 = vrot.slane %v3597, 2
  %v3599 = vadd.f32 %v3597, %v3598
  %v3600 = vrot.slane %v3599, 1
  %v3601 = vadd.f32 %v3599, %v3600
  %v3602 = vmul.f32 %v3601, %v812
  %v3603 = vsub.f32 %v3589, %v3602
  %v3604 = vsub.f32 %v3591, %v3602
  %v3605 = vmul.f32 %v3603, %v3603
  %v3606 = vmul.f32 %v3604, %v3604
  %v3607 = vsel %vm374, %v3605, 0.0
  %v3608 = vsel %vm374, %v3606, 0.0
  %v3609 = vadd.f32 %v3607, %v3608
  %v3610 = vrot.slane %v3609, 4
  %v3611 = vadd.f32 %v3609, %v3610
  %v3612 = vrot.slane %v3611, 2
  %v3613 = vadd.f32 %v3611, %v3612
  %v3614 = vrot.slane %v3613, 1
  %v3615 = vadd.f32 %v3613, %v3614
  %v3616 = vmul.f32 %v3615, %v812
  %v3617 = vmul.f32 %v117, %v3603
  %v3618 = vmul.f32 %v117, %v3604
  %v3619 = vadd.f32 %v3616, 1e-05
  %v3620 = vrsqrt.pop %v3619
  %v3621 = vmul.f32 %v3620, %v3619
  %v3622 = vmul.f32 %v3621, %v3620
  %v3623 = vmul.f32 0.5, %v3622
  %v3624 = vsub.f32 1.5, %v3623
  %v3625 = vmul.f32 %v3620, %v3624
  %vm3626 = vweird.f32 %v3619
  %vm3627 = vweird.f32 %v3620
  %vm3628 = vmor %vm3626, %vm3627
  %v3629 = vsel %vm3628, %v3620, %v3625
  %v3630 = vmul.f32 %v3617, %v3629
  %v3631 = vmul.f32 %v3618, %v3629
  %v3632 = vadd.f32 %v3630, %v121
  %v3633 = vadd.f32 %v3631, %v121
  %vm3634 = vcmp.gt.f32.partialorder %v3632, 0.0
  %vm3635 = vcmp.gt.f32.partialorder %v3633, 0.0
  %v3636 = vmul.f32 %v3632, 0.01
  %v3637 = vmul.f32 %v3633, 0.01
  %v3638 = vsel %vm3634, %v3632, %v3636
  %v3639 = vsel %vm3635, %v3633, %v3637
  %v3640 = vld [vmem:[%s15] sm:$0xf]
  %v3641 = vld [vmem:[%s15 + $0x4] sm:$0xf]
  %v3642 = vld [vmem:[%s15 + $0x8] sm:$0xf]
  %v3643 = vld [vmem:[%s15 + $0xc] sm:$0xf]
  %v3644 = vpack.c.bf16 %v3639, %v3638
  %v3649 = vunpack.c.l.b16 %v3640
  %v3650 = vunpack.c.l.b16 %v3641
  %v3651 = vunpack.c.l.b16 %v3642
  %v3652 = vunpack.c.l.b16 %v3643
  %v3653 = vpack.c.b16 %v3650, %v3649
  %v3654 = vpack.c.b16 %v3652, %v3651
  %v3658 = vsel %vm374, %v3644, 0
  %3660 = vmatpush.bf16.msra.mxu0 0
  %3661 = vmatpush.bf16.msra.mxu0 0
  %3662 = vmatpush.bf16.msra.mxu0 0
  %3663 = vmatpush.bf16.msra.mxu0 0
  %3664 = vmatpush.bf16.msra.mxu0 0
  %3665 = vmatpush.bf16.msra.mxu0 0
  %3666 = vmatpush.bf16.msra.mxu0 %v3654
  %3667 = vmatpush.bf16.msra.mxu0 %v3653
  %3668 = vmatmul.bf16.gmra.mxu0 %v3658
  %v3669 = vpop.f32.mrf.mxu0
  %v3670 = vadd.f32 %v109, %v3669
  %v3671 = vpop.f32.mrf.mxu0
  %v3672 = vadd.f32 %v109, %v3671
  %3673 = vdwg.mxu0
  %v3674 = vadd.f32 %v3670, %v3248
  %v3675 = vadd.f32 %v3672, %v3249
  %v3676 = vxor.u32 %v3674, 2147483648
  %v3677 = vxor.u32 %v3675, 2147483648
  %v3678 = vmul.f32 %v3676, 1.442695
  %v3679 = vpow.pop %v3678
  %v3680 = vmul.f32 %v3677, 1.442695
  %v3681 = vpow.pop %v3680
  %v3682 = vadd.f32 %v3679, 1.0
  %v3683 = vadd.f32 %v3681, 1.0
  %v3684 = vrcp.pop %v3682
  %v3685 = vmul.f32 %v3682, %v3684
  %v3686 = vsub.f32 1.0, %v3685
  %v3687 = vmul.f32 %v3684, %v3686
  %v3688 = vadd.f32 %v3684, %v3687
  %vm3689 = vweird.f32 %v3682
  %vm3690 = vweird.f32 %v3684
  %vm3691 = vmor %vm3689, %vm3690
  %v3692 = vsel %vm3691, %v3684, %v3688
  %v3693 = vand.u32 2147483647, %v3682
  %vm3694 = vcmp.eq.f32.partialorder %v3693, 8.507059e+37
  %v3695 = vand.u32 %v3682, 2147483648
  %v3696 = vor.u32 1.1754944e-38, %v3695
  %v3697 = vsel %vm3694, %v3696, %v3692
  %v3698 = vmul.f32 1.0, %v3697
  %v3699 = vrcp.pop %v3683
  %v3700 = vmul.f32 %v3683, %v3699
  %v3701 = vsub.f32 1.0, %v3700
  %v3702 = vmul.f32 %v3699, %v3701
  %v3703 = vadd.f32 %v3699, %v3702
  %vm3704 = vweird.f32 %v3683
  %vm3705 = vweird.f32 %v3699
  %vm3706 = vmor %vm3704, %vm3705
  %v3707 = vsel %vm3706, %v3699, %v3703
  %v3708 = vand.u32 2147483647, %v3683
  %vm3709 = vcmp.eq.f32.partialorder %v3708, 8.507059e+37
  %v3710 = vand.u32 %v3683, 2147483648
  %v3711 = vor.u32 1.1754944e-38, %v3710
  %v3712 = vsel %vm3709, %v3711, %v3707
  %v3713 = vmul.f32 1.0, %v3712
  %3716 = vrot.lane.b32.xlu0 %v3248, 64
  %v3717 = vpop.permute.xlu0 %3716
  %3718 = vrot.lane.b32.xlu0 %v3249, 64
  %v3719 = vpop.permute.xlu0 %3718
  %v3722 = vmul.f32 %v3698, %v3717
  %v3723 = vmul.f32 %v3713, %v3719
  %3726 = vrot.lane.b32.xlu0 %v3722, 64
  %v3727 = vpop.permute.xlu0 %3726
  %3728 = vrot.lane.b32.xlu0 %v3723, 64
  %v3729 = vpop.permute.xlu0 %3728
  %v3732 = vadd.f32 %v3670, %v3727
  %v3733 = vadd.f32 %v3672, %v3729
  %v3734 = vtanh.pop %v3732
  %v3735 = vtanh.pop %v3733
  %v3736 = vsub.f32 1.0, %v3698
  %v3737 = vsub.f32 1.0, %v3713
  %3740 = vrot.lane.b32.xlu0 %v3734, 96
  %v3741 = vpop.permute.xlu0 %3740
  %3742 = vrot.lane.b32.xlu0 %v3735, 96
  %v3743 = vpop.permute.xlu0 %3742
  %v3746 = vmul.f32 %v3736, %v3741
  %v3747 = vmul.f32 %v3737, %v3743
  %v3748 = vmul.f32 %v3698, %v2823
  %v3749 = vmul.f32 %v3713, %v2824
  %v3750 = vadd.f32 %v3746, %v3748
  %v3751 = vadd.f32 %v3747, %v3749
  %v3752 = vld [vmem:[%s18] sm:$0xf]
  %v3753 = vld [vmem:[%s18 + $0x4] sm:$0xf]
  %v3754 = vld [vmem:[%s18 + $0x8] sm:$0xf]
  %v3755 = vld [vmem:[%s18 + $0xc] sm:$0xf]
  %v3756 = vpack.c.bf16 %v3751, %v3750
  %3758 = vrot.lane.b32.xlu0 %v3756, 96
  %v3759 = vpop.permute.xlu0 %3758
  %v3764 = vunpack.c.l.b16 %v3752
  %v3765 = vunpack.c.l.b16 %v3753
  %v3766 = vunpack.c.l.b16 %v3754
  %v3767 = vunpack.c.l.b16 %v3755
  %v3768 = vpack.c.b16 %v3765, %v3764
  %v3769 = vpack.c.b16 %v3767, %v3766
  %v3773 = vsel %vm374, %v3759, 0
  %3775 = vmatpush.bf16.msra.mxu0 0
  %3776 = vmatpush.bf16.msra.mxu0 0
  %3777 = vmatpush.bf16.msra.mxu0 0
  %3778 = vmatpush.bf16.msra.mxu0 0
  %3779 = vmatpush.bf16.msra.mxu0 0
  %3780 = vmatpush.bf16.msra.mxu0 0
  %3781 = vmatpush.bf16.msra.mxu0 %v3769
  %3782 = vmatpush.bf16.msra.mxu0 %v3768
  %3783 = vmatmul.bf16.gmra.mxu0 %v3773
  %v3784 = vpop.f32.mrf.mxu0
  %v3785 = vadd.f32 0.0, %v3784
  %v3786 = vpop.f32.mrf.mxu0
  %v3787 = vadd.f32 0.0, %v3786
  %3788 = vdwg.mxu0
  %v3789 = vsel %vm374, %v3785, 0.0
  %v3790 = vsel %vm374, %v3787, 0.0
  %v3791 = vadd.f32 %v3789, %v3790
  %v3792 = vrot.slane %v3791, 4
  %v3793 = vadd.f32 %v3791, %v3792
  %v3794 = vrot.slane %v3793, 2
  %v3795 = vadd.f32 %v3793, %v3794
  %v3796 = vrot.slane %v3795, 1
  %v3797 = vadd.f32 %v3795, %v3796
  %v3798 = vmul.f32 %v3797, %v812
  %v3799 = vsub.f32 %v3785, %v3798
  %v3800 = vsub.f32 %v3787, %v3798
  %v3801 = vmul.f32 %v3799, %v3799
  %v3802 = vmul.f32 %v3800, %v3800
  %v3803 = vsel %vm374, %v3801, 0.0
  %v3804 = vsel %vm374, %v3802, 0.0
  %v3805 = vadd.f32 %v3803, %v3804
  %v3806 = vrot.slane %v3805, 4
  %v3807 = vadd.f32 %v3805, %v3806
  %v3808 = vrot.slane %v3807, 2
  %v3809 = vadd.f32 %v3807, %v3808
  %v3810 = vrot.slane %v3809, 1
  %v3811 = vadd.f32 %v3809, %v3810
  %v3812 = vmul.f32 %v3811, %v812
  %v3813 = vmul.f32 %v125, %v3799
  %v3814 = vmul.f32 %v125, %v3800
  %v3815 = vadd.f32 %v3812, 1e-05
  %v3816 = vrsqrt.pop %v3815
  %v3817 = vmul.f32 %v3816, %v3815
  %v3818 = vmul.f32 %v3817, %v3816
  %v3819 = vmul.f32 0.5, %v3818
  %v3820 = vsub.f32 1.5, %v3819
  %v3821 = vmul.f32 %v3816, %v3820
  %vm3822 = vweird.f32 %v3815
  %vm3823 = vweird.f32 %v3816
  %vm3824 = vmor %vm3822, %vm3823
  %v3825 = vsel %vm3824, %v3816, %v3821
  %v3826 = vmul.f32 %v3813, %v3825
  %v3827 = vmul.f32 %v3814, %v3825
  %v3828 = vadd.f32 %v3826, %v129
  %v3829 = vadd.f32 %v3827, %v129
  %v3830 = vmax.f32 %v3828, 0.0
  %v3831 = vmax.f32 %v3829, 0.0
  %v3832 = vld [vmem:[%s21] sm:$0xf]
  %v3833 = vld [vmem:[%s21 + $0x4] sm:$0xf]
  %v3834 = vld [vmem:[%s21 + $0x8] sm:$0xf]
  %v3835 = vld [vmem:[%s21 + $0xc] sm:$0xf]
  %v3836 = vpack.c.bf16 %v3831, %v3830
  %v3841 = vunpack.c.l.b16 %v3832
  %v3842 = vunpack.c.l.b16 %v3833
  %v3843 = vunpack.c.l.b16 %v3834
  %v3844 = vunpack.c.l.b16 %v3835
  %v3845 = vpack.c.b16 %v3842, %v3841
  %v3846 = vpack.c.b16 %v3844, %v3843
  %v3850 = vsel %vm374, %v3836, 0
  %3852 = vmatpush.bf16.msra.mxu0 0
  %3853 = vmatpush.bf16.msra.mxu0 0
  %3854 = vmatpush.bf16.msra.mxu0 0
  %3855 = vmatpush.bf16.msra.mxu0 0
  %3856 = vmatpush.bf16.msra.mxu0 0
  %3857 = vmatpush.bf16.msra.mxu0 0
  %3858 = vmatpush.bf16.msra.mxu0 %v3846
  %3859 = vmatpush.bf16.msra.mxu0 %v3845
  %3860 = vmatmul.bf16.gmra.mxu0 %v3850
  %v3861 = vpop.f32.mrf.mxu0
  %v3862 = vadd.f32 %v133, %v3861
  %v3863 = vpop.f32.mrf.mxu0
  %v3864 = vadd.f32 %v133, %v3863
  %3865 = vdwg.mxu0
  %v3866 = vadd.f32 %v3862, %v3059
  %v3867 = vadd.f32 %v3864, %v3060
  %v3868 = vadd.f32 %v3866, %v3069
  %v3869 = vadd.f32 %v3867, %v3070
  %v3870 = vadd.f32 %v3868, %v3126
  %v3871 = vadd.f32 %v3869, %v3127
  %v3872 = vmul.f32 %v3870, 0.005
  %v3873 = vmul.f32 %v3871, 0.005
  %v3874 = vadd.f32 %v2947, %v3872
  %v3875 = vadd.f32 %v2948, %v3873
  %s3876 = scalar_lea.vmem %s23, 48
  %3877 = vst.msk [vmem:[%s3876] sm:$0xff] %vm1095, %v3874
  %3878 = vst.msk [vmem:[%s3876 + $0x8] sm:$0xff] %vm1095, %v3875
  // Predicated region
  $region94: #{gnn_kalman_forward.1} parent=0 // pred_check
    _
  $region95: #{gnn_kalman_forward.1} parent=0 // pred_check_branch
    %3880 = sbr.rel (0) target = $region97
  $region96: #{gnn_kalman_forward.1} parent=0 // pred_region
    _
  $region97: #{gnn_kalman_forward.1} parent=0 // pred_fallthru
    _
  // Predicated region
  $region98: #{gnn_kalman_forward.1} parent=0 // pred_check
    _
  $region99: #{gnn_kalman_forward.1} parent=0 // pred_check_branch
    %3882 = sbr.rel (0) target = $region101
  $region100: #{gnn_kalman_forward.1} parent=0 // pred_region
    _
  $region101: #{gnn_kalman_forward.1} parent=0 // pred_fallthru
    _

</llo_original>
